<compile_context>
chip_gen: v7x
topology: tpu7x:2x2x1
jax: 0.10.0
libtpu: 0.0.40
codegen_flags: <defaults>
</compile_context>

<pallas_src>
import math

import jax
import jax.numpy as jnp
from jax.experimental import pallas as pl
from jax.experimental.pallas import tpu as pltpu

# ---- model hyper-parameters (MiniGPT defaults) ----
VOCAB_SIZE = 32
BLOCK_SIZE = 16          # max sequence length
N_EMBED    = 64
N_HEADS    = 2
N_LAYERS   = 2
HEAD_DIM   = N_EMBED // N_HEADS
LN_EPS     = 1e-5
NEG_INF    = -1e30

E     = N_EMBED
FF    = 4 * N_EMBED      # 256
QKV   = 3 * N_EMBED      # 192
VPAD  = 128              # lane-dense padded vocab width
LANES = 256              # lane width of both packed slabs

# ------------------- packed matrix-slab layout (rows, 256) -------------------
# Per layer (stride W_LAYER_ROWS), weights stored pre-transposed so every
# in-kernel matmul is plain  x @ W :
W_IN   = 0                       # rows [0,   E)    cols [0, 3E)   qkv proj
W_OUT  = E                       # rows [E,  2E)    cols [0,  E)   attn out-proj
W_FF1  = 2 * E                   # rows [2E, 3E)    cols [0, 4E)
W_FF2  = 3 * E                   # rows [3E, 3E+4E) cols [0,  E)
W_LAYER_ROWS = 3 * E + FF        # 448
W_HEAD = N_LAYERS * W_LAYER_ROWS # rows [896, 960)  cols [0, VPAD)
W_TOTAL_ROWS = W_HEAD + E        # 960

# ------------------- packed vector-slab layout (rows, 256) -------------------
# Each bias / LN vector gets one row at an 8-aligned sublane offset.
V_STRIDE = 8
(V_IN_B, V_OUT_B, V_LN1_G, V_LN1_B,
 V_FF1_B, V_FF2_B, V_LN2_G, V_LN2_B) = range(8)
V_LAYER  = 8
V_LNF_G  = N_LAYERS * V_LAYER
V_LNF_B  = V_LNF_G + 1
V_HEAD_B = V_LNF_B + 1
V_TOTAL_ROWS = (V_HEAD_B + 1) * V_STRIDE     # 152


# -----------------------------------------------------------------------------
# Pallas kernel: full MiniGPT trunk for one (batch-block, T) slab.
# -----------------------------------------------------------------------------
def gpt_kernel(x_ref, w_ref, vec_ref, logits_ref):
    BB, T, _ = x_ref.shape
    N = BB * T
    xf = x_ref[...].reshape(N, E).astype(jnp.float32)      # (B*T, E)
    scale = 1.0 / math.sqrt(HEAD_DIM)

    # causal additive mask — built once (single grid step)
    row = jax.lax.broadcasted_iota(jnp.int32, (T, T), 0)
    col = jax.lax.broadcasted_iota(jnp.int32, (T, T), 1)
    causal = jnp.where(col > row, jnp.float32(NEG_INF), jnp.float32(0.0))[None]

    def vec(idx, width):
        r = idx * V_STRIDE
        return vec_ref[r:r + 1, 0:width]                    # (1, width)

    def layernorm(v, g, b):
        mu = jnp.mean(v, axis=-1, keepdims=True)
        var = jnp.mean((v - mu) ** 2, axis=-1, keepdims=True)
        return (v - mu) * jax.lax.rsqrt(var + LN_EPS) * g + b

    for l in range(N_LAYERS):                               # static layer unroll
        wb = l * W_LAYER_ROWS
        vb = l * V_LAYER

        # ---- fused QKV projection: one lane-dense (E, 3E) matmul ----
        w_in = w_ref[wb + W_IN: wb + W_IN + E, 0:QKV]       # (E, 3E)
        qkv = (jnp.dot(xf, w_in, preferred_element_type=jnp.float32)
               + vec(vb + V_IN_B, QKV))                     # (B*T, 3E)
        q = qkv[:, 0:E].reshape(BB, T, E)
        k = qkv[:, E:2 * E].reshape(BB, T, E)
        v = qkv[:, 2 * E:3 * E].reshape(BB, T, E)

        # ---- attention: batched over B via einsum; out-projection done as
        #      split-K over heads so no concatenate is needed ----
        attn = None
        for h in range(N_HEADS):                            # static head unroll
            sl = slice(h * HEAD_DIM, (h + 1) * HEAD_DIM)
            qh, kh, vh = q[:, :, sl], k[:, :, sl], v[:, :, sl]
            s = jnp.einsum("bqd,bkd->bqk", qh, kh,
                           preferred_element_type=jnp.float32) * scale
            s = s + causal
            s = s - jnp.max(s, axis=-1, keepdims=True)
            p = jnp.exp(s)
            p = p * pl.reciprocal(jnp.sum(p, axis=-1, keepdims=True), approx=True)
            ho = jnp.einsum("bqk,bkd->bqd", p, vh,
                            preferred_element_type=jnp.float32).reshape(N, HEAD_DIM)
            w_out_h = w_ref[wb + W_OUT + h * HEAD_DIM:
                            wb + W_OUT + (h + 1) * HEAD_DIM, 0:E]   # (D, E)
            contrib = jnp.dot(ho, w_out_h, preferred_element_type=jnp.float32)
            attn = contrib if attn is None else attn + contrib
        attn = attn + vec(vb + V_OUT_B, E)

        xf = layernorm(xf + attn, vec(vb + V_LN1_G, E), vec(vb + V_LN1_B, E))

        # ---- MLP ----
        w_ff1 = w_ref[wb + W_FF1: wb + W_FF1 + E, 0:FF]     # (E, 4E)
        w_ff2 = w_ref[wb + W_FF2: wb + W_FF2 + FF, 0:E]     # (4E, E)
        h1 = (jnp.dot(xf, w_ff1, preferred_element_type=jnp.float32)
              + vec(vb + V_FF1_B, FF))
        h1 = jnp.maximum(h1, 0.0)
        ffo = (jnp.dot(h1, w_ff2, preferred_element_type=jnp.float32)
               + vec(vb + V_FF2_B, E))

        xf = layernorm(xf + ffo, vec(vb + V_LN2_G, E), vec(vb + V_LN2_B, E))

    # ---- final LN + lane-dense (padded to 128) vocab projection ----
    xf = layernorm(xf, vec(V_LNF_G, E), vec(V_LNF_B, E))
    w_head = w_ref[W_HEAD:W_HEAD + E, 0:VPAD]               # (E, 128)
    logits = (jnp.dot(xf, w_head, preferred_element_type=jnp.float32)
              + vec(V_HEAD_B, VPAD))
    logits_ref[...] = logits.reshape(BB, T, VPAD).astype(logits_ref.dtype)


# -----------------------------------------------------------------------------
# Wrapper: one-time weight packing + embedding glue + pallas_call
# -----------------------------------------------------------------------------
def pack_params(params):
    """Pack all matrices (pre-transposed) and vectors into two lane-aligned
    slabs.  Runs once in the wrapper (XLA glue), not inside the kernel."""
    w = jnp.zeros((W_TOTAL_ROWS, LANES), jnp.float32)
    vec = jnp.zeros((V_TOTAL_ROWS, LANES), jnp.float32)

    def set_vec(buf, idx, val):
        return buf.at[idx * V_STRIDE, 0:val.shape[0]].set(val)

    for l in range(N_LAYERS):
        wb = l * W_LAYER_ROWS
        w = w.at[wb + W_IN:  wb + W_IN + E,   0:QKV].set(params["in_w"][l].T)
        w = w.at[wb + W_OUT: wb + W_OUT + E,  0:E].set(params["out_w"][l].T)
        w = w.at[wb + W_FF1: wb + W_FF1 + E,  0:FF].set(params["ff1_w"][l].T)
        w = w.at[wb + W_FF2: wb + W_FF2 + FF, 0:E].set(params["ff2_w"][l].T)
        vb = l * V_LAYER
        vec = set_vec(vec, vb + V_IN_B,  params["in_b"][l])
        vec = set_vec(vec, vb + V_OUT_B, params["out_b"][l])
        vec = set_vec(vec, vb + V_LN1_G, params["ln1_g"][l])
        vec = set_vec(vec, vb + V_LN1_B, params["ln1_b"][l])
        vec = set_vec(vec, vb + V_FF1_B, params["ff1_b"][l])
        vec = set_vec(vec, vb + V_FF2_B, params["ff2_b"][l])
        vec = set_vec(vec, vb + V_LN2_G, params["ln2_g"][l])
        vec = set_vec(vec, vb + V_LN2_B, params["ln2_b"][l])

    w = w.at[W_HEAD:W_HEAD + E, 0:VOCAB_SIZE].set(params["head_w"].T)
    vec = set_vec(vec, V_LNF_G, params["lnf_g"])
    vec = set_vec(vec, V_LNF_B, params["lnf_b"])
    vec = set_vec(vec, V_HEAD_B, params["head_b"])
    # TODO(synk): on v6e/v7x the slabs can be stored in bfloat16 (halves DMA
    # bytes, MXU still accumulates f32); kept f32 to preserve tight tolerance.
    return w, vec


def minigpt_pallas(idx, params, batch_block=None):
    B, T = idx.shape
    if batch_block is None:
        batch_block = B                       # whole batch in ONE grid step
    assert B % batch_block == 0

    # glue: embedding gather + positional add
    x = (params["token_embed"][idx] + params["pos_embed"][:, :T, :]).astype(jnp.float32)
    w_slab, vec_slab = pack_params(params)

    grid_spec = pltpu.PrefetchScalarGridSpec(
        num_scalar_prefetch=0,
        grid=(B // batch_block,),
        in_specs=[
            pl.BlockSpec((batch_block, T, E), lambda b: (b, 0, 0)),
            pl.BlockSpec((W_TOTAL_ROWS, LANES), lambda b: (0, 0)),
            pl.BlockSpec((V_TOTAL_ROWS, LANES), lambda b: (0, 0)),
        ],
        out_specs=pl.BlockSpec((batch_block, T, VPAD), lambda b: (b, 0, 0)),
    )
    padded = pl.pallas_call(
        gpt_kernel,
        out_shape=jax.ShapeDtypeStruct((B, T, VPAD), jnp.float32),
        grid_spec=grid_spec,
        compiler_params=pltpu.CompilerParams(
            dimension_semantics=("parallel",)),   # batch axis: 2 TCs on v7x
    )(x, w_slab, vec_slab)
    return padded[:, :, :VOCAB_SIZE]              # drop lane padding outside


# -----------------------------------------------------------------------------
# Pure-JAX reference (same math) for a correctness check
# -----------------------------------------------------------------------------
def minigpt_ref(idx, params):
    B, T = idx.shape
    x = (params["token_embed"][idx] + params["pos_embed"][:, :T, :]).astype(jnp.float32)

    def ln(v, g, b):
        mu = jnp.mean(v, axis=-1, keepdims=True)
        var = jnp.mean((v - mu) ** 2, axis=-1, keepdims=True)
        return (v - mu) / jnp.sqrt(var + LN_EPS) * g + b

    mask = jnp.triu(jnp.ones((T, T), bool), k=1)
    for l in range(N_LAYERS):
        in_w, in_b = params["in_w"][l], params["in_b"][l]
        q = x @ in_w[0:E].T + in_b[0:E]
        k = x @ in_w[E:2 * E].T + in_b[E:2 * E]
        v = x @ in_w[2 * E:].T + in_b[2 * E:]
        qh = q.reshape(B, T, N_HEADS, HEAD_DIM).transpose(0, 2, 1, 3)
        kh = k.reshape(B, T, N_HEADS, HEAD_DIM).transpose(0, 2, 1, 3)
        vh = v.reshape(B, T, N_HEADS, HEAD_DIM).transpose(0, 2, 1, 3)
        s = jnp.einsum("bhqd,bhkd->bhqk", qh, kh) / math.sqrt(HEAD_DIM)
        s = jnp.where(mask, -jnp.inf, s)
        p = jax.nn.softmax(s, axis=-1)
        a = jnp.einsum("bhqk,bhkd->bhqd", p, vh).transpose(0, 2, 1, 3).reshape(B, T, E)
        a = a @ params["out_w"][l].T + params["out_b"][l]
        x = ln(x + a, params["ln1_g"][l], params["ln1_b"][l])
        h1 = jax.nn.relu(x @ params["ff1_w"][l].T + params["ff1_b"][l])
        ffo = h1 @ params["ff2_w"][l].T + params["ff2_b"][l]
        x = ln(x + ffo, params["ln2_g"][l], params["ln2_b"][l])
    x = ln(x, params["lnf_g"], params["lnf_b"])
    return x @ params["head_w"].T + params["head_b"]


# -----------------------------------------------------------------------------
# Deterministic parameter construction (synthetic init, PyTorch layout)
# -----------------------------------------------------------------------------
def make_params(key):
    L, V = N_LAYERS, VOCAB_SIZE
    ks = jax.random.split(key, 8)
    s = 0.02
    return {
        "token_embed": s * jax.random.normal(ks[0], (V, E), jnp.float32),
        "pos_embed":   jnp.zeros((1, BLOCK_SIZE, E), jnp.float32),
        "in_w":   s * jax.random.normal(ks[1], (L, 3 * E, E), jnp.float32),
        "in_b":   jnp.zeros((L, 3 * E), jnp.float32),
        "out_w":  s * jax.random.normal(ks[2], (L, E, E), jnp.float32),
        "out_b":  jnp.zeros((L, E), jnp.float32),
        "ln1_g":  jnp.ones((L, E), jnp.float32),
        "ln1_b":  jnp.zeros((L, E), jnp.float32),
        "ln2_g":  jnp.ones((L, E), jnp.float32),
        "ln2_b":  jnp.zeros((L, E), jnp.float32),
        "ff1_w":  s * jax.random.normal(ks[3], (L, 4 * E, E), jnp.float32),
        "ff1_b":  jnp.zeros((L, 4 * E), jnp.float32),
        "ff2_w":  s * jax.random.normal(ks[4], (L, E, 4 * E), jnp.float32),
        "ff2_b":  jnp.zeros((L, E), jnp.float32),
        "lnf_g":  jnp.ones((E,), jnp.float32),
        "lnf_b":  jnp.zeros((E,), jnp.float32),
        "head_w": s * jax.random.normal(ks[5], (V, E), jnp.float32),
        "head_b": jnp.zeros((V,), jnp.float32),
    }


if __name__ == "__main__":
    key = jax.random.PRNGKey(0)
    params = make_params(key)

    B, T = 2, BLOCK_SIZE
    idx = jax.random.randint(jax.random.PRNGKey(1), (B, T), 0, VOCAB_SIZE,
                             dtype=jnp.int32)

    fwd = jax.jit(minigpt_pallas)
    logits = jax.block_until_ready(fwd(idx, params))
    ref = jax.block_until_ready(minigpt_ref(idx, params))

    assert logits.shape == (B, T, VOCAB_SIZE)
    max_err = float(jnp.max(jnp.abs(logits - ref)))
    assert jnp.allclose(logits, ref, rtol=2e-3, atol=2e-3), max_err
    print("KERNEL_OK")
</pallas_src>

<mosaic_0001>
module attributes {stable_mosaic.version = 11 : i64} {
  func.func @gpt_kernel(%arg0: i32, %arg1: memref<2x16x64xf32, #tpu.memory_space<vmem>>, %arg2: memref<960x256xf32, #tpu.memory_space<vmem>>, %arg3: memref<152x256xf32, #tpu.memory_space<vmem>>, %arg4: memref<2x16x128xf32, #tpu.memory_space<vmem>>) attributes {dimension_semantics = [#tpu.dimension_semantics<parallel>], iteration_bounds = array<i64: 1>, scalar_prefetch = 0 : i64, scratch_operands = 0 : i64, tpu.core_type = #tpu.core_type<tc>, window_params = [{transform_indices = @transform_0, window_bounds = array<i64: 2, 16, 64>}, {pipeline_mode = #tpu.pipeline_mode<synchronous>, transform_indices = @transform_1, window_bounds = array<i64: 960, 256>}, {pipeline_mode = #tpu.pipeline_mode<synchronous>, transform_indices = @transform_2, window_bounds = array<i64: 152, 256>}, {transform_indices = @transform_3, window_bounds = array<i64: 2, 16, 128>}]} {
    %c0 = arith.constant 0 : index
    %c0_0 = arith.constant 0 : index
    %c0_1 = arith.constant 0 : index
    %0 = vector.load %arg1[%c0, %c0_0, %c0_1] : memref<2x16x64xf32, #tpu.memory_space<vmem>>, vector<2x16x64xf32>
    %1 = vector.shape_cast %0 : vector<2x16x64xf32> to vector<32x64xf32>
    %2 = tpu.iota {dimensions = array<i32: 0>} : vector<16x16xi32>
    %3 = tpu.iota {dimensions = array<i32: 1>} : vector<16x16xi32>
    %4 = arith.cmpi sgt, %3, %2 : vector<16x16xi32>
    %cst = arith.constant -1.000000e+30 : f32
    %cst_2 = arith.constant 0.000000e+00 : f32
    %5 = vector.broadcast %cst : f32 to vector<16x16xf32>
    %6 = vector.broadcast %cst_2 : f32 to vector<16x16xf32>
    %7 = arith.select %4, %5, %6 : vector<16x16xi1>, vector<16x16xf32>
    %8 = vector.shape_cast %7 : vector<16x16xf32> to vector<1x16x16xf32>
    %c0_3 = arith.constant 0 : index
    %c0_4 = arith.constant 0 : index
    %9 = vector.load %arg2[%c0_3, %c0_4] : memref<960x256xf32, #tpu.memory_space<vmem>>, vector<64x192xf32>
    %cst_5 = arith.constant dense<0.000000e+00> : vector<32x192xf32>
    %10 = tpu.matmul %1, %9, %cst_5 {dimension_numbers = #tpu.dot_dimension_numbers<[1], [0], [0], [1], [0, 0, 1, 1], [], []>} : vector<32x64xf32>, vector<64x192xf32>, vector<32x192xf32> -> vector<32x192xf32>
    %c0_6 = arith.constant 0 : index
    %c0_7 = arith.constant 0 : index
    %11 = vector.load %arg3[%c0_6, %c0_7] : memref<152x256xf32, #tpu.memory_space<vmem>>, vector<1x192xf32>
    %12 = vector.broadcast %11 : vector<1x192xf32> to vector<32x192xf32>
    %13 = arith.addf %10, %12 : vector<32x192xf32>
    %14 = vector.extract_strided_slice %13 {offsets = [0, 0], sizes = [32, 64], strides = [1, 1]} : vector<32x192xf32> to vector<32x64xf32>
    %15 = vector.shape_cast %14 : vector<32x64xf32> to vector<2x16x64xf32>
    %16 = vector.extract_strided_slice %13 {offsets = [0, 64], sizes = [32, 64], strides = [1, 1]} : vector<32x192xf32> to vector<32x64xf32>
    %17 = vector.shape_cast %16 : vector<32x64xf32> to vector<2x16x64xf32>
    %18 = vector.extract_strided_slice %13 {offsets = [0, 128], sizes = [32, 64], strides = [1, 1]} : vector<32x192xf32> to vector<32x64xf32>
    %19 = vector.shape_cast %18 : vector<32x64xf32> to vector<2x16x64xf32>
    %20 = vector.extract_strided_slice %15 {offsets = [0, 0, 0], sizes = [2, 16, 32], strides = [1, 1, 1]} : vector<2x16x64xf32> to vector<2x16x32xf32>
    %21 = vector.extract_strided_slice %17 {offsets = [0, 0, 0], sizes = [2, 16, 32], strides = [1, 1, 1]} : vector<2x16x64xf32> to vector<2x16x32xf32>
    %22 = vector.extract_strided_slice %19 {offsets = [0, 0, 0], sizes = [2, 16, 32], strides = [1, 1, 1]} : vector<2x16x64xf32> to vector<2x16x32xf32>
    "tpu.trace_start"() <{level = 10 : i32, message = "bqd,bkd->bqk"}> : () -> ()
    %cst_8 = arith.constant dense<0.000000e+00> : vector<2x16x16xf32>
    %23 = tpu.matmul %20, %21, %cst_8 {dimension_numbers = #tpu.dot_dimension_numbers<[2], [2], [1], [1], [0, 0, 0, 1, 1, 1], [0], [0]>} : vector<2x16x32xf32>, vector<2x16x32xf32>, vector<2x16x16xf32> -> vector<2x16x16xf32>
    "tpu.trace_stop"() : () -> ()
    %cst_9 = arith.constant 0.176776692 : f32
    %24 = vector.broadcast %cst_9 : f32 to vector<2x16x16xf32>
    %25 = arith.mulf %23, %24 : vector<2x16x16xf32>
    %26 = vector.broadcast %8 : vector<1x16x16xf32> to vector<2x16x16xf32>
    %27 = arith.addf %25, %26 : vector<2x16x16xf32>
    %cst_10 = arith.constant dense<0xFF800000> : vector<2x16xf32>
    %28 = vector.multi_reduction <maximumf>, %27, %cst_10 [2] : vector<2x16x16xf32> to vector<2x16xf32>
    %29 = vector.shape_cast %28 : vector<2x16xf32> to vector<2x16x1xf32>
    %30 = vector.broadcast %29 : vector<2x16x1xf32> to vector<2x16x16xf32>
    %31 = arith.subf %27, %30 : vector<2x16x16xf32>
    %32 = math.exp %31 : vector<2x16x16xf32>
    %cst_11 = arith.constant dense<0.000000e+00> : vector<2x16xf32>
    %33 = vector.multi_reduction <add>, %32, %cst_11 [2] : vector<2x16x16xf32> to vector<2x16xf32>
    %34 = vector.shape_cast %33 : vector<2x16xf32> to vector<2x16x1xf32>
    %35 = tpu.reciprocal %34 {approx = true} : vector<2x16x1xf32> -> vector<2x16x1xf32>
    %36 = vector.broadcast %35 : vector<2x16x1xf32> to vector<2x16x16xf32>
    %37 = arith.mulf %32, %36 : vector<2x16x16xf32>
    "tpu.trace_start"() <{level = 10 : i32, message = "bqk,bkd->bqd"}> : () -> ()
    %cst_12 = arith.constant dense<0.000000e+00> : vector<2x16x32xf32>
    %38 = tpu.matmul %37, %22, %cst_12 {dimension_numbers = #tpu.dot_dimension_numbers<[2], [1], [1], [2], [0, 0, 0, 1, 1, 2], [0], [0]>} : vector<2x16x16xf32>, vector<2x16x32xf32>, vector<2x16x32xf32> -> vector<2x16x32xf32>
    "tpu.trace_stop"() : () -> ()
    %39 = vector.shape_cast %38 : vector<2x16x32xf32> to vector<32x32xf32>
    %c64 = arith.constant 64 : index
    %c0_13 = arith.constant 0 : index
    %40 = vector.load %arg2[%c64, %c0_13] : memref<960x256xf32, #tpu.memory_space<vmem>>, vector<32x64xf32>
    %cst_14 = arith.constant dense<0.000000e+00> : vector<32x64xf32>
    %41 = tpu.matmul %39, %40, %cst_14 {dimension_numbers = #tpu.dot_dimension_numbers<[1], [0], [0], [1], [0, 0, 1, 1], [], []>} : vector<32x32xf32>, vector<32x64xf32>, vector<32x64xf32> -> vector<32x64xf32>
    %42 = vector.extract_strided_slice %15 {offsets = [0, 0, 32], sizes = [2, 16, 32], strides = [1, 1, 1]} : vector<2x16x64xf32> to vector<2x16x32xf32>
    %43 = vector.extract_strided_slice %17 {offsets = [0, 0, 32], sizes = [2, 16, 32], strides = [1, 1, 1]} : vector<2x16x64xf32> to vector<2x16x32xf32>
    %44 = vector.extract_strided_slice %19 {offsets = [0, 0, 32], sizes = [2, 16, 32], strides = [1, 1, 1]} : vector<2x16x64xf32> to vector<2x16x32xf32>
    "tpu.trace_start"() <{level = 10 : i32, message = "bqd,bkd->bqk"}> : () -> ()
    %cst_15 = arith.constant dense<0.000000e+00> : vector<2x16x16xf32>
    %45 = tpu.matmul %42, %43, %cst_15 {dimension_numbers = #tpu.dot_dimension_numbers<[2], [2], [1], [1], [0, 0, 0, 1, 1, 1], [0], [0]>} : vector<2x16x32xf32>, vector<2x16x32xf32>, vector<2x16x16xf32> -> vector<2x16x16xf32>
    "tpu.trace_stop"() : () -> ()
    %cst_16 = arith.constant 0.176776692 : f32
    %46 = vector.broadcast %cst_16 : f32 to vector<2x16x16xf32>
    %47 = arith.mulf %45, %46 : vector<2x16x16xf32>
    %48 = vector.broadcast %8 : vector<1x16x16xf32> to vector<2x16x16xf32>
    %49 = arith.addf %47, %48 : vector<2x16x16xf32>
    %cst_17 = arith.constant dense<0xFF800000> : vector<2x16xf32>
    %50 = vector.multi_reduction <maximumf>, %49, %cst_17 [2] : vector<2x16x16xf32> to vector<2x16xf32>
    %51 = vector.shape_cast %50 : vector<2x16xf32> to vector<2x16x1xf32>
    %52 = vector.broadcast %51 : vector<2x16x1xf32> to vector<2x16x16xf32>
    %53 = arith.subf %49, %52 : vector<2x16x16xf32>
    %54 = math.exp %53 : vector<2x16x16xf32>
    %cst_18 = arith.constant dense<0.000000e+00> : vector<2x16xf32>
    %55 = vector.multi_reduction <add>, %54, %cst_18 [2] : vector<2x16x16xf32> to vector<2x16xf32>
    %56 = vector.shape_cast %55 : vector<2x16xf32> to vector<2x16x1xf32>
    %57 = tpu.reciprocal %56 {approx = true} : vector<2x16x1xf32> -> vector<2x16x1xf32>
    %58 = vector.broadcast %57 : vector<2x16x1xf32> to vector<2x16x16xf32>
    %59 = arith.mulf %54, %58 : vector<2x16x16xf32>
    "tpu.trace_start"() <{level = 10 : i32, message = "bqk,bkd->bqd"}> : () -> ()
    %cst_19 = arith.constant dense<0.000000e+00> : vector<2x16x32xf32>
    %60 = tpu.matmul %59, %44, %cst_19 {dimension_numbers = #tpu.dot_dimension_numbers<[2], [1], [1], [2], [0, 0, 0, 1, 1, 2], [0], [0]>} : vector<2x16x16xf32>, vector<2x16x32xf32>, vector<2x16x32xf32> -> vector<2x16x32xf32>
    "tpu.trace_stop"() : () -> ()
    %61 = vector.shape_cast %60 : vector<2x16x32xf32> to vector<32x32xf32>
    %c96 = arith.constant 96 : index
    %c0_20 = arith.constant 0 : index
    %62 = vector.load %arg2[%c96, %c0_20] : memref<960x256xf32, #tpu.memory_space<vmem>>, vector<32x64xf32>
    %cst_21 = arith.constant dense<0.000000e+00> : vector<32x64xf32>
    %63 = tpu.matmul %61, %62, %cst_21 {dimension_numbers = #tpu.dot_dimension_numbers<[1], [0], [0], [1], [0, 0, 1, 1], [], []>} : vector<32x32xf32>, vector<32x64xf32>, vector<32x64xf32> -> vector<32x64xf32>
    %64 = arith.addf %41, %63 : vector<32x64xf32>
    %c8 = arith.constant 8 : index
    %c0_22 = arith.constant 0 : index
    %65 = vector.load %arg3[%c8, %c0_22] : memref<152x256xf32, #tpu.memory_space<vmem>>, vector<1x64xf32>
    %66 = vector.broadcast %65 : vector<1x64xf32> to vector<32x64xf32>
    %67 = arith.addf %64, %66 : vector<32x64xf32>
    %68 = arith.addf %1, %67 : vector<32x64xf32>
    %c16 = arith.constant 16 : index
    %c0_23 = arith.constant 0 : index
    %69 = vector.load %arg3[%c16, %c0_23] : memref<152x256xf32, #tpu.memory_space<vmem>>, vector<1x64xf32>
    %c24 = arith.constant 24 : index
    %c0_24 = arith.constant 0 : index
    %70 = vector.load %arg3[%c24, %c0_24] : memref<152x256xf32, #tpu.memory_space<vmem>>, vector<1x64xf32>
    %cst_25 = arith.constant dense<0.000000e+00> : vector<32xf32>
    %71 = vector.multi_reduction <add>, %68, %cst_25 [1] : vector<32x64xf32> to vector<32xf32>
    %72 = vector.shape_cast %71 : vector<32xf32> to vector<32x1xf32>
    %cst_26 = arith.constant 6.400000e+01 : f32
    %73 = vector.broadcast %cst_26 : f32 to vector<32x1xf32>
    %74 = arith.divf %72, %73 : vector<32x1xf32>
    %75 = vector.broadcast %74 : vector<32x1xf32> to vector<32x64xf32>
    %76 = arith.subf %68, %75 : vector<32x64xf32>
    %77 = arith.mulf %76, %76 : vector<32x64xf32>
    %cst_27 = arith.constant dense<0.000000e+00> : vector<32xf32>
    %78 = vector.multi_reduction <add>, %77, %cst_27 [1] : vector<32x64xf32> to vector<32xf32>
    %79 = vector.shape_cast %78 : vector<32xf32> to vector<32x1xf32>
    %cst_28 = arith.constant 6.400000e+01 : f32
    %80 = vector.broadcast %cst_28 : f32 to vector<32x1xf32>
    %81 = arith.divf %79, %80 : vector<32x1xf32>
    %82 = vector.broadcast %74 : vector<32x1xf32> to vector<32x64xf32>
    %83 = arith.subf %68, %82 : vector<32x64xf32>
    %cst_29 = arith.constant 9.99999974E-6 : f32
    %84 = vector.broadcast %cst_29 : f32 to vector<32x1xf32>
    %85 = arith.addf %81, %84 : vector<32x1xf32>
    %86 = math.rsqrt %85 : vector<32x1xf32>
    %87 = vector.broadcast %86 : vector<32x1xf32> to vector<32x64xf32>
    %88 = arith.mulf %83, %87 : vector<32x64xf32>
    %89 = vector.broadcast %69 : vector<1x64xf32> to vector<32x64xf32>
    %90 = arith.mulf %88, %89 : vector<32x64xf32>
    %91 = vector.broadcast %70 : vector<1x64xf32> to vector<32x64xf32>
    %92 = arith.addf %90, %91 : vector<32x64xf32>
    %c128 = arith.constant 128 : index
    %c0_30 = arith.constant 0 : index
    %93 = vector.load %arg2[%c128, %c0_30] : memref<960x256xf32, #tpu.memory_space<vmem>>, vector<64x256xf32>
    %c192 = arith.constant 192 : index
    %c0_31 = arith.constant 0 : index
    %94 = vector.load %arg2[%c192, %c0_31] : memref<960x256xf32, #tpu.memory_space<vmem>>, vector<256x64xf32>
    %cst_32 = arith.constant dense<0.000000e+00> : vector<32x256xf32>
    %95 = tpu.matmul %92, %93, %cst_32 {dimension_numbers = #tpu.dot_dimension_numbers<[1], [0], [0], [1], [0, 0, 1, 1], [], []>} : vector<32x64xf32>, vector<64x256xf32>, vector<32x256xf32> -> vector<32x256xf32>
    %c32 = arith.constant 32 : index
    %c0_33 = arith.constant 0 : index
    %96 = vector.load %arg3[%c32, %c0_33] : memref<152x256xf32, #tpu.memory_space<vmem>>, vector<1x256xf32>
    %97 = vector.broadcast %96 : vector<1x256xf32> to vector<32x256xf32>
    %98 = arith.addf %95, %97 : vector<32x256xf32>
    %cst_34 = arith.constant 0.000000e+00 : f32
    %99 = vector.broadcast %cst_34 : f32 to vector<32x256xf32>
    %100 = arith.maximumf %98, %99 : vector<32x256xf32>
    %cst_35 = arith.constant dense<0.000000e+00> : vector<32x64xf32>
    %101 = tpu.matmul %100, %94, %cst_35 {dimension_numbers = #tpu.dot_dimension_numbers<[1], [0], [0], [1], [0, 0, 1, 1], [], []>} : vector<32x256xf32>, vector<256x64xf32>, vector<32x64xf32> -> vector<32x64xf32>
    %c40 = arith.constant 40 : index
    %c0_36 = arith.constant 0 : index
    %102 = vector.load %arg3[%c40, %c0_36] : memref<152x256xf32, #tpu.memory_space<vmem>>, vector<1x64xf32>
    %103 = vector.broadcast %102 : vector<1x64xf32> to vector<32x64xf32>
    %104 = arith.addf %101, %103 : vector<32x64xf32>
    %105 = arith.addf %92, %104 : vector<32x64xf32>
    %c48 = arith.constant 48 : index
    %c0_37 = arith.constant 0 : index
    %106 = vector.load %arg3[%c48, %c0_37] : memref<152x256xf32, #tpu.memory_space<vmem>>, vector<1x64xf32>
    %c56 = arith.constant 56 : index
    %c0_38 = arith.constant 0 : index
    %107 = vector.load %arg3[%c56, %c0_38] : memref<152x256xf32, #tpu.memory_space<vmem>>, vector<1x64xf32>
    %cst_39 = arith.constant dense<0.000000e+00> : vector<32xf32>
    %108 = vector.multi_reduction <add>, %105, %cst_39 [1] : vector<32x64xf32> to vector<32xf32>
    %109 = vector.shape_cast %108 : vector<32xf32> to vector<32x1xf32>
    %cst_40 = arith.constant 6.400000e+01 : f32
    %110 = vector.broadcast %cst_40 : f32 to vector<32x1xf32>
    %111 = arith.divf %109, %110 : vector<32x1xf32>
    %112 = vector.broadcast %111 : vector<32x1xf32> to vector<32x64xf32>
    %113 = arith.subf %105, %112 : vector<32x64xf32>
    %114 = arith.mulf %113, %113 : vector<32x64xf32>
    %cst_41 = arith.constant dense<0.000000e+00> : vector<32xf32>
    %115 = vector.multi_reduction <add>, %114, %cst_41 [1] : vector<32x64xf32> to vector<32xf32>
    %116 = vector.shape_cast %115 : vector<32xf32> to vector<32x1xf32>
    %cst_42 = arith.constant 6.400000e+01 : f32
    %117 = vector.broadcast %cst_42 : f32 to vector<32x1xf32>
    %118 = arith.divf %116, %117 : vector<32x1xf32>
    %119 = vector.broadcast %111 : vector<32x1xf32> to vector<32x64xf32>
    %120 = arith.subf %105, %119 : vector<32x64xf32>
    %cst_43 = arith.constant 9.99999974E-6 : f32
    %121 = vector.broadcast %cst_43 : f32 to vector<32x1xf32>
    %122 = arith.addf %118, %121 : vector<32x1xf32>
    %123 = math.rsqrt %122 : vector<32x1xf32>
    %124 = vector.broadcast %123 : vector<32x1xf32> to vector<32x64xf32>
    %125 = arith.mulf %120, %124 : vector<32x64xf32>
    %126 = vector.broadcast %106 : vector<1x64xf32> to vector<32x64xf32>
    %127 = arith.mulf %125, %126 : vector<32x64xf32>
    %128 = vector.broadcast %107 : vector<1x64xf32> to vector<32x64xf32>
    %129 = arith.addf %127, %128 : vector<32x64xf32>
    %c448 = arith.constant 448 : index
    %c0_44 = arith.constant 0 : index
    %130 = vector.load %arg2[%c448, %c0_44] : memref<960x256xf32, #tpu.memory_space<vmem>>, vector<64x192xf32>
    %cst_45 = arith.constant dense<0.000000e+00> : vector<32x192xf32>
    %131 = tpu.matmul %129, %130, %cst_45 {dimension_numbers = #tpu.dot_dimension_numbers<[1], [0], [0], [1], [0, 0, 1, 1], [], []>} : vector<32x64xf32>, vector<64x192xf32>, vector<32x192xf32> -> vector<32x192xf32>
    %c64_46 = arith.constant 64 : index
    %c0_47 = arith.constant 0 : index
    %132 = vector.load %arg3[%c64_46, %c0_47] : memref<152x256xf32, #tpu.memory_space<vmem>>, vector<1x192xf32>
    %133 = vector.broadcast %132 : vector<1x192xf32> to vector<32x192xf32>
    %134 = arith.addf %131, %133 : vector<32x192xf32>
    %135 = vector.extract_strided_slice %134 {offsets = [0, 0], sizes = [32, 64], strides = [1, 1]} : vector<32x192xf32> to vector<32x64xf32>
    %136 = vector.shape_cast %135 : vector<32x64xf32> to vector<2x16x64xf32>
    %137 = vector.extract_strided_slice %134 {offsets = [0, 64], sizes = [32, 64], strides = [1, 1]} : vector<32x192xf32> to vector<32x64xf32>
    %138 = vector.shape_cast %137 : vector<32x64xf32> to vector<2x16x64xf32>
    %139 = vector.extract_strided_slice %134 {offsets = [0, 128], sizes = [32, 64], strides = [1, 1]} : vector<32x192xf32> to vector<32x64xf32>
    %140 = vector.shape_cast %139 : vector<32x64xf32> to vector<2x16x64xf32>
    %141 = vector.extract_strided_slice %136 {offsets = [0, 0, 0], sizes = [2, 16, 32], strides = [1, 1, 1]} : vector<2x16x64xf32> to vector<2x16x32xf32>
    %142 = vector.extract_strided_slice %138 {offsets = [0, 0, 0], sizes = [2, 16, 32], strides = [1, 1, 1]} : vector<2x16x64xf32> to vector<2x16x32xf32>
    %143 = vector.extract_strided_slice %140 {offsets = [0, 0, 0], sizes = [2, 16, 32], strides = [1, 1, 1]} : vector<2x16x64xf32> to vector<2x16x32xf32>
    "tpu.trace_start"() <{level = 10 : i32, message = "bqd,bkd->bqk"}> : () -> ()
    %cst_48 = arith.constant dense<0.000000e+00> : vector<2x16x16xf32>
    %144 = tpu.matmul %141, %142, %cst_48 {dimension_numbers = #tpu.dot_dimension_numbers<[2], [2], [1], [1], [0, 0, 0, 1, 1, 1], [0], [0]>} : vector<2x16x32xf32>, vector<2x16x32xf32>, vector<2x16x16xf32> -> vector<2x16x16xf32>
    "tpu.trace_stop"() : () -> ()
    %cst_49 = arith.constant 0.176776692 : f32
    %145 = vector.broadcast %cst_49 : f32 to vector<2x16x16xf32>
    %146 = arith.mulf %144, %145 : vector<2x16x16xf32>
    %147 = vector.broadcast %8 : vector<1x16x16xf32> to vector<2x16x16xf32>
    %148 = arith.addf %146, %147 : vector<2x16x16xf32>
    %cst_50 = arith.constant dense<0xFF800000> : vector<2x16xf32>
    %149 = vector.multi_reduction <maximumf>, %148, %cst_50 [2] : vector<2x16x16xf32> to vector<2x16xf32>
    %150 = vector.shape_cast %149 : vector<2x16xf32> to vector<2x16x1xf32>
    %151 = vector.broadcast %150 : vector<2x16x1xf32> to vector<2x16x16xf32>
    %152 = arith.subf %148, %151 : vector<2x16x16xf32>
    %153 = math.exp %152 : vector<2x16x16xf32>
    %cst_51 = arith.constant dense<0.000000e+00> : vector<2x16xf32>
    %154 = vector.multi_reduction <add>, %153, %cst_51 [2] : vector<2x16x16xf32> to vector<2x16xf32>
    %155 = vector.shape_cast %154 : vector<2x16xf32> to vector<2x16x1xf32>
    %156 = tpu.reciprocal %155 {approx = true} : vector<2x16x1xf32> -> vector<2x16x1xf32>
    %157 = vector.broadcast %156 : vector<2x16x1xf32> to vector<2x16x16xf32>
    %158 = arith.mulf %153, %157 : vector<2x16x16xf32>
    "tpu.trace_start"() <{level = 10 : i32, message = "bqk,bkd->bqd"}> : () -> ()
    %cst_52 = arith.constant dense<0.000000e+00> : vector<2x16x32xf32>
    %159 = tpu.matmul %158, %143, %cst_52 {dimension_numbers = #tpu.dot_dimension_numbers<[2], [1], [1], [2], [0, 0, 0, 1, 1, 2], [0], [0]>} : vector<2x16x16xf32>, vector<2x16x32xf32>, vector<2x16x32xf32> -> vector<2x16x32xf32>
    "tpu.trace_stop"() : () -> ()
    %160 = vector.shape_cast %159 : vector<2x16x32xf32> to vector<32x32xf32>
    %c512 = arith.constant 512 : index
    %c0_53 = arith.constant 0 : index
    %161 = vector.load %arg2[%c512, %c0_53] : memref<960x256xf32, #tpu.memory_space<vmem>>, vector<32x64xf32>
    %cst_54 = arith.constant dense<0.000000e+00> : vector<32x64xf32>
    %162 = tpu.matmul %160, %161, %cst_54 {dimension_numbers = #tpu.dot_dimension_numbers<[1], [0], [0], [1], [0, 0, 1, 1], [], []>} : vector<32x32xf32>, vector<32x64xf32>, vector<32x64xf32> -> vector<32x64xf32>
    %163 = vector.extract_strided_slice %136 {offsets = [0, 0, 32], sizes = [2, 16, 32], strides = [1, 1, 1]} : vector<2x16x64xf32> to vector<2x16x32xf32>
    %164 = vector.extract_strided_slice %138 {offsets = [0, 0, 32], sizes = [2, 16, 32], strides = [1, 1, 1]} : vector<2x16x64xf32> to vector<2x16x32xf32>
    %165 = vector.extract_strided_slice %140 {offsets = [0, 0, 32], sizes = [2, 16, 32], strides = [1, 1, 1]} : vector<2x16x64xf32> to vector<2x16x32xf32>
    "tpu.trace_start"() <{level = 10 : i32, message = "bqd,bkd->bqk"}> : () -> ()
    %cst_55 = arith.constant dense<0.000000e+00> : vector<2x16x16xf32>
    %166 = tpu.matmul %163, %164, %cst_55 {dimension_numbers = #tpu.dot_dimension_numbers<[2], [2], [1], [1], [0, 0, 0, 1, 1, 1], [0], [0]>} : vector<2x16x32xf32>, vector<2x16x32xf32>, vector<2x16x16xf32> -> vector<2x16x16xf32>
    "tpu.trace_stop"() : () -> ()
    %cst_56 = arith.constant 0.176776692 : f32
    %167 = vector.broadcast %cst_56 : f32 to vector<2x16x16xf32>
    %168 = arith.mulf %166, %167 : vector<2x16x16xf32>
    %169 = vector.broadcast %8 : vector<1x16x16xf32> to vector<2x16x16xf32>
    %170 = arith.addf %168, %169 : vector<2x16x16xf32>
    %cst_57 = arith.constant dense<0xFF800000> : vector<2x16xf32>
    %171 = vector.multi_reduction <maximumf>, %170, %cst_57 [2] : vector<2x16x16xf32> to vector<2x16xf32>
    %172 = vector.shape_cast %171 : vector<2x16xf32> to vector<2x16x1xf32>
    %173 = vector.broadcast %172 : vector<2x16x1xf32> to vector<2x16x16xf32>
    %174 = arith.subf %170, %173 : vector<2x16x16xf32>
    %175 = math.exp %174 : vector<2x16x16xf32>
    %cst_58 = arith.constant dense<0.000000e+00> : vector<2x16xf32>
    %176 = vector.multi_reduction <add>, %175, %cst_58 [2] : vector<2x16x16xf32> to vector<2x16xf32>
    %177 = vector.shape_cast %176 : vector<2x16xf32> to vector<2x16x1xf32>
    %178 = tpu.reciprocal %177 {approx = true} : vector<2x16x1xf32> -> vector<2x16x1xf32>
    %179 = vector.broadcast %178 : vector<2x16x1xf32> to vector<2x16x16xf32>
    %180 = arith.mulf %175, %179 : vector<2x16x16xf32>
    "tpu.trace_start"() <{level = 10 : i32, message = "bqk,bkd->bqd"}> : () -> ()
    %cst_59 = arith.constant dense<0.000000e+00> : vector<2x16x32xf32>
    %181 = tpu.matmul %180, %165, %cst_59 {dimension_numbers = #tpu.dot_dimension_numbers<[2], [1], [1], [2], [0, 0, 0, 1, 1, 2], [0], [0]>} : vector<2x16x16xf32>, vector<2x16x32xf32>, vector<2x16x32xf32> -> vector<2x16x32xf32>
    "tpu.trace_stop"() : () -> ()
    %182 = vector.shape_cast %181 : vector<2x16x32xf32> to vector<32x32xf32>
    %c544 = arith.constant 544 : index
    %c0_60 = arith.constant 0 : index
    %183 = vector.load %arg2[%c544, %c0_60] : memref<960x256xf32, #tpu.memory_space<vmem>>, vector<32x64xf32>
    %cst_61 = arith.constant dense<0.000000e+00> : vector<32x64xf32>
    %184 = tpu.matmul %182, %183, %cst_61 {dimension_numbers = #tpu.dot_dimension_numbers<[1], [0], [0], [1], [0, 0, 1, 1], [], []>} : vector<32x32xf32>, vector<32x64xf32>, vector<32x64xf32> -> vector<32x64xf32>
    %185 = arith.addf %162, %184 : vector<32x64xf32>
    %c72 = arith.constant 72 : index
    %c0_62 = arith.constant 0 : index
    %186 = vector.load %arg3[%c72, %c0_62] : memref<152x256xf32, #tpu.memory_space<vmem>>, vector<1x64xf32>
    %187 = vector.broadcast %186 : vector<1x64xf32> to vector<32x64xf32>
    %188 = arith.addf %185, %187 : vector<32x64xf32>
    %189 = arith.addf %129, %188 : vector<32x64xf32>
    %c80 = arith.constant 80 : index
    %c0_63 = arith.constant 0 : index
    %190 = vector.load %arg3[%c80, %c0_63] : memref<152x256xf32, #tpu.memory_space<vmem>>, vector<1x64xf32>
    %c88 = arith.constant 88 : index
    %c0_64 = arith.constant 0 : index
    %191 = vector.load %arg3[%c88, %c0_64] : memref<152x256xf32, #tpu.memory_space<vmem>>, vector<1x64xf32>
    %cst_65 = arith.constant dense<0.000000e+00> : vector<32xf32>
    %192 = vector.multi_reduction <add>, %189, %cst_65 [1] : vector<32x64xf32> to vector<32xf32>
    %193 = vector.shape_cast %192 : vector<32xf32> to vector<32x1xf32>
    %cst_66 = arith.constant 6.400000e+01 : f32
    %194 = vector.broadcast %cst_66 : f32 to vector<32x1xf32>
    %195 = arith.divf %193, %194 : vector<32x1xf32>
    %196 = vector.broadcast %195 : vector<32x1xf32> to vector<32x64xf32>
    %197 = arith.subf %189, %196 : vector<32x64xf32>
    %198 = arith.mulf %197, %197 : vector<32x64xf32>
    %cst_67 = arith.constant dense<0.000000e+00> : vector<32xf32>
    %199 = vector.multi_reduction <add>, %198, %cst_67 [1] : vector<32x64xf32> to vector<32xf32>
    %200 = vector.shape_cast %199 : vector<32xf32> to vector<32x1xf32>
    %cst_68 = arith.constant 6.400000e+01 : f32
    %201 = vector.broadcast %cst_68 : f32 to vector<32x1xf32>
    %202 = arith.divf %200, %201 : vector<32x1xf32>
    %203 = vector.broadcast %195 : vector<32x1xf32> to vector<32x64xf32>
    %204 = arith.subf %189, %203 : vector<32x64xf32>
    %cst_69 = arith.constant 9.99999974E-6 : f32
    %205 = vector.broadcast %cst_69 : f32 to vector<32x1xf32>
    %206 = arith.addf %202, %205 : vector<32x1xf32>
    %207 = math.rsqrt %206 : vector<32x1xf32>
    %208 = vector.broadcast %207 : vector<32x1xf32> to vector<32x64xf32>
    %209 = arith.mulf %204, %208 : vector<32x64xf32>
    %210 = vector.broadcast %190 : vector<1x64xf32> to vector<32x64xf32>
    %211 = arith.mulf %209, %210 : vector<32x64xf32>
    %212 = vector.broadcast %191 : vector<1x64xf32> to vector<32x64xf32>
    %213 = arith.addf %211, %212 : vector<32x64xf32>
    %c576 = arith.constant 576 : index
    %c0_70 = arith.constant 0 : index
    %214 = vector.load %arg2[%c576, %c0_70] : memref<960x256xf32, #tpu.memory_space<vmem>>, vector<64x256xf32>
    %c640 = arith.constant 640 : index
    %c0_71 = arith.constant 0 : index
    %215 = vector.load %arg2[%c640, %c0_71] : memref<960x256xf32, #tpu.memory_space<vmem>>, vector<256x64xf32>
    %cst_72 = arith.constant dense<0.000000e+00> : vector<32x256xf32>
    %216 = tpu.matmul %213, %214, %cst_72 {dimension_numbers = #tpu.dot_dimension_numbers<[1], [0], [0], [1], [0, 0, 1, 1], [], []>} : vector<32x64xf32>, vector<64x256xf32>, vector<32x256xf32> -> vector<32x256xf32>
    %c96_73 = arith.constant 96 : index
    %c0_74 = arith.constant 0 : index
    %217 = vector.load %arg3[%c96_73, %c0_74] : memref<152x256xf32, #tpu.memory_space<vmem>>, vector<1x256xf32>
    %218 = vector.broadcast %217 : vector<1x256xf32> to vector<32x256xf32>
    %219 = arith.addf %216, %218 : vector<32x256xf32>
    %cst_75 = arith.constant 0.000000e+00 : f32
    %220 = vector.broadcast %cst_75 : f32 to vector<32x256xf32>
    %221 = arith.maximumf %219, %220 : vector<32x256xf32>
    %cst_76 = arith.constant dense<0.000000e+00> : vector<32x64xf32>
    %222 = tpu.matmul %221, %215, %cst_76 {dimension_numbers = #tpu.dot_dimension_numbers<[1], [0], [0], [1], [0, 0, 1, 1], [], []>} : vector<32x256xf32>, vector<256x64xf32>, vector<32x64xf32> -> vector<32x64xf32>
    %c104 = arith.constant 104 : index
    %c0_77 = arith.constant 0 : index
    %223 = vector.load %arg3[%c104, %c0_77] : memref<152x256xf32, #tpu.memory_space<vmem>>, vector<1x64xf32>
    %224 = vector.broadcast %223 : vector<1x64xf32> to vector<32x64xf32>
    %225 = arith.addf %222, %224 : vector<32x64xf32>
    %226 = arith.addf %213, %225 : vector<32x64xf32>
    %c112 = arith.constant 112 : index
    %c0_78 = arith.constant 0 : index
    %227 = vector.load %arg3[%c112, %c0_78] : memref<152x256xf32, #tpu.memory_space<vmem>>, vector<1x64xf32>
    %c120 = arith.constant 120 : index
    %c0_79 = arith.constant 0 : index
    %228 = vector.load %arg3[%c120, %c0_79] : memref<152x256xf32, #tpu.memory_space<vmem>>, vector<1x64xf32>
    %cst_80 = arith.constant dense<0.000000e+00> : vector<32xf32>
    %229 = vector.multi_reduction <add>, %226, %cst_80 [1] : vector<32x64xf32> to vector<32xf32>
    %230 = vector.shape_cast %229 : vector<32xf32> to vector<32x1xf32>
    %cst_81 = arith.constant 6.400000e+01 : f32
    %231 = vector.broadcast %cst_81 : f32 to vector<32x1xf32>
    %232 = arith.divf %230, %231 : vector<32x1xf32>
    %233 = vector.broadcast %232 : vector<32x1xf32> to vector<32x64xf32>
    %234 = arith.subf %226, %233 : vector<32x64xf32>
    %235 = arith.mulf %234, %234 : vector<32x64xf32>
    %cst_82 = arith.constant dense<0.000000e+00> : vector<32xf32>
    %236 = vector.multi_reduction <add>, %235, %cst_82 [1] : vector<32x64xf32> to vector<32xf32>
    %237 = vector.shape_cast %236 : vector<32xf32> to vector<32x1xf32>
    %cst_83 = arith.constant 6.400000e+01 : f32
    %238 = vector.broadcast %cst_83 : f32 to vector<32x1xf32>
    %239 = arith.divf %237, %238 : vector<32x1xf32>
    %240 = vector.broadcast %232 : vector<32x1xf32> to vector<32x64xf32>
    %241 = arith.subf %226, %240 : vector<32x64xf32>
    %cst_84 = arith.constant 9.99999974E-6 : f32
    %242 = vector.broadcast %cst_84 : f32 to vector<32x1xf32>
    %243 = arith.addf %239, %242 : vector<32x1xf32>
    %244 = math.rsqrt %243 : vector<32x1xf32>
    %245 = vector.broadcast %244 : vector<32x1xf32> to vector<32x64xf32>
    %246 = arith.mulf %241, %245 : vector<32x64xf32>
    %247 = vector.broadcast %227 : vector<1x64xf32> to vector<32x64xf32>
    %248 = arith.mulf %246, %247 : vector<32x64xf32>
    %249 = vector.broadcast %228 : vector<1x64xf32> to vector<32x64xf32>
    %250 = arith.addf %248, %249 : vector<32x64xf32>
    %c128_85 = arith.constant 128 : index
    %c0_86 = arith.constant 0 : index
    %251 = vector.load %arg3[%c128_85, %c0_86] : memref<152x256xf32, #tpu.memory_space<vmem>>, vector<1x64xf32>
    %c136 = arith.constant 136 : index
    %c0_87 = arith.constant 0 : index
    %252 = vector.load %arg3[%c136, %c0_87] : memref<152x256xf32, #tpu.memory_space<vmem>>, vector<1x64xf32>
    %cst_88 = arith.constant dense<0.000000e+00> : vector<32xf32>
    %253 = vector.multi_reduction <add>, %250, %cst_88 [1] : vector<32x64xf32> to vector<32xf32>
    %254 = vector.shape_cast %253 : vector<32xf32> to vector<32x1xf32>
    %cst_89 = arith.constant 6.400000e+01 : f32
    %255 = vector.broadcast %cst_89 : f32 to vector<32x1xf32>
    %256 = arith.divf %254, %255 : vector<32x1xf32>
    %257 = vector.broadcast %256 : vector<32x1xf32> to vector<32x64xf32>
    %258 = arith.subf %250, %257 : vector<32x64xf32>
    %259 = arith.mulf %258, %258 : vector<32x64xf32>
    %cst_90 = arith.constant dense<0.000000e+00> : vector<32xf32>
    %260 = vector.multi_reduction <add>, %259, %cst_90 [1] : vector<32x64xf32> to vector<32xf32>
    %261 = vector.shape_cast %260 : vector<32xf32> to vector<32x1xf32>
    %cst_91 = arith.constant 6.400000e+01 : f32
    %262 = vector.broadcast %cst_91 : f32 to vector<32x1xf32>
    %263 = arith.divf %261, %262 : vector<32x1xf32>
    %264 = vector.broadcast %256 : vector<32x1xf32> to vector<32x64xf32>
    %265 = arith.subf %250, %264 : vector<32x64xf32>
    %cst_92 = arith.constant 9.99999974E-6 : f32
    %266 = vector.broadcast %cst_92 : f32 to vector<32x1xf32>
    %267 = arith.addf %263, %266 : vector<32x1xf32>
    %268 = math.rsqrt %267 : vector<32x1xf32>
    %269 = vector.broadcast %268 : vector<32x1xf32> to vector<32x64xf32>
    %270 = arith.mulf %265, %269 : vector<32x64xf32>
    %271 = vector.broadcast %251 : vector<1x64xf32> to vector<32x64xf32>
    %272 = arith.mulf %270, %271 : vector<32x64xf32>
    %273 = vector.broadcast %252 : vector<1x64xf32> to vector<32x64xf32>
    %274 = arith.addf %272, %273 : vector<32x64xf32>
    %c896 = arith.constant 896 : index
    %c0_93 = arith.constant 0 : index
    %275 = vector.load %arg2[%c896, %c0_93] : memref<960x256xf32, #tpu.memory_space<vmem>>, vector<64x128xf32>
    %cst_94 = arith.constant dense<0.000000e+00> : vector<32x128xf32>
    %276 = tpu.matmul %274, %275, %cst_94 {dimension_numbers = #tpu.dot_dimension_numbers<[1], [0], [0], [1], [0, 0, 1, 1], [], []>} : vector<32x64xf32>, vector<64x128xf32>, vector<32x128xf32> -> vector<32x128xf32>
    %c144 = arith.constant 144 : index
    %c0_95 = arith.constant 0 : index
    %277 = vector.load %arg3[%c144, %c0_95] : memref<152x256xf32, #tpu.memory_space<vmem>>, vector<1x128xf32>
    %278 = vector.broadcast %277 : vector<1x128xf32> to vector<32x128xf32>
    %279 = arith.addf %276, %278 : vector<32x128xf32>
    %280 = vector.shape_cast %279 : vector<32x128xf32> to vector<2x16x128xf32>
    %c0_96 = arith.constant 0 : index
    %c0_97 = arith.constant 0 : index
    %c0_98 = arith.constant 0 : index
    %281 = vector.load %arg4[%c0_96, %c0_97, %c0_98] : memref<2x16x128xf32, #tpu.memory_space<vmem>>, vector<2x16x128xf32>
    tpu.vector_store %arg4[%c0_96, %c0_97, %c0_98], %280 {strides = array<i32>} : memref<2x16x128xf32, #tpu.memory_space<vmem>>, vector<2x16x128xf32>,
    return
  }
  func.func @transform_0(%arg0: i32) -> (i32, i32, i32) {
    %c0_i32 = arith.constant 0 : i32
    %c0_i32_0 = arith.constant 0 : i32
    %c0_i32_1 = arith.constant 0 : i32
    return %arg0, %c0_i32, %c0_i32_0 : i32, i32, i32
  }
  func.func @transform_1(%arg0: i32) -> (i32, i32) {
    %c0_i32 = arith.constant 0 : i32
    %c0_i32_0 = arith.constant 0 : i32
    %c0_i32_1 = arith.constant 0 : i32
    return %c0_i32, %c0_i32_0 : i32, i32
  }
  func.func @transform_2(%arg0: i32) -> (i32, i32) {
    %c0_i32 = arith.constant 0 : i32
    %c0_i32_0 = arith.constant 0 : i32
    %c0_i32_1 = arith.constant 0 : i32
    return %c0_i32, %c0_i32_0 : i32, i32
  }
  func.func @transform_3(%arg0: i32) -> (i32, i32, i32) {
    %c0_i32 = arith.constant 0 : i32
    %c0_i32_0 = arith.constant 0 : i32
    %c0_i32_1 = arith.constant 0 : i32
    return %arg0, %c0_i32, %c0_i32_0 : i32, i32, i32
  }
}

</mosaic_0001>

<llo_original>
// kernel: minigpt_pallas.1
$region0: #{minigpt_pallas.1}
  #allocation0 [shape = 'u32[]', space=smem, size = 0x4, offset = 0x4, fixed_abs, tag = 'smem constant byte address 0x4 - core index']
  #allocation1 [shape = 'u32[144,128]{1,0:T(1,128)}', space=vmem, size = 0x12000, scoped, tag = 'internal scratch']
  %s0 = inlined_call_operand.vmem [shape: f32[2,16,64], index: 0, kind: input, shape index: {}]
  %s1 = inlined_call_operand.vmem [shape: f32[960,256], index: 1, kind: input, shape index: {}]
  %s2 = inlined_call_operand.vmem [shape: f32[152,256], index: 2, kind: input, shape index: {}]
  %s3 = inlined_call_operand.hbm [shape: f32[2,16,128], index: 3, kind: output, shape index: {}]
  %s4 = sld [smem:[#allocation0]]
  $region22: #{minigpt_pallas.1} parent=0
    _
  %s6 = ssub.s32 1, %s4
  %s7 = scalar_select 0, %s6, %s4
  $region1: #{minigpt_pallas.1} parent=0
    #allocation2 [shape = 'u8[16384]{0}', space=vmem, size = 0x4000, scoped, tag = 'output window, operand 0, single buffered']
    #allocation3 [shape = 's32[1]{0}', space=sflag, size = 0x4, scoped, tag = 'scoped memory for minigpt_pallas.1']
    %8 = vsyncpa [#allocation3], 0
    // Predicated region
    $region2: #{minigpt_pallas.1} parent=1 // pred_check
      _
    $region3: #{minigpt_pallas.1} parent=1 // pred_check_branch
      %10 = sbr.rel (0) target = $region5
    $region4: #{minigpt_pallas.1} parent=1 // pred_region
      _
    $region5: #{minigpt_pallas.1} parent=1 // pred_fallthru
      _
    // Predicated region
    $region6: #{minigpt_pallas.1} parent=1 // pred_check
      _
    $region7: #{minigpt_pallas.1} parent=1 // pred_check_branch
      %12 = sbr.rel (0) target = $region9
    $region8: #{minigpt_pallas.1} parent=1 // pred_region
      _
    $region9: #{minigpt_pallas.1} parent=1 // pred_fallthru
      _
    // Predicated region
    $region10: #{minigpt_pallas.1} parent=1 // pred_check
      _
    $region11: #{minigpt_pallas.1} parent=1 // pred_check_branch
      %14 = sbr.rel (0) target = $region13
    $region12: #{minigpt_pallas.1} parent=1 // pred_region
      _
    $region13: #{minigpt_pallas.1} parent=1 // pred_fallthru
      _
    %v15 = vld [vmem:[%s0] sm:$0xff]
    %v16 = vld [vmem:[%s0 + $0x8] sm:$0xff]
    %v17 = vld [vmem:[%s0 + $0x10] sm:$0xff]
    %v18 = vld [vmem:[%s0 + $0x18] sm:$0xff]
    %v19 = vlaneseq
    %v20 = vshrl.u32 %v19, 7
    %v21 = vadd.s32 %v20, 8
    %v22 = vlaneseq
    %v23 = vand.u32 %v22, 127
    %vm24 = vcmp.gt.s32.totalorder %v23, %v20
    %vm25 = vcmp.gt.s32.totalorder %v23, %v21
    %v26 = vsel %vm24, -1e+30, 0.0
    %v27 = vsel %vm25, -1e+30, 0.0
    %v28 = vld [vmem:[%s1] sm:$0xff]
    %v29 = vld [vmem:[%s1 + $0x8] sm:$0xff]
    %v30 = vld [vmem:[%s1 + $0x10] sm:$0xff]
    %v31 = vld [vmem:[%s1 + $0x18] sm:$0xff]
    %v32 = vld [vmem:[%s1 + $0x20] sm:$0xff]
    %v33 = vld [vmem:[%s1 + $0x28] sm:$0xff]
    %v34 = vld [vmem:[%s1 + $0x30] sm:$0xff]
    %v35 = vld [vmem:[%s1 + $0x38] sm:$0xff]
    %v36 = vld [vmem:[%s1 + $0x40] sm:$0xff]
    %v37 = vld [vmem:[%s1 + $0x48] sm:$0xff]
    %v38 = vld [vmem:[%s1 + $0x50] sm:$0xff]
    %v39 = vld [vmem:[%s1 + $0x58] sm:$0xff]
    %v40 = vld [vmem:[%s1 + $0x60] sm:$0xff]
    %v41 = vld [vmem:[%s1 + $0x68] sm:$0xff]
    %v42 = vld [vmem:[%s1 + $0x70] sm:$0xff]
    %v43 = vld [vmem:[%s1 + $0x78] sm:$0xff]
    %v44 = vld [vmem:[%s2] ss:$8 sm:$0x3]
    %v46 = vlaneseq
    %v47 = vshrl.u32 %v46, 7
    %v48 = vsub.s32 0, %v47
    %v49 = vrot.slane %v44, %v48
    %v50 = vlaneseq
    %v51 = vshrl.u32 %v50, 7
    %v52 = vsub.s32 1, %v51
    %v53 = vrot.slane %v44, %v52
    %vm56 = vcmask 523264
    %v58 = vsel %vm56, %v15, 0
    %v61 = vsel %vm56, %v16, 0
    %v64 = vsel %vm56, %v17, 0
    %v67 = vsel %vm56, %v18, 0
    %69 = vmatprep.subr.mxu0 %v29
    %70 = vmatpush1.msra.mxu0 %v28
    %71 = vmatprep.subr.mxu0 %v31
    %72 = vmatpush1.msra.mxu0 %v30
    %73 = vmatprep.subr.mxu0 %v33
    %74 = vmatpush1.msra.mxu0 %v32
    %75 = vmatprep.subr.mxu0 %v35
    %76 = vmatpush1.msra.mxu0 %v34
    %77 = vmatprep.subr.mxu0 %v37
    %78 = vmatpush1.msra.mxu0 %v36
    %79 = vmatprep.subr.mxu0 %v39
    %80 = vmatpush1.msra.mxu0 %v38
    %81 = vmatprep.subr.mxu0 %v41
    %82 = vmatpush1.msra.mxu0 %v40
    %83 = vmatprep.subr.mxu0 %v43
    %84 = vmatpush1.msra.mxu0 %v42
    %85 = vmatprep.subr.mxu0 0.0
    %86 = vmatpush1.msra.mxu0 0.0
    %87 = vmatprep.subr.mxu0 0.0
    %88 = vmatpush1.msra.mxu0 0.0
    %89 = vmatprep.subr.mxu0 0.0
    %90 = vmatpush1.msra.mxu0 0.0
    %91 = vmatprep.subr.mxu0 0.0
    %92 = vmatpush1.msra.mxu0 0.0
    %93 = vmatprep.subr.mxu0 0.0
    %94 = vmatpush1.msra.mxu0 0.0
    %95 = vmatprep.subr.mxu0 0.0
    %96 = vmatpush1.msra.mxu0 0.0
    %97 = vmatprep.subr.mxu0 0.0
    %98 = vmatpush1.msra.mxu0 0.0
    %99 = vmatprep.subr.mxu0 0.0
    %100 = vmatpush1.msra.mxu0 0.0
    %101 = vmatprep.subr.mxu0 0.0
    %102 = vmatpush1.msra.mxu0 0.0
    %103 = vmatprep.subr.mxu0 0.0
    %104 = vmatpush1.msra.mxu0 0.0
    %105 = vmatprep.subr.mxu0 0.0
    %106 = vmatpush1.msra.mxu0 0.0
    %107 = vmatprep.subr.mxu0 0.0
    %108 = vmatpush1.msra.mxu0 0.0
    %109 = vmatprep.subr.mxu0 0.0
    %110 = vmatpush1.msra.mxu0 0.0
    %111 = vmatprep.subr.mxu0 0.0
    %112 = vmatpush1.msra.mxu0 0.0
    %113 = vmatprep.subr.mxu0 0.0
    %114 = vmatpush1.msra.mxu0 0.0
    %115 = vmatprep.subr.mxu0 0.0
    %116 = vmatpush1.msra.mxu0 0.0
    %117 = vmatprep.subr.mxu0 0.0
    %118 = vmatpush1.msra.mxu0 0.0
    %119 = vmatprep.subr.mxu0 0.0
    %120 = vmatpush1.msra.mxu0 0.0
    %121 = vmatprep.subr.mxu0 0.0
    %122 = vmatpush1.msra.mxu0 0.0
    %123 = vmatprep.subr.mxu0 0.0
    %124 = vmatpush1.msra.mxu0 0.0
    %125 = vmatprep.subr.mxu0 0.0
    %126 = vmatpush1.msra.mxu0 0.0
    %127 = vmatprep.subr.mxu0 0.0
    %128 = vmatpush1.msra.mxu0 0.0
    %129 = vmatprep.subr.mxu0 0.0
    %130 = vmatpush1.msra.mxu0 0.0
    %131 = vmatprep.subr.mxu0 0.0
    %132 = vmatpush1.msra.mxu0 0.0
    %133 = vmatprep.mubr.f32.mxu0 0.0
    %134 = vmatmul.mubr.f32.gmra.mrb[0].mxu0 %v58
    %v135 = vpop.f32.mrb[0].mxu0
    %v136 = vadd.f32 %v49, %v135
    %v137 = vpop.f32.mrb[0].mxu0
    %v138 = vadd.f32 %v53, %v137
    %139 = vmatprep.mubr.f32.mxu0 0.0
    %140 = vmatmul.mubr.f32.gmra.mrb[0].mxu0 %v61
    %v141 = vpop.f32.mrb[0].mxu0
    %v142 = vadd.f32 %v49, %v141
    %v143 = vpop.f32.mrb[0].mxu0
    %v144 = vadd.f32 %v53, %v143
    %145 = vmatprep.mubr.f32.mxu0 0.0
    %146 = vmatmul.mubr.f32.gmra.mrb[0].mxu0 %v64
    %v147 = vpop.f32.mrb[0].mxu0
    %v148 = vadd.f32 %v49, %v147
    %v149 = vpop.f32.mrb[0].mxu0
    %v150 = vadd.f32 %v53, %v149
    %151 = vmatprep.mubr.f32.mxu0 0.0
    %152 = vmatmul.mubr.f32.gmra.mrb[0].mxu0 %v67
    %v153 = vpop.f32.mrb[0].mxu0
    %v154 = vadd.f32 %v49, %v153
    %v155 = vpop.f32.mrb[0].mxu0
    %v156 = vadd.f32 %v53, %v155
    %157 = vdwg.mxu0
    %160 = vrot.lane.b32.xlu0 %v136, 64
    %v161 = vpop.permute.xlu0 %160
    %162 = vrot.lane.b32.xlu0 %v142, 64
    %v163 = vpop.permute.xlu0 %162
    %vm164 = vcmask 261120
    %v165 = vsel %vm164, %v136, 0
    %v167 = vsel %vm164, %v142, 0
    %v169 = vsel %vm164, %v161, 0
    %v171 = vsel %vm164, %v163, 0
    %173 = vmatprep.subr.mxu0 0.0
    %174 = vmatpush1.xpose.msra.mxu0 %v169
    %175 = vmatprep.subr.mxu0 0.0
    %176 = vmatpush1.xpose.msra.mxu0 %v171
    %177 = vmatprep.subr.mxu0 0.0
    %178 = vmatpush1.xpose.msra.mxu0 0.0
    %179 = vmatprep.subr.mxu0 0.0
    %180 = vmatpush1.xpose.msra.mxu0 0.0
    %181 = vmatprep.subr.mxu0 0.0
    %182 = vmatpush1.xpose.msra.mxu0 0.0
    %183 = vmatprep.subr.mxu0 0.0
    %184 = vmatpush1.xpose.msra.mxu0 0.0
    %185 = vmatprep.subr.mxu0 0.0
    %186 = vmatpush1.xpose.msra.mxu0 0.0
    %187 = vmatprep.subr.mxu0 0.0
    %188 = vmatpush1.xpose.msra.mxu0 0.0
    %189 = vmatprep.subr.mxu0 0.0
    %190 = vmatpush1.xpose.msra.mxu0 0.0
    %191 = vmatprep.subr.mxu0 0.0
    %192 = vmatpush1.xpose.msra.mxu0 0.0
    %193 = vmatprep.subr.mxu0 0.0
    %194 = vmatpush1.xpose.msra.mxu0 0.0
    %195 = vmatprep.subr.mxu0 0.0
    %196 = vmatpush1.xpose.msra.mxu0 0.0
    %197 = vmatprep.subr.mxu0 0.0
    %198 = vmatpush1.xpose.msra.mxu0 0.0
    %199 = vmatprep.subr.mxu0 0.0
    %200 = vmatpush1.xpose.msra.mxu0 0.0
    %201 = vmatprep.subr.mxu0 0.0
    %202 = vmatpush1.xpose.msra.mxu0 0.0
    %203 = vmatprep.subr.mxu0 0.0
    %204 = vmatpush1.xpose.msra.mxu0 0.0
    %205 = vmatprep.subr.mxu0 0.0
    %206 = vmatpush1.xpose.msra.mxu0 0.0
    %207 = vmatprep.subr.mxu0 0.0
    %208 = vmatpush1.xpose.msra.mxu0 0.0
    %209 = vmatprep.subr.mxu0 0.0
    %210 = vmatpush1.xpose.msra.mxu0 0.0
    %211 = vmatprep.subr.mxu0 0.0
    %212 = vmatpush1.xpose.msra.mxu0 0.0
    %213 = vmatprep.subr.mxu0 0.0
    %214 = vmatpush1.xpose.msra.mxu0 0.0
    %215 = vmatprep.subr.mxu0 0.0
    %216 = vmatpush1.xpose.msra.mxu0 0.0
    %217 = vmatprep.subr.mxu0 0.0
    %218 = vmatpush1.xpose.msra.mxu0 0.0
    %219 = vmatprep.subr.mxu0 0.0
    %220 = vmatpush1.xpose.msra.mxu0 0.0
    %221 = vmatprep.subr.mxu0 0.0
    %222 = vmatpush1.xpose.msra.mxu0 0.0
    %223 = vmatprep.subr.mxu0 0.0
    %224 = vmatpush1.xpose.msra.mxu0 0.0
    %225 = vmatprep.subr.mxu0 0.0
    %226 = vmatpush1.xpose.msra.mxu0 0.0
    %227 = vmatprep.subr.mxu0 0.0
    %228 = vmatpush1.xpose.msra.mxu0 0.0
    %229 = vmatprep.subr.mxu0 0.0
    %230 = vmatpush1.xpose.msra.mxu0 0.0
    %231 = vmatprep.subr.mxu0 0.0
    %232 = vmatpush1.xpose.msra.mxu0 0.0
    %233 = vmatprep.subr.mxu0 0.0
    %234 = vmatpush1.xpose.msra.mxu0 0.0
    %235 = vmatprep.subr.mxu0 0.0
    %236 = vmatpush1.xpose.msra.mxu0 0.0
    %237 = vmatprep.mubr.f32.mxu0 0.0
    %238 = vmatmul.mubr.f32.gmra.mrb[0].mxu0 %v165
    %v239 = vpop.f32.mrb[0].mxu0
    %v240 = vadd.f32 0.0, %v239
    %v241 = vpop.f32.mrb[0].mxu0
    %242 = vmatprep.mubr.f32.mxu0 0.0
    %243 = vmatmul.mubr.f32.gmra.mrb[0].mxu0 %v167
    %v244 = vpop.f32.mrb[0].mxu0
    %v245 = vadd.f32 0.0, %v244
    %v246 = vpop.f32.mrb[0].mxu0
    %247 = vdwg.mxu0
    %250 = vrot.lane.b32.xlu0 %v148, 64
    %v251 = vpop.permute.xlu0 %250
    %252 = vrot.lane.b32.xlu0 %v154, 64
    %v253 = vpop.permute.xlu0 %252
    %v254 = vsel %vm164, %v148, 0
    %v256 = vsel %vm164, %v154, 0
    %v258 = vsel %vm164, %v251, 0
    %v260 = vsel %vm164, %v253, 0
    %262 = vmatprep.subr.mxu0 0.0
    %263 = vmatpush1.xpose.msra.mxu0 %v258
    %264 = vmatprep.subr.mxu0 0.0
    %265 = vmatpush1.xpose.msra.mxu0 %v260
    %266 = vmatprep.subr.mxu0 0.0
    %267 = vmatpush1.xpose.msra.mxu0 0.0
    %268 = vmatprep.subr.mxu0 0.0
    %269 = vmatpush1.xpose.msra.mxu0 0.0
    %270 = vmatprep.subr.mxu0 0.0
    %271 = vmatpush1.xpose.msra.mxu0 0.0
    %272 = vmatprep.subr.mxu0 0.0
    %273 = vmatpush1.xpose.msra.mxu0 0.0
    %274 = vmatprep.subr.mxu0 0.0
    %275 = vmatpush1.xpose.msra.mxu0 0.0
    %276 = vmatprep.subr.mxu0 0.0
    %277 = vmatpush1.xpose.msra.mxu0 0.0
    %278 = vmatprep.subr.mxu0 0.0
    %279 = vmatpush1.xpose.msra.mxu0 0.0
    %280 = vmatprep.subr.mxu0 0.0
    %281 = vmatpush1.xpose.msra.mxu0 0.0
    %282 = vmatprep.subr.mxu0 0.0
    %283 = vmatpush1.xpose.msra.mxu0 0.0
    %284 = vmatprep.subr.mxu0 0.0
    %285 = vmatpush1.xpose.msra.mxu0 0.0
    %286 = vmatprep.subr.mxu0 0.0
    %287 = vmatpush1.xpose.msra.mxu0 0.0
    %288 = vmatprep.subr.mxu0 0.0
    %289 = vmatpush1.xpose.msra.mxu0 0.0
    %290 = vmatprep.subr.mxu0 0.0
    %291 = vmatpush1.xpose.msra.mxu0 0.0
    %292 = vmatprep.subr.mxu0 0.0
    %293 = vmatpush1.xpose.msra.mxu0 0.0
    %294 = vmatprep.subr.mxu0 0.0
    %295 = vmatpush1.xpose.msra.mxu0 0.0
    %296 = vmatprep.subr.mxu0 0.0
    %297 = vmatpush1.xpose.msra.mxu0 0.0
    %298 = vmatprep.subr.mxu0 0.0
    %299 = vmatpush1.xpose.msra.mxu0 0.0
    %300 = vmatprep.subr.mxu0 0.0
    %301 = vmatpush1.xpose.msra.mxu0 0.0
    %302 = vmatprep.subr.mxu0 0.0
    %303 = vmatpush1.xpose.msra.mxu0 0.0
    %304 = vmatprep.subr.mxu0 0.0
    %305 = vmatpush1.xpose.msra.mxu0 0.0
    %306 = vmatprep.subr.mxu0 0.0
    %307 = vmatpush1.xpose.msra.mxu0 0.0
    %308 = vmatprep.subr.mxu0 0.0
    %309 = vmatpush1.xpose.msra.mxu0 0.0
    %310 = vmatprep.subr.mxu0 0.0
    %311 = vmatpush1.xpose.msra.mxu0 0.0
    %312 = vmatprep.subr.mxu0 0.0
    %313 = vmatpush1.xpose.msra.mxu0 0.0
    %314 = vmatprep.subr.mxu0 0.0
    %315 = vmatpush1.xpose.msra.mxu0 0.0
    %316 = vmatprep.subr.mxu0 0.0
    %317 = vmatpush1.xpose.msra.mxu0 0.0
    %318 = vmatprep.subr.mxu0 0.0
    %319 = vmatpush1.xpose.msra.mxu0 0.0
    %320 = vmatprep.subr.mxu0 0.0
    %321 = vmatpush1.xpose.msra.mxu0 0.0
    %322 = vmatprep.subr.mxu0 0.0
    %323 = vmatpush1.xpose.msra.mxu0 0.0
    %324 = vmatprep.subr.mxu0 0.0
    %325 = vmatpush1.xpose.msra.mxu0 0.0
    %326 = vmatprep.mubr.f32.mxu0 0.0
    %327 = vmatmul.mubr.f32.gmra.mrb[0].mxu0 %v254
    %v328 = vpop.f32.mrb[0].mxu0
    %v329 = vadd.f32 0.0, %v328
    %v330 = vpop.f32.mrb[0].mxu0
    %331 = vmatprep.mubr.f32.mxu0 0.0
    %332 = vmatmul.mubr.f32.gmra.mrb[0].mxu0 %v256
    %v333 = vpop.f32.mrb[0].mxu0
    %v334 = vadd.f32 0.0, %v333
    %v335 = vpop.f32.mrb[0].mxu0
    %336 = vdwg.mxu0
    %v337 = vmul.f32 %v240, 0.17677669
    %v338 = vmul.f32 %v245, 0.17677669
    %v339 = vmul.f32 %v329, 0.17677669
    %v340 = vmul.f32 %v334, 0.17677669
    %v341 = vadd.f32 %v337, %v26
    %v342 = vadd.f32 %v338, %v27
    %v343 = vadd.f32 %v339, %v26
    %v344 = vadd.f32 %v340, %v27
    %vm345 = vcmask 130048
    %v346 = vsel %vm345, %v341, -inf
    %347 = vmax.xlane.f32.xlu0 %v346
    %v348 = vpop.xlane.xlu0 %347
    %v349 = vsel %vm345, %v342, -inf
    %350 = vmax.xlane.f32.xlu0 %v349
    %v351 = vpop.xlane.xlu0 %350
    %v352 = vsel %vm345, %v343, -inf
    %353 = vmax.xlane.f32.xlu0 %v352
    %v354 = vpop.xlane.xlu0 %353
    %v355 = vsel %vm345, %v344, -inf
    %356 = vmax.xlane.f32.xlu0 %v355
    %v357 = vpop.xlane.xlu0 %356
    %v358 = vsub.f32 %v341, %v348
    %v359 = vsub.f32 %v342, %v351
    %v360 = vsub.f32 %v343, %v354
    %v361 = vsub.f32 %v344, %v357
    %v362 = vmul.f32 %v358, 1.442695
    %v363 = vpow.pop %v362
    %v364 = vmul.f32 %v359, 1.442695
    %v365 = vpow.pop %v364
    %v366 = vmul.f32 %v360, 1.442695
    %v367 = vpow.pop %v366
    %v368 = vmul.f32 %v361, 1.442695
    %v369 = vpow.pop %v368
    %v370 = vsel %vm345, %v363, 0.0
    %371 = vadd.xlane.f32.xlu0 %v370
    %v372 = vpop.xlane.xlu0 %371
    %v373 = vsel %vm345, %v365, 0.0
    %374 = vadd.xlane.f32.xlu0 %v373
    %v375 = vpop.xlane.xlu0 %374
    %v376 = vsel %vm345, %v367, 0.0
    %377 = vadd.xlane.f32.xlu0 %v376
    %v378 = vpop.xlane.xlu0 %377
    %v379 = vsel %vm345, %v369, 0.0
    %380 = vadd.xlane.f32.xlu0 %v379
    %v381 = vpop.xlane.xlu0 %380
    %v382 = vrcp.pop %v372
    %v383 = vrcp.pop %v375
    %v384 = vrcp.pop %v378
    %v385 = vrcp.pop %v381
    %v386 = vmul.f32 %v363, %v382
    %v387 = vmul.f32 %v365, %v383
    %v388 = vmul.f32 %v367, %v384
    %v389 = vmul.f32 %v369, %v385
    %v391 = vsel %vm345, %v386, 0
    %v394 = vsel %vm345, %v387, 0
    %396 = vmatprep.subr.mxu0 0.0
    %397 = vmatpush1.msra.mxu0 %v138
    %398 = vmatprep.subr.mxu0 0.0
    %399 = vmatpush1.msra.mxu0 %v144
    %400 = vmatprep.subr.mxu0 0.0
    %401 = vmatpush1.msra.mxu0 0.0
    %402 = vmatprep.subr.mxu0 0.0
    %403 = vmatpush1.msra.mxu0 0.0
    %404 = vmatprep.subr.mxu0 0.0
    %405 = vmatpush1.msra.mxu0 0.0
    %406 = vmatprep.subr.mxu0 0.0
    %407 = vmatpush1.msra.mxu0 0.0
    %408 = vmatprep.subr.mxu0 0.0
    %409 = vmatpush1.msra.mxu0 0.0
    %410 = vmatprep.subr.mxu0 0.0
    %411 = vmatpush1.msra.mxu0 0.0
    %412 = vmatprep.subr.mxu0 0.0
    %413 = vmatpush1.msra.mxu0 0.0
    %414 = vmatprep.subr.mxu0 0.0
    %415 = vmatpush1.msra.mxu0 0.0
    %416 = vmatprep.subr.mxu0 0.0
    %417 = vmatpush1.msra.mxu0 0.0
    %418 = vmatprep.subr.mxu0 0.0
    %419 = vmatpush1.msra.mxu0 0.0
    %420 = vmatprep.subr.mxu0 0.0
    %421 = vmatpush1.msra.mxu0 0.0
    %422 = vmatprep.subr.mxu0 0.0
    %423 = vmatpush1.msra.mxu0 0.0
    %424 = vmatprep.subr.mxu0 0.0
    %425 = vmatpush1.msra.mxu0 0.0
    %426 = vmatprep.subr.mxu0 0.0
    %427 = vmatpush1.msra.mxu0 0.0
    %428 = vmatprep.subr.mxu0 0.0
    %429 = vmatpush1.msra.mxu0 0.0
    %430 = vmatprep.subr.mxu0 0.0
    %431 = vmatpush1.msra.mxu0 0.0
    %432 = vmatprep.subr.mxu0 0.0
    %433 = vmatpush1.msra.mxu0 0.0
    %434 = vmatprep.subr.mxu0 0.0
    %435 = vmatpush1.msra.mxu0 0.0
    %436 = vmatprep.subr.mxu0 0.0
    %437 = vmatpush1.msra.mxu0 0.0
    %438 = vmatprep.subr.mxu0 0.0
    %439 = vmatpush1.msra.mxu0 0.0
    %440 = vmatprep.subr.mxu0 0.0
    %441 = vmatpush1.msra.mxu0 0.0
    %442 = vmatprep.subr.mxu0 0.0
    %443 = vmatpush1.msra.mxu0 0.0
    %444 = vmatprep.subr.mxu0 0.0
    %445 = vmatpush1.msra.mxu0 0.0
    %446 = vmatprep.subr.mxu0 0.0
    %447 = vmatpush1.msra.mxu0 0.0
    %448 = vmatprep.subr.mxu0 0.0
    %449 = vmatpush1.msra.mxu0 0.0
    %450 = vmatprep.subr.mxu0 0.0
    %451 = vmatpush1.msra.mxu0 0.0
    %452 = vmatprep.subr.mxu0 0.0
    %453 = vmatpush1.msra.mxu0 0.0
    %454 = vmatprep.subr.mxu0 0.0
    %455 = vmatpush1.msra.mxu0 0.0
    %456 = vmatprep.subr.mxu0 0.0
    %457 = vmatpush1.msra.mxu0 0.0
    %458 = vmatprep.subr.mxu0 0.0
    %459 = vmatpush1.msra.mxu0 0.0
    %460 = vmatprep.mubr.f32.mxu0 0.0
    %461 = vmatmul.mubr.f32.gmra.mrb[0].mxu0 %v391
    %v462 = vpop.f32.mrb[0].mxu0
    %v463 = vadd.f32 0.0, %v462
    %v464 = vpop.f32.mrb[0].mxu0
    %465 = vmatprep.mubr.f32.mxu0 0.0
    %466 = vmatmul.mubr.f32.gmra.mrb[0].mxu0 %v394
    %v467 = vpop.f32.mrb[0].mxu0
    %v468 = vadd.f32 0.0, %v467
    %v469 = vpop.f32.mrb[0].mxu0
    %470 = vdwg.mxu0
    %v472 = vsel %vm345, %v388, 0
    %v475 = vsel %vm345, %v389, 0
    %477 = vmatprep.subr.mxu0 0.0
    %478 = vmatpush1.msra.mxu0 %v150
    %479 = vmatprep.subr.mxu0 0.0
    %480 = vmatpush1.msra.mxu0 %v156
    %481 = vmatprep.subr.mxu0 0.0
    %482 = vmatpush1.msra.mxu0 0.0
    %483 = vmatprep.subr.mxu0 0.0
    %484 = vmatpush1.msra.mxu0 0.0
    %485 = vmatprep.subr.mxu0 0.0
    %486 = vmatpush1.msra.mxu0 0.0
    %487 = vmatprep.subr.mxu0 0.0
    %488 = vmatpush1.msra.mxu0 0.0
    %489 = vmatprep.subr.mxu0 0.0
    %490 = vmatpush1.msra.mxu0 0.0
    %491 = vmatprep.subr.mxu0 0.0
    %492 = vmatpush1.msra.mxu0 0.0
    %493 = vmatprep.subr.mxu0 0.0
    %494 = vmatpush1.msra.mxu0 0.0
    %495 = vmatprep.subr.mxu0 0.0
    %496 = vmatpush1.msra.mxu0 0.0
    %497 = vmatprep.subr.mxu0 0.0
    %498 = vmatpush1.msra.mxu0 0.0
    %499 = vmatprep.subr.mxu0 0.0
    %500 = vmatpush1.msra.mxu0 0.0
    %501 = vmatprep.subr.mxu0 0.0
    %502 = vmatpush1.msra.mxu0 0.0
    %503 = vmatprep.subr.mxu0 0.0
    %504 = vmatpush1.msra.mxu0 0.0
    %505 = vmatprep.subr.mxu0 0.0
    %506 = vmatpush1.msra.mxu0 0.0
    %507 = vmatprep.subr.mxu0 0.0
    %508 = vmatpush1.msra.mxu0 0.0
    %509 = vmatprep.subr.mxu0 0.0
    %510 = vmatpush1.msra.mxu0 0.0
    %511 = vmatprep.subr.mxu0 0.0
    %512 = vmatpush1.msra.mxu0 0.0
    %513 = vmatprep.subr.mxu0 0.0
    %514 = vmatpush1.msra.mxu0 0.0
    %515 = vmatprep.subr.mxu0 0.0
    %516 = vmatpush1.msra.mxu0 0.0
    %517 = vmatprep.subr.mxu0 0.0
    %518 = vmatpush1.msra.mxu0 0.0
    %519 = vmatprep.subr.mxu0 0.0
    %520 = vmatpush1.msra.mxu0 0.0
    %521 = vmatprep.subr.mxu0 0.0
    %522 = vmatpush1.msra.mxu0 0.0
    %523 = vmatprep.subr.mxu0 0.0
    %524 = vmatpush1.msra.mxu0 0.0
    %525 = vmatprep.subr.mxu0 0.0
    %526 = vmatpush1.msra.mxu0 0.0
    %527 = vmatprep.subr.mxu0 0.0
    %528 = vmatpush1.msra.mxu0 0.0
    %529 = vmatprep.subr.mxu0 0.0
    %530 = vmatpush1.msra.mxu0 0.0
    %531 = vmatprep.subr.mxu0 0.0
    %532 = vmatpush1.msra.mxu0 0.0
    %533 = vmatprep.subr.mxu0 0.0
    %534 = vmatpush1.msra.mxu0 0.0
    %535 = vmatprep.subr.mxu0 0.0
    %536 = vmatpush1.msra.mxu0 0.0
    %537 = vmatprep.subr.mxu0 0.0
    %538 = vmatpush1.msra.mxu0 0.0
    %539 = vmatprep.subr.mxu0 0.0
    %540 = vmatpush1.msra.mxu0 0.0
    %541 = vmatprep.mubr.f32.mxu0 0.0
    %542 = vmatmul.mubr.f32.gmra.mrb[0].mxu0 %v472
    %v543 = vpop.f32.mrb[0].mxu0
    %v544 = vadd.f32 0.0, %v543
    %v545 = vpop.f32.mrb[0].mxu0
    %546 = vmatprep.mubr.f32.mxu0 0.0
    %547 = vmatmul.mubr.f32.gmra.mrb[0].mxu0 %v475
    %v548 = vpop.f32.mrb[0].mxu0
    %v549 = vadd.f32 0.0, %v548
    %v550 = vpop.f32.mrb[0].mxu0
    %551 = vdwg.mxu0
    %v552 = vld [vmem:[%s1 + $0x80] sm:$0xff]
    %v553 = vld [vmem:[%s1 + $0x90] sm:$0xff]
    %v554 = vld [vmem:[%s1 + $0xa0] sm:$0xff]
    %v555 = vld [vmem:[%s1 + $0xb0] sm:$0xff]
    %556 = vrot.lane.b32.xlu0 %v136, 96
    %v557 = vpop.permute.xlu0 %556
    %558 = vrot.lane.b32.xlu0 %v142, 96
    %v559 = vpop.permute.xlu0 %558
    %560 = vrot.lane.b32.xlu0 %v136, 32
    %v561 = vpop.permute.xlu0 %560
    %562 = vrot.lane.b32.xlu0 %v142, 32
    %v563 = vpop.permute.xlu0 %562
    %v564 = vsel %vm164, %v557, 0
    %v566 = vsel %vm164, %v559, 0
    %v568 = vsel %vm164, %v561, 0
    %v570 = vsel %vm164, %v563, 0
    %572 = vmatprep.subr.mxu0 0.0
    %573 = vmatpush1.xpose.msra.mxu0 %v568
    %574 = vmatprep.subr.mxu0 0.0
    %575 = vmatpush1.xpose.msra.mxu0 %v570
    %576 = vmatprep.subr.mxu0 0.0
    %577 = vmatpush1.xpose.msra.mxu0 0.0
    %578 = vmatprep.subr.mxu0 0.0
    %579 = vmatpush1.xpose.msra.mxu0 0.0
    %580 = vmatprep.subr.mxu0 0.0
    %581 = vmatpush1.xpose.msra.mxu0 0.0
    %582 = vmatprep.subr.mxu0 0.0
    %583 = vmatpush1.xpose.msra.mxu0 0.0
    %584 = vmatprep.subr.mxu0 0.0
    %585 = vmatpush1.xpose.msra.mxu0 0.0
    %586 = vmatprep.subr.mxu0 0.0
    %587 = vmatpush1.xpose.msra.mxu0 0.0
    %588 = vmatprep.subr.mxu0 0.0
    %589 = vmatpush1.xpose.msra.mxu0 0.0
    %590 = vmatprep.subr.mxu0 0.0
    %591 = vmatpush1.xpose.msra.mxu0 0.0
    %592 = vmatprep.subr.mxu0 0.0
    %593 = vmatpush1.xpose.msra.mxu0 0.0
    %594 = vmatprep.subr.mxu0 0.0
    %595 = vmatpush1.xpose.msra.mxu0 0.0
    %596 = vmatprep.subr.mxu0 0.0
    %597 = vmatpush1.xpose.msra.mxu0 0.0
    %598 = vmatprep.subr.mxu0 0.0
    %599 = vmatpush1.xpose.msra.mxu0 0.0
    %600 = vmatprep.subr.mxu0 0.0
    %601 = vmatpush1.xpose.msra.mxu0 0.0
    %602 = vmatprep.subr.mxu0 0.0
    %603 = vmatpush1.xpose.msra.mxu0 0.0
    %604 = vmatprep.subr.mxu0 0.0
    %605 = vmatpush1.xpose.msra.mxu0 0.0
    %606 = vmatprep.subr.mxu0 0.0
    %607 = vmatpush1.xpose.msra.mxu0 0.0
    %608 = vmatprep.subr.mxu0 0.0
    %609 = vmatpush1.xpose.msra.mxu0 0.0
    %610 = vmatprep.subr.mxu0 0.0
    %611 = vmatpush1.xpose.msra.mxu0 0.0
    %612 = vmatprep.subr.mxu0 0.0
    %613 = vmatpush1.xpose.msra.mxu0 0.0
    %614 = vmatprep.subr.mxu0 0.0
    %615 = vmatpush1.xpose.msra.mxu0 0.0
    %616 = vmatprep.subr.mxu0 0.0
    %617 = vmatpush1.xpose.msra.mxu0 0.0
    %618 = vmatprep.subr.mxu0 0.0
    %619 = vmatpush1.xpose.msra.mxu0 0.0
    %620 = vmatprep.subr.mxu0 0.0
    %621 = vmatpush1.xpose.msra.mxu0 0.0
    %622 = vmatprep.subr.mxu0 0.0
    %623 = vmatpush1.xpose.msra.mxu0 0.0
    %624 = vmatprep.subr.mxu0 0.0
    %625 = vmatpush1.xpose.msra.mxu0 0.0
    %626 = vmatprep.subr.mxu0 0.0
    %627 = vmatpush1.xpose.msra.mxu0 0.0
    %628 = vmatprep.subr.mxu0 0.0
    %629 = vmatpush1.xpose.msra.mxu0 0.0
    %630 = vmatprep.subr.mxu0 0.0
    %631 = vmatpush1.xpose.msra.mxu0 0.0
    %632 = vmatprep.subr.mxu0 0.0
    %633 = vmatpush1.xpose.msra.mxu0 0.0
    %634 = vmatprep.subr.mxu0 0.0
    %635 = vmatpush1.xpose.msra.mxu0 0.0
    %636 = vmatprep.mubr.f32.mxu0 0.0
    %637 = vmatmul.mubr.f32.gmra.mrb[0].mxu0 %v564
    %v638 = vpop.f32.mrb[0].mxu0
    %v639 = vadd.f32 0.0, %v638
    %v640 = vpop.f32.mrb[0].mxu0
    %641 = vmatprep.mubr.f32.mxu0 0.0
    %642 = vmatmul.mubr.f32.gmra.mrb[0].mxu0 %v566
    %v643 = vpop.f32.mrb[0].mxu0
    %v644 = vadd.f32 0.0, %v643
    %v645 = vpop.f32.mrb[0].mxu0
    %646 = vdwg.mxu0
    %647 = vrot.lane.b32.xlu0 %v148, 96
    %v648 = vpop.permute.xlu0 %647
    %649 = vrot.lane.b32.xlu0 %v154, 96
    %v650 = vpop.permute.xlu0 %649
    %651 = vrot.lane.b32.xlu0 %v148, 32
    %v652 = vpop.permute.xlu0 %651
    %653 = vrot.lane.b32.xlu0 %v154, 32
    %v654 = vpop.permute.xlu0 %653
    %v655 = vsel %vm164, %v648, 0
    %v657 = vsel %vm164, %v650, 0
    %v659 = vsel %vm164, %v652, 0
    %v661 = vsel %vm164, %v654, 0
    %663 = vmatprep.subr.mxu0 0.0
    %664 = vmatpush1.xpose.msra.mxu0 %v659
    %665 = vmatprep.subr.mxu0 0.0
    %666 = vmatpush1.xpose.msra.mxu0 %v661
    %667 = vmatprep.subr.mxu0 0.0
    %668 = vmatpush1.xpose.msra.mxu0 0.0
    %669 = vmatprep.subr.mxu0 0.0
    %670 = vmatpush1.xpose.msra.mxu0 0.0
    %671 = vmatprep.subr.mxu0 0.0
    %672 = vmatpush1.xpose.msra.mxu0 0.0
    %673 = vmatprep.subr.mxu0 0.0
    %674 = vmatpush1.xpose.msra.mxu0 0.0
    %675 = vmatprep.subr.mxu0 0.0
    %676 = vmatpush1.xpose.msra.mxu0 0.0
    %677 = vmatprep.subr.mxu0 0.0
    %678 = vmatpush1.xpose.msra.mxu0 0.0
    %679 = vmatprep.subr.mxu0 0.0
    %680 = vmatpush1.xpose.msra.mxu0 0.0
    %681 = vmatprep.subr.mxu0 0.0
    %682 = vmatpush1.xpose.msra.mxu0 0.0
    %683 = vmatprep.subr.mxu0 0.0
    %684 = vmatpush1.xpose.msra.mxu0 0.0
    %685 = vmatprep.subr.mxu0 0.0
    %686 = vmatpush1.xpose.msra.mxu0 0.0
    %687 = vmatprep.subr.mxu0 0.0
    %688 = vmatpush1.xpose.msra.mxu0 0.0
    %689 = vmatprep.subr.mxu0 0.0
    %690 = vmatpush1.xpose.msra.mxu0 0.0
    %691 = vmatprep.subr.mxu0 0.0
    %692 = vmatpush1.xpose.msra.mxu0 0.0
    %693 = vmatprep.subr.mxu0 0.0
    %694 = vmatpush1.xpose.msra.mxu0 0.0
    %695 = vmatprep.subr.mxu0 0.0
    %696 = vmatpush1.xpose.msra.mxu0 0.0
    %697 = vmatprep.subr.mxu0 0.0
    %698 = vmatpush1.xpose.msra.mxu0 0.0
    %699 = vmatprep.subr.mxu0 0.0
    %700 = vmatpush1.xpose.msra.mxu0 0.0
    %701 = vmatprep.subr.mxu0 0.0
    %702 = vmatpush1.xpose.msra.mxu0 0.0
    %703 = vmatprep.subr.mxu0 0.0
    %704 = vmatpush1.xpose.msra.mxu0 0.0
    %705 = vmatprep.subr.mxu0 0.0
    %706 = vmatpush1.xpose.msra.mxu0 0.0
    %707 = vmatprep.subr.mxu0 0.0
    %708 = vmatpush1.xpose.msra.mxu0 0.0
    %709 = vmatprep.subr.mxu0 0.0
    %710 = vmatpush1.xpose.msra.mxu0 0.0
    %711 = vmatprep.subr.mxu0 0.0
    %712 = vmatpush1.xpose.msra.mxu0 0.0
    %713 = vmatprep.subr.mxu0 0.0
    %714 = vmatpush1.xpose.msra.mxu0 0.0
    %715 = vmatprep.subr.mxu0 0.0
    %716 = vmatpush1.xpose.msra.mxu0 0.0
    %717 = vmatprep.subr.mxu0 0.0
    %718 = vmatpush1.xpose.msra.mxu0 0.0
    %719 = vmatprep.subr.mxu0 0.0
    %720 = vmatpush1.xpose.msra.mxu0 0.0
    %721 = vmatprep.subr.mxu0 0.0
    %722 = vmatpush1.xpose.msra.mxu0 0.0
    %723 = vmatprep.subr.mxu0 0.0
    %724 = vmatpush1.xpose.msra.mxu0 0.0
    %725 = vmatprep.subr.mxu0 0.0
    %726 = vmatpush1.xpose.msra.mxu0 0.0
    %727 = vmatprep.mubr.f32.mxu0 0.0
    %728 = vmatmul.mubr.f32.gmra.mrb[0].mxu0 %v655
    %v729 = vpop.f32.mrb[0].mxu0
    %v730 = vadd.f32 0.0, %v729
    %v731 = vpop.f32.mrb[0].mxu0
    %732 = vmatprep.mubr.f32.mxu0 0.0
    %733 = vmatmul.mubr.f32.gmra.mrb[0].mxu0 %v657
    %v734 = vpop.f32.mrb[0].mxu0
    %v735 = vadd.f32 0.0, %v734
    %v736 = vpop.f32.mrb[0].mxu0
    %737 = vdwg.mxu0
    %v738 = vmul.f32 %v639, 0.17677669
    %v739 = vmul.f32 %v644, 0.17677669
    %v740 = vmul.f32 %v730, 0.17677669
    %v741 = vmul.f32 %v735, 0.17677669
    %v742 = vadd.f32 %v738, %v26
    %v743 = vadd.f32 %v739, %v27
    %v744 = vadd.f32 %v740, %v26
    %v745 = vadd.f32 %v741, %v27
    %v746 = vsel %vm345, %v742, -inf
    %747 = vmax.xlane.f32.xlu0 %v746
    %v748 = vpop.xlane.xlu0 %747
    %v749 = vsel %vm345, %v743, -inf
    %750 = vmax.xlane.f32.xlu0 %v749
    %v751 = vpop.xlane.xlu0 %750
    %v752 = vsel %vm345, %v744, -inf
    %753 = vmax.xlane.f32.xlu0 %v752
    %v754 = vpop.xlane.xlu0 %753
    %v755 = vsel %vm345, %v745, -inf
    %756 = vmax.xlane.f32.xlu0 %v755
    %v757 = vpop.xlane.xlu0 %756
    %v758 = vsub.f32 %v742, %v748
    %v759 = vsub.f32 %v743, %v751
    %v760 = vsub.f32 %v744, %v754
    %v761 = vsub.f32 %v745, %v757
    %v762 = vmul.f32 %v758, 1.442695
    %v763 = vpow.pop %v762
    %v764 = vmul.f32 %v759, 1.442695
    %v765 = vpow.pop %v764
    %v766 = vmul.f32 %v760, 1.442695
    %v767 = vpow.pop %v766
    %v768 = vmul.f32 %v761, 1.442695
    %v769 = vpow.pop %v768
    %v770 = vsel %vm345, %v763, 0.0
    %771 = vadd.xlane.f32.xlu0 %v770
    %v772 = vpop.xlane.xlu0 %771
    %v773 = vsel %vm345, %v765, 0.0
    %774 = vadd.xlane.f32.xlu0 %v773
    %v775 = vpop.xlane.xlu0 %774
    %v776 = vsel %vm345, %v767, 0.0
    %777 = vadd.xlane.f32.xlu0 %v776
    %v778 = vpop.xlane.xlu0 %777
    %v779 = vsel %vm345, %v769, 0.0
    %780 = vadd.xlane.f32.xlu0 %v779
    %v781 = vpop.xlane.xlu0 %780
    %v782 = vrcp.pop %v772
    %v783 = vrcp.pop %v775
    %v784 = vrcp.pop %v778
    %v785 = vrcp.pop %v781
    %v786 = vmul.f32 %v763, %v782
    %v787 = vmul.f32 %v765, %v783
    %v788 = vmul.f32 %v767, %v784
    %v789 = vmul.f32 %v769, %v785
    %792 = vrot.lane.b32.xlu0 %v138, 96
    %v793 = vpop.permute.xlu0 %792
    %794 = vrot.lane.b32.xlu0 %v144, 96
    %v795 = vpop.permute.xlu0 %794
    %v799 = vsel %vm345, %v786, 0
    %v802 = vsel %vm345, %v787, 0
    %804 = vmatprep.subr.mxu0 0.0
    %805 = vmatpush1.msra.mxu0 %v793
    %806 = vmatprep.subr.mxu0 0.0
    %807 = vmatpush1.msra.mxu0 %v795
    %808 = vmatprep.subr.mxu0 0.0
    %809 = vmatpush1.msra.mxu0 0.0
    %810 = vmatprep.subr.mxu0 0.0
    %811 = vmatpush1.msra.mxu0 0.0
    %812 = vmatprep.subr.mxu0 0.0
    %813 = vmatpush1.msra.mxu0 0.0
    %814 = vmatprep.subr.mxu0 0.0
    %815 = vmatpush1.msra.mxu0 0.0
    %816 = vmatprep.subr.mxu0 0.0
    %817 = vmatpush1.msra.mxu0 0.0
    %818 = vmatprep.subr.mxu0 0.0
    %819 = vmatpush1.msra.mxu0 0.0
    %820 = vmatprep.subr.mxu0 0.0
    %821 = vmatpush1.msra.mxu0 0.0
    %822 = vmatprep.subr.mxu0 0.0
    %823 = vmatpush1.msra.mxu0 0.0
    %824 = vmatprep.subr.mxu0 0.0
    %825 = vmatpush1.msra.mxu0 0.0
    %826 = vmatprep.subr.mxu0 0.0
    %827 = vmatpush1.msra.mxu0 0.0
    %828 = vmatprep.subr.mxu0 0.0
    %829 = vmatpush1.msra.mxu0 0.0
    %830 = vmatprep.subr.mxu0 0.0
    %831 = vmatpush1.msra.mxu0 0.0
    %832 = vmatprep.subr.mxu0 0.0
    %833 = vmatpush1.msra.mxu0 0.0
    %834 = vmatprep.subr.mxu0 0.0
    %835 = vmatpush1.msra.mxu0 0.0
    %836 = vmatprep.subr.mxu0 0.0
    %837 = vmatpush1.msra.mxu0 0.0
    %838 = vmatprep.subr.mxu0 0.0
    %839 = vmatpush1.msra.mxu0 0.0
    %840 = vmatprep.subr.mxu0 0.0
    %841 = vmatpush1.msra.mxu0 0.0
    %842 = vmatprep.subr.mxu0 0.0
    %843 = vmatpush1.msra.mxu0 0.0
    %844 = vmatprep.subr.mxu0 0.0
    %845 = vmatpush1.msra.mxu0 0.0
    %846 = vmatprep.subr.mxu0 0.0
    %847 = vmatpush1.msra.mxu0 0.0
    %848 = vmatprep.subr.mxu0 0.0
    %849 = vmatpush1.msra.mxu0 0.0
    %850 = vmatprep.subr.mxu0 0.0
    %851 = vmatpush1.msra.mxu0 0.0
    %852 = vmatprep.subr.mxu0 0.0
    %853 = vmatpush1.msra.mxu0 0.0
    %854 = vmatprep.subr.mxu0 0.0
    %855 = vmatpush1.msra.mxu0 0.0
    %856 = vmatprep.subr.mxu0 0.0
    %857 = vmatpush1.msra.mxu0 0.0
    %858 = vmatprep.subr.mxu0 0.0
    %859 = vmatpush1.msra.mxu0 0.0
    %860 = vmatprep.subr.mxu0 0.0
    %861 = vmatpush1.msra.mxu0 0.0
    %862 = vmatprep.subr.mxu0 0.0
    %863 = vmatpush1.msra.mxu0 0.0
    %864 = vmatprep.subr.mxu0 0.0
    %865 = vmatpush1.msra.mxu0 0.0
    %866 = vmatprep.subr.mxu0 0.0
    %867 = vmatpush1.msra.mxu0 0.0
    %868 = vmatprep.mubr.f32.mxu0 0.0
    %869 = vmatmul.mubr.f32.gmra.mrb[0].mxu0 %v799
    %v870 = vpop.f32.mrb[0].mxu0
    %v871 = vadd.f32 0.0, %v870
    %v872 = vpop.f32.mrb[0].mxu0
    %873 = vmatprep.mubr.f32.mxu0 0.0
    %874 = vmatmul.mubr.f32.gmra.mrb[0].mxu0 %v802
    %v875 = vpop.f32.mrb[0].mxu0
    %v876 = vadd.f32 0.0, %v875
    %v877 = vpop.f32.mrb[0].mxu0
    %878 = vdwg.mxu0
    %881 = vrot.lane.b32.xlu0 %v150, 96
    %v882 = vpop.permute.xlu0 %881
    %883 = vrot.lane.b32.xlu0 %v156, 96
    %v884 = vpop.permute.xlu0 %883
    %v888 = vsel %vm345, %v788, 0
    %v891 = vsel %vm345, %v789, 0
    %893 = vmatprep.subr.mxu0 0.0
    %894 = vmatpush1.msra.mxu0 %v882
    %895 = vmatprep.subr.mxu0 0.0
    %896 = vmatpush1.msra.mxu0 %v884
    %897 = vmatprep.subr.mxu0 0.0
    %898 = vmatpush1.msra.mxu0 0.0
    %899 = vmatprep.subr.mxu0 0.0
    %900 = vmatpush1.msra.mxu0 0.0
    %901 = vmatprep.subr.mxu0 0.0
    %902 = vmatpush1.msra.mxu0 0.0
    %903 = vmatprep.subr.mxu0 0.0
    %904 = vmatpush1.msra.mxu0 0.0
    %905 = vmatprep.subr.mxu0 0.0
    %906 = vmatpush1.msra.mxu0 0.0
    %907 = vmatprep.subr.mxu0 0.0
    %908 = vmatpush1.msra.mxu0 0.0
    %909 = vmatprep.subr.mxu0 0.0
    %910 = vmatpush1.msra.mxu0 0.0
    %911 = vmatprep.subr.mxu0 0.0
    %912 = vmatpush1.msra.mxu0 0.0
    %913 = vmatprep.subr.mxu0 0.0
    %914 = vmatpush1.msra.mxu0 0.0
    %915 = vmatprep.subr.mxu0 0.0
    %916 = vmatpush1.msra.mxu0 0.0
    %917 = vmatprep.subr.mxu0 0.0
    %918 = vmatpush1.msra.mxu0 0.0
    %919 = vmatprep.subr.mxu0 0.0
    %920 = vmatpush1.msra.mxu0 0.0
    %921 = vmatprep.subr.mxu0 0.0
    %922 = vmatpush1.msra.mxu0 0.0
    %923 = vmatprep.subr.mxu0 0.0
    %924 = vmatpush1.msra.mxu0 0.0
    %925 = vmatprep.subr.mxu0 0.0
    %926 = vmatpush1.msra.mxu0 0.0
    %927 = vmatprep.subr.mxu0 0.0
    %928 = vmatpush1.msra.mxu0 0.0
    %929 = vmatprep.subr.mxu0 0.0
    %930 = vmatpush1.msra.mxu0 0.0
    %931 = vmatprep.subr.mxu0 0.0
    %932 = vmatpush1.msra.mxu0 0.0
    %933 = vmatprep.subr.mxu0 0.0
    %934 = vmatpush1.msra.mxu0 0.0
    %935 = vmatprep.subr.mxu0 0.0
    %936 = vmatpush1.msra.mxu0 0.0
    %937 = vmatprep.subr.mxu0 0.0
    %938 = vmatpush1.msra.mxu0 0.0
    %939 = vmatprep.subr.mxu0 0.0
    %940 = vmatpush1.msra.mxu0 0.0
    %941 = vmatprep.subr.mxu0 0.0
    %942 = vmatpush1.msra.mxu0 0.0
    %943 = vmatprep.subr.mxu0 0.0
    %944 = vmatpush1.msra.mxu0 0.0
    %945 = vmatprep.subr.mxu0 0.0
    %946 = vmatpush1.msra.mxu0 0.0
    %947 = vmatprep.subr.mxu0 0.0
    %948 = vmatpush1.msra.mxu0 0.0
    %949 = vmatprep.subr.mxu0 0.0
    %950 = vmatpush1.msra.mxu0 0.0
    %951 = vmatprep.subr.mxu0 0.0
    %952 = vmatpush1.msra.mxu0 0.0
    %953 = vmatprep.subr.mxu0 0.0
    %954 = vmatpush1.msra.mxu0 0.0
    %955 = vmatprep.subr.mxu0 0.0
    %956 = vmatpush1.msra.mxu0 0.0
    %957 = vmatprep.mubr.f32.mxu0 0.0
    %958 = vmatmul.mubr.f32.gmra.mrb[0].mxu0 %v888
    %v959 = vpop.f32.mrb[0].mxu0
    %v960 = vadd.f32 0.0, %v959
    %v961 = vpop.f32.mrb[0].mxu0
    %962 = vmatprep.mubr.f32.mxu0 0.0
    %963 = vmatmul.mubr.f32.gmra.mrb[0].mxu0 %v891
    %v964 = vpop.f32.mrb[0].mxu0
    %v965 = vadd.f32 0.0, %v964
    %v966 = vpop.f32.mrb[0].mxu0
    %967 = vdwg.mxu0
    %v968 = vld [vmem:[%s1 + $0xc0] sm:$0xff]
    %v969 = vld [vmem:[%s1 + $0xd0] sm:$0xff]
    %v970 = vld [vmem:[%s1 + $0xe0] sm:$0xff]
    %v971 = vld [vmem:[%s1 + $0xf0] sm:$0xff]
    %v973 = vsel %vm164, %v871, 0
    %v976 = vsel %vm164, %v876, 0
    %v979 = vsel %vm164, %v960, 0
    %v982 = vsel %vm164, %v965, 0
    %984 = vmatprep.subr.mxu0 0.0
    %985 = vmatpush1.msra.mxu0 %v968
    %986 = vmatprep.subr.mxu0 0.0
    %987 = vmatpush1.msra.mxu0 %v969
    %988 = vmatprep.subr.mxu0 0.0
    %989 = vmatpush1.msra.mxu0 %v970
    %990 = vmatprep.subr.mxu0 0.0
    %991 = vmatpush1.msra.mxu0 %v971
    %992 = vmatprep.subr.mxu0 0.0
    %993 = vmatpush1.msra.mxu0 0.0
    %994 = vmatprep.subr.mxu0 0.0
    %995 = vmatpush1.msra.mxu0 0.0
    %996 = vmatprep.subr.mxu0 0.0
    %997 = vmatpush1.msra.mxu0 0.0
    %998 = vmatprep.subr.mxu0 0.0
    %999 = vmatpush1.msra.mxu0 0.0
    %1000 = vmatprep.subr.mxu0 0.0
    %1001 = vmatpush1.msra.mxu0 0.0
    %1002 = vmatprep.subr.mxu0 0.0
    %1003 = vmatpush1.msra.mxu0 0.0
    %1004 = vmatprep.subr.mxu0 0.0
    %1005 = vmatpush1.msra.mxu0 0.0
    %1006 = vmatprep.subr.mxu0 0.0
    %1007 = vmatpush1.msra.mxu0 0.0
    %1008 = vmatprep.subr.mxu0 0.0
    %1009 = vmatpush1.msra.mxu0 0.0
    %1010 = vmatprep.subr.mxu0 0.0
    %1011 = vmatpush1.msra.mxu0 0.0
    %1012 = vmatprep.subr.mxu0 0.0
    %1013 = vmatpush1.msra.mxu0 0.0
    %1014 = vmatprep.subr.mxu0 0.0
    %1015 = vmatpush1.msra.mxu0 0.0
    %1016 = vmatprep.subr.mxu0 0.0
    %1017 = vmatpush1.msra.mxu0 0.0
    %1018 = vmatprep.subr.mxu0 0.0
    %1019 = vmatpush1.msra.mxu0 0.0
    %1020 = vmatprep.subr.mxu0 0.0
    %1021 = vmatpush1.msra.mxu0 0.0
    %1022 = vmatprep.subr.mxu0 0.0
    %1023 = vmatpush1.msra.mxu0 0.0
    %1024 = vmatprep.subr.mxu0 0.0
    %1025 = vmatpush1.msra.mxu0 0.0
    %1026 = vmatprep.subr.mxu0 0.0
    %1027 = vmatpush1.msra.mxu0 0.0
    %1028 = vmatprep.subr.mxu0 0.0
    %1029 = vmatpush1.msra.mxu0 0.0
    %1030 = vmatprep.subr.mxu0 0.0
    %1031 = vmatpush1.msra.mxu0 0.0
    %1032 = vmatprep.subr.mxu0 0.0
    %1033 = vmatpush1.msra.mxu0 0.0
    %1034 = vmatprep.subr.mxu0 0.0
    %1035 = vmatpush1.msra.mxu0 0.0
    %1036 = vmatprep.subr.mxu0 0.0
    %1037 = vmatpush1.msra.mxu0 0.0
    %1038 = vmatprep.subr.mxu0 0.0
    %1039 = vmatpush1.msra.mxu0 0.0
    %1040 = vmatprep.subr.mxu0 0.0
    %1041 = vmatpush1.msra.mxu0 0.0
    %1042 = vmatprep.subr.mxu0 0.0
    %1043 = vmatpush1.msra.mxu0 0.0
    %1044 = vmatprep.subr.mxu0 0.0
    %1045 = vmatpush1.msra.mxu0 0.0
    %1046 = vmatprep.subr.mxu0 0.0
    %1047 = vmatpush1.msra.mxu0 0.0
    %1048 = vmatprep.mubr.f32.mxu0 0.0
    %1049 = vmatmul.mubr.f32.gmra.mrb[0].mxu0 %v973
    %v1050 = vpop.f32.mrb[0].mxu0
    %v1051 = vadd.f32 0.0, %v1050
    %v1052 = vpop.f32.mrb[0].mxu0
    %1053 = vmatprep.mubr.f32.mxu0 0.0
    %1054 = vmatmul.mubr.f32.gmra.mrb[0].mxu0 %v976
    %v1055 = vpop.f32.mrb[0].mxu0
    %v1056 = vadd.f32 0.0, %v1055
    %v1057 = vpop.f32.mrb[0].mxu0
    %1058 = vmatprep.mubr.f32.mxu0 0.0
    %1059 = vmatmul.mubr.f32.gmra.mrb[0].mxu0 %v979
    %v1060 = vpop.f32.mrb[0].mxu0
    %v1061 = vadd.f32 0.0, %v1060
    %v1062 = vpop.f32.mrb[0].mxu0
    %1063 = vmatprep.mubr.f32.mxu0 0.0
    %1064 = vmatmul.mubr.f32.gmra.mrb[0].mxu0 %v982
    %v1065 = vpop.f32.mrb[0].mxu0
    %v1066 = vadd.f32 0.0, %v1065
    %v1067 = vpop.f32.mrb[0].mxu0
    %1068 = vdwg.mxu0
    %v1070 = vsel %vm164, %v463, 0
    %v1073 = vsel %vm164, %v468, 0
    %v1076 = vsel %vm164, %v544, 0
    %v1079 = vsel %vm164, %v549, 0
    %1081 = vmatprep.subr.mxu0 0.0
    %1082 = vmatpush1.msra.mxu0 %v552
    %1083 = vmatprep.subr.mxu0 0.0
    %1084 = vmatpush1.msra.mxu0 %v553
    %1085 = vmatprep.subr.mxu0 0.0
    %1086 = vmatpush1.msra.mxu0 %v554
    %1087 = vmatprep.subr.mxu0 0.0
    %1088 = vmatpush1.msra.mxu0 %v555
    %1089 = vmatprep.subr.mxu0 0.0
    %1090 = vmatpush1.msra.mxu0 0.0
    %1091 = vmatprep.subr.mxu0 0.0
    %1092 = vmatpush1.msra.mxu0 0.0
    %1093 = vmatprep.subr.mxu0 0.0
    %1094 = vmatpush1.msra.mxu0 0.0
    %1095 = vmatprep.subr.mxu0 0.0
    %1096 = vmatpush1.msra.mxu0 0.0
    %1097 = vmatprep.subr.mxu0 0.0
    %1098 = vmatpush1.msra.mxu0 0.0
    %1099 = vmatprep.subr.mxu0 0.0
    %1100 = vmatpush1.msra.mxu0 0.0
    %1101 = vmatprep.subr.mxu0 0.0
    %1102 = vmatpush1.msra.mxu0 0.0
    %1103 = vmatprep.subr.mxu0 0.0
    %1104 = vmatpush1.msra.mxu0 0.0
    %1105 = vmatprep.subr.mxu0 0.0
    %1106 = vmatpush1.msra.mxu0 0.0
    %1107 = vmatprep.subr.mxu0 0.0
    %1108 = vmatpush1.msra.mxu0 0.0
    %1109 = vmatprep.subr.mxu0 0.0
    %1110 = vmatpush1.msra.mxu0 0.0
    %1111 = vmatprep.subr.mxu0 0.0
    %1112 = vmatpush1.msra.mxu0 0.0
    %1113 = vmatprep.subr.mxu0 0.0
    %1114 = vmatpush1.msra.mxu0 0.0
    %1115 = vmatprep.subr.mxu0 0.0
    %1116 = vmatpush1.msra.mxu0 0.0
    %1117 = vmatprep.subr.mxu0 0.0
    %1118 = vmatpush1.msra.mxu0 0.0
    %1119 = vmatprep.subr.mxu0 0.0
    %1120 = vmatpush1.msra.mxu0 0.0
    %1121 = vmatprep.subr.mxu0 0.0
    %1122 = vmatpush1.msra.mxu0 0.0
    %1123 = vmatprep.subr.mxu0 0.0
    %1124 = vmatpush1.msra.mxu0 0.0
    %1125 = vmatprep.subr.mxu0 0.0
    %1126 = vmatpush1.msra.mxu0 0.0
    %1127 = vmatprep.subr.mxu0 0.0
    %1128 = vmatpush1.msra.mxu0 0.0
    %1129 = vmatprep.subr.mxu0 0.0
    %1130 = vmatpush1.msra.mxu0 0.0
    %1131 = vmatprep.subr.mxu0 0.0
    %1132 = vmatpush1.msra.mxu0 0.0
    %1133 = vmatprep.subr.mxu0 0.0
    %1134 = vmatpush1.msra.mxu0 0.0
    %1135 = vmatprep.subr.mxu0 0.0
    %1136 = vmatpush1.msra.mxu0 0.0
    %1137 = vmatprep.subr.mxu0 0.0
    %1138 = vmatpush1.msra.mxu0 0.0
    %1139 = vmatprep.subr.mxu0 0.0
    %1140 = vmatpush1.msra.mxu0 0.0
    %1141 = vmatprep.subr.mxu0 0.0
    %1142 = vmatpush1.msra.mxu0 0.0
    %1143 = vmatprep.subr.mxu0 0.0
    %1144 = vmatpush1.msra.mxu0 0.0
    %1145 = vmatprep.mubr.f32.mxu0 0.0
    %1146 = vmatmul.mubr.f32.gmra.mrb[0].mxu0 %v1070
    %v1147 = vpop.f32.mrb[0].mxu0
    %v1148 = vadd.f32 %v1051, %v1147
    %v1149 = vpop.f32.mrb[0].mxu0
    %1150 = vmatprep.mubr.f32.mxu0 0.0
    %1151 = vmatmul.mubr.f32.gmra.mrb[0].mxu0 %v1073
    %v1152 = vpop.f32.mrb[0].mxu0
    %v1153 = vadd.f32 %v1056, %v1152
    %v1154 = vpop.f32.mrb[0].mxu0
    %1155 = vmatprep.mubr.f32.mxu0 0.0
    %1156 = vmatmul.mubr.f32.gmra.mrb[0].mxu0 %v1076
    %v1157 = vpop.f32.mrb[0].mxu0
    %v1158 = vadd.f32 %v1061, %v1157
    %v1159 = vpop.f32.mrb[0].mxu0
    %1160 = vmatprep.mubr.f32.mxu0 0.0
    %1161 = vmatmul.mubr.f32.gmra.mrb[0].mxu0 %v1079
    %v1162 = vpop.f32.mrb[0].mxu0
    %v1163 = vadd.f32 %v1066, %v1162
    %v1164 = vpop.f32.mrb[0].mxu0
    %1165 = vdwg.mxu0
    %v1166 = vld [vmem:[%s2 + $0x10] ss:$0 sm:$0xff]
    %v1167 = vadd.f32 %v1148, %v1166
    %v1168 = vadd.f32 %v1153, %v1166
    %v1169 = vadd.f32 %v1158, %v1166
    %v1170 = vadd.f32 %v1163, %v1166
    %v1171 = vadd.f32 %v15, %v1167
    %v1172 = vadd.f32 %v16, %v1168
    %v1173 = vadd.f32 %v17, %v1169
    %v1174 = vadd.f32 %v18, %v1170
    %v1175 = vld [vmem:[%s2 + $0x20] ss:$0 sm:$0xff]
    %v1176 = vld [vmem:[%s2 + $0x30] ss:$0 sm:$0xff]
    %v1177 = vsel %vm56, %v1171, 0.0
    %1178 = vadd.xlane.f32.xlu0 %v1177
    %v1179 = vpop.xlane.xlu0 %1178
    %v1180 = vsel %vm56, %v1172, 0.0
    %1181 = vadd.xlane.f32.xlu0 %v1180
    %v1182 = vpop.xlane.xlu0 %1181
    %v1183 = vsel %vm56, %v1173, 0.0
    %1184 = vadd.xlane.f32.xlu0 %v1183
    %v1185 = vpop.xlane.xlu0 %1184
    %v1186 = vsel %vm56, %v1174, 0.0
    %1187 = vadd.xlane.f32.xlu0 %v1186
    %v1188 = vpop.xlane.xlu0 %1187
    %v1189 = vrcp.pop 64.0
    %v1190 = vmul.f32 %v1179, %v1189
    %v1191 = vmul.f32 %v1182, %v1189
    %v1192 = vmul.f32 %v1185, %v1189
    %v1193 = vmul.f32 %v1188, %v1189
    %v1194 = vsub.f32 %v1171, %v1190
    %v1195 = vsub.f32 %v1172, %v1191
    %v1196 = vsub.f32 %v1173, %v1192
    %v1197 = vsub.f32 %v1174, %v1193
    %v1198 = vmul.f32 %v1194, %v1194
    %v1199 = vmul.f32 %v1195, %v1195
    %v1200 = vmul.f32 %v1196, %v1196
    %v1201 = vmul.f32 %v1197, %v1197
    %v1202 = vsel %vm56, %v1198, 0.0
    %1203 = vadd.xlane.f32.xlu0 %v1202
    %v1204 = vpop.xlane.xlu0 %1203
    %v1205 = vsel %vm56, %v1199, 0.0
    %1206 = vadd.xlane.f32.xlu0 %v1205
    %v1207 = vpop.xlane.xlu0 %1206
    %v1208 = vsel %vm56, %v1200, 0.0
    %1209 = vadd.xlane.f32.xlu0 %v1208
    %v1210 = vpop.xlane.xlu0 %1209
    %v1211 = vsel %vm56, %v1201, 0.0
    %1212 = vadd.xlane.f32.xlu0 %v1211
    %v1213 = vpop.xlane.xlu0 %1212
    %v1214 = vmul.f32 %v1204, %v1189
    %v1215 = vmul.f32 %v1207, %v1189
    %v1216 = vmul.f32 %v1210, %v1189
    %v1217 = vmul.f32 %v1213, %v1189
    %v1218 = vadd.f32 %v1214, 1e-05
    %v1219 = vadd.f32 %v1215, 1e-05
    %v1220 = vadd.f32 %v1216, 1e-05
    %v1221 = vadd.f32 %v1217, 1e-05
    %v1222 = vrsqrt.pop %v1218
    %v1223 = vrsqrt.pop %v1219
    %v1224 = vrsqrt.pop %v1220
    %v1225 = vrsqrt.pop %v1221
    %v1226 = vmul.f32 %v1194, %v1222
    %v1227 = vmul.f32 %v1195, %v1223
    %v1228 = vmul.f32 %v1196, %v1224
    %v1229 = vmul.f32 %v1197, %v1225
    %v1230 = vmul.f32 %v1226, %v1175
    %v1231 = vmul.f32 %v1227, %v1175
    %v1232 = vmul.f32 %v1228, %v1175
    %v1233 = vmul.f32 %v1229, %v1175
    %v1234 = vadd.f32 %v1230, %v1176
    %v1235 = vadd.f32 %v1231, %v1176
    %v1236 = vadd.f32 %v1232, %v1176
    %v1237 = vadd.f32 %v1233, %v1176
    %v1238 = vld [vmem:[%s1 + $0x100] sm:$0xff]
    %v1239 = vld [vmem:[%s1 + $0x108] sm:$0xff]
    %v1240 = vld [vmem:[%s1 + $0x110] sm:$0xff]
    %v1241 = vld [vmem:[%s1 + $0x118] sm:$0xff]
    %v1242 = vld [vmem:[%s1 + $0x120] sm:$0xff]
    %v1243 = vld [vmem:[%s1 + $0x128] sm:$0xff]
    %v1244 = vld [vmem:[%s1 + $0x130] sm:$0xff]
    %v1245 = vld [vmem:[%s1 + $0x138] sm:$0xff]
    %v1246 = vld [vmem:[%s1 + $0x140] sm:$0xff]
    %v1247 = vld [vmem:[%s1 + $0x148] sm:$0xff]
    %v1248 = vld [vmem:[%s1 + $0x150] sm:$0xff]
    %v1249 = vld [vmem:[%s1 + $0x158] sm:$0xff]
    %v1250 = vld [vmem:[%s1 + $0x160] sm:$0xff]
    %v1251 = vld [vmem:[%s1 + $0x168] sm:$0xff]
    %v1252 = vld [vmem:[%s1 + $0x170] sm:$0xff]
    %v1253 = vld [vmem:[%s1 + $0x178] sm:$0xff]
    %v1254 = vld [vmem:[%s1 + $0x180] sm:$0xff]
    %v1255 = vld [vmem:[%s1 + $0x190] sm:$0xff]
    %v1256 = vld [vmem:[%s1 + $0x1a0] sm:$0xff]
    %v1257 = vld [vmem:[%s1 + $0x1b0] sm:$0xff]
    %v1258 = vld [vmem:[%s1 + $0x1c0] sm:$0xff]
    %v1259 = vld [vmem:[%s1 + $0x1d0] sm:$0xff]
    %v1260 = vld [vmem:[%s1 + $0x1e0] sm:$0xff]
    %v1261 = vld [vmem:[%s1 + $0x1f0] sm:$0xff]
    %v1262 = vld [vmem:[%s1 + $0x200] sm:$0xff]
    %v1263 = vld [vmem:[%s1 + $0x210] sm:$0xff]
    %v1264 = vld [vmem:[%s1 + $0x220] sm:$0xff]
    %v1265 = vld [vmem:[%s1 + $0x230] sm:$0xff]
    %v1266 = vld [vmem:[%s1 + $0x240] sm:$0xff]
    %v1267 = vld [vmem:[%s1 + $0x250] sm:$0xff]
    %v1268 = vld [vmem:[%s1 + $0x260] sm:$0xff]
    %v1269 = vld [vmem:[%s1 + $0x270] sm:$0xff]
    %v1270 = vld [vmem:[%s1 + $0x280] sm:$0xff]
    %v1271 = vld [vmem:[%s1 + $0x290] sm:$0xff]
    %v1272 = vld [vmem:[%s1 + $0x2a0] sm:$0xff]
    %v1273 = vld [vmem:[%s1 + $0x2b0] sm:$0xff]
    %v1274 = vld [vmem:[%s1 + $0x2c0] sm:$0xff]
    %v1275 = vld [vmem:[%s1 + $0x2d0] sm:$0xff]
    %v1276 = vld [vmem:[%s1 + $0x2e0] sm:$0xff]
    %v1277 = vld [vmem:[%s1 + $0x2f0] sm:$0xff]
    %v1278 = vld [vmem:[%s1 + $0x300] sm:$0xff]
    %v1279 = vld [vmem:[%s1 + $0x310] sm:$0xff]
    %v1280 = vld [vmem:[%s1 + $0x320] sm:$0xff]
    %v1281 = vld [vmem:[%s1 + $0x330] sm:$0xff]
    %v1282 = vld [vmem:[%s1 + $0x340] sm:$0xff]
    %v1283 = vld [vmem:[%s1 + $0x350] sm:$0xff]
    %v1284 = vld [vmem:[%s1 + $0x360] sm:$0xff]
    %v1285 = vld [vmem:[%s1 + $0x370] sm:$0xff]
    %s1286 = scalar_lea.vmem %s2, 64
    %v1287 = vld [vmem:[%s1286] ss:$8 sm:$0x3]
    %v1289 = vlaneseq
    %v1290 = vshrl.u32 %v1289, 7
    %v1291 = vsub.s32 0, %v1290
    %v1292 = vrot.slane %v1287, %v1291
    %v1293 = vlaneseq
    %v1294 = vshrl.u32 %v1293, 7
    %v1295 = vsub.s32 1, %v1294
    %v1296 = vrot.slane %v1287, %v1295
    %v1300 = vsel %vm56, %v1234, 0
    %v1303 = vsel %vm56, %v1235, 0
    %v1306 = vsel %vm56, %v1236, 0
    %v1309 = vsel %vm56, %v1237, 0
    %1311 = vmatprep.subr.mxu0 %v1239
    %1312 = vmatpush1.msra.mxu0 %v1238
    %1313 = vmatprep.subr.mxu0 %v1241
    %1314 = vmatpush1.msra.mxu0 %v1240
    %1315 = vmatprep.subr.mxu0 %v1243
    %1316 = vmatpush1.msra.mxu0 %v1242
    %1317 = vmatprep.subr.mxu0 %v1245
    %1318 = vmatpush1.msra.mxu0 %v1244
    %1319 = vmatprep.subr.mxu0 %v1247
    %1320 = vmatpush1.msra.mxu0 %v1246
    %1321 = vmatprep.subr.mxu0 %v1249
    %1322 = vmatpush1.msra.mxu0 %v1248
    %1323 = vmatprep.subr.mxu0 %v1251
    %1324 = vmatpush1.msra.mxu0 %v1250
    %1325 = vmatprep.subr.mxu0 %v1253
    %1326 = vmatpush1.msra.mxu0 %v1252
    %1327 = vmatprep.subr.mxu0 0.0
    %1328 = vmatpush1.msra.mxu0 0.0
    %1329 = vmatprep.subr.mxu0 0.0
    %1330 = vmatpush1.msra.mxu0 0.0
    %1331 = vmatprep.subr.mxu0 0.0
    %1332 = vmatpush1.msra.mxu0 0.0
    %1333 = vmatprep.subr.mxu0 0.0
    %1334 = vmatpush1.msra.mxu0 0.0
    %1335 = vmatprep.subr.mxu0 0.0
    %1336 = vmatpush1.msra.mxu0 0.0
    %1337 = vmatprep.subr.mxu0 0.0
    %1338 = vmatpush1.msra.mxu0 0.0
    %1339 = vmatprep.subr.mxu0 0.0
    %1340 = vmatpush1.msra.mxu0 0.0
    %1341 = vmatprep.subr.mxu0 0.0
    %1342 = vmatpush1.msra.mxu0 0.0
    %1343 = vmatprep.subr.mxu0 0.0
    %1344 = vmatpush1.msra.mxu0 0.0
    %1345 = vmatprep.subr.mxu0 0.0
    %1346 = vmatpush1.msra.mxu0 0.0
    %1347 = vmatprep.subr.mxu0 0.0
    %1348 = vmatpush1.msra.mxu0 0.0
    %1349 = vmatprep.subr.mxu0 0.0
    %1350 = vmatpush1.msra.mxu0 0.0
    %1351 = vmatprep.subr.mxu0 0.0
    %1352 = vmatpush1.msra.mxu0 0.0
    %1353 = vmatprep.subr.mxu0 0.0
    %1354 = vmatpush1.msra.mxu0 0.0
    %1355 = vmatprep.subr.mxu0 0.0
    %1356 = vmatpush1.msra.mxu0 0.0
    %1357 = vmatprep.subr.mxu0 0.0
    %1358 = vmatpush1.msra.mxu0 0.0
    %1359 = vmatprep.subr.mxu0 0.0
    %1360 = vmatpush1.msra.mxu0 0.0
    %1361 = vmatprep.subr.mxu0 0.0
    %1362 = vmatpush1.msra.mxu0 0.0
    %1363 = vmatprep.subr.mxu0 0.0
    %1364 = vmatpush1.msra.mxu0 0.0
    %1365 = vmatprep.subr.mxu0 0.0
    %1366 = vmatpush1.msra.mxu0 0.0
    %1367 = vmatprep.subr.mxu0 0.0
    %1368 = vmatpush1.msra.mxu0 0.0
    %1369 = vmatprep.subr.mxu0 0.0
    %1370 = vmatpush1.msra.mxu0 0.0
    %1371 = vmatprep.subr.mxu0 0.0
    %1372 = vmatpush1.msra.mxu0 0.0
    %1373 = vmatprep.subr.mxu0 0.0
    %1374 = vmatpush1.msra.mxu0 0.0
    %1375 = vmatprep.mubr.f32.mxu0 0.0
    %1376 = vmatmul.mubr.f32.gmra.mrb[0].mxu0 %v1300
    %v1377 = vpop.f32.mrb[0].mxu0
    %v1378 = vadd.f32 %v1292, %v1377
    %v1379 = vpop.f32.mrb[0].mxu0
    %v1380 = vadd.f32 %v1296, %v1379
    %1381 = vmatprep.mubr.f32.mxu0 0.0
    %1382 = vmatmul.mubr.f32.gmra.mrb[0].mxu0 %v1303
    %v1383 = vpop.f32.mrb[0].mxu0
    %v1384 = vadd.f32 %v1292, %v1383
    %v1385 = vpop.f32.mrb[0].mxu0
    %v1386 = vadd.f32 %v1296, %v1385
    %1387 = vmatprep.mubr.f32.mxu0 0.0
    %1388 = vmatmul.mubr.f32.gmra.mrb[0].mxu0 %v1306
    %v1389 = vpop.f32.mrb[0].mxu0
    %v1390 = vadd.f32 %v1292, %v1389
    %v1391 = vpop.f32.mrb[0].mxu0
    %v1392 = vadd.f32 %v1296, %v1391
    %1393 = vmatprep.mubr.f32.mxu0 0.0
    %1394 = vmatmul.mubr.f32.gmra.mrb[0].mxu0 %v1309
    %v1395 = vpop.f32.mrb[0].mxu0
    %v1396 = vadd.f32 %v1292, %v1395
    %v1397 = vpop.f32.mrb[0].mxu0
    %v1398 = vadd.f32 %v1296, %v1397
    %1399 = vdwg.mxu0
    %v1400 = vmax.f32 %v1378, 0.0
    %v1401 = vmax.f32 %v1380, 0.0
    %v1402 = vmax.f32 %v1384, 0.0
    %v1403 = vmax.f32 %v1386, 0.0
    %v1404 = vmax.f32 %v1390, 0.0
    %v1405 = vmax.f32 %v1392, 0.0
    %v1406 = vmax.f32 %v1396, 0.0
    %v1407 = vmax.f32 %v1398, 0.0
    %v1408 = vld [vmem:[%s2 + $0x50] ss:$0 sm:$0xff]
    %1409 = vmatprep.subr.mxu0 0.0
    %1410 = vmatpush1.msra.mxu0 %v1254
    %1411 = vmatprep.subr.mxu0 0.0
    %1412 = vmatpush1.msra.mxu0 %v1255
    %1413 = vmatprep.subr.mxu0 0.0
    %1414 = vmatpush1.msra.mxu0 %v1256
    %1415 = vmatprep.subr.mxu0 0.0
    %1416 = vmatpush1.msra.mxu0 %v1257
    %1417 = vmatprep.subr.mxu0 0.0
    %1418 = vmatpush1.msra.mxu0 %v1258
    %1419 = vmatprep.subr.mxu0 0.0
    %1420 = vmatpush1.msra.mxu0 %v1259
    %1421 = vmatprep.subr.mxu0 0.0
    %1422 = vmatpush1.msra.mxu0 %v1260
    %1423 = vmatprep.subr.mxu0 0.0
    %1424 = vmatpush1.msra.mxu0 %v1261
    %1425 = vmatprep.subr.mxu0 0.0
    %1426 = vmatpush1.msra.mxu0 %v1262
    %1427 = vmatprep.subr.mxu0 0.0
    %1428 = vmatpush1.msra.mxu0 %v1263
    %1429 = vmatprep.subr.mxu0 0.0
    %1430 = vmatpush1.msra.mxu0 %v1264
    %1431 = vmatprep.subr.mxu0 0.0
    %1432 = vmatpush1.msra.mxu0 %v1265
    %1433 = vmatprep.subr.mxu0 0.0
    %1434 = vmatpush1.msra.mxu0 %v1266
    %1435 = vmatprep.subr.mxu0 0.0
    %1436 = vmatpush1.msra.mxu0 %v1267
    %1437 = vmatprep.subr.mxu0 0.0
    %1438 = vmatpush1.msra.mxu0 %v1268
    %1439 = vmatprep.subr.mxu0 0.0
    %1440 = vmatpush1.msra.mxu0 %v1269
    %1441 = vmatprep.subr.mxu0 0.0
    %1442 = vmatpush1.msra.mxu0 %v1270
    %1443 = vmatprep.subr.mxu0 0.0
    %1444 = vmatpush1.msra.mxu0 %v1271
    %1445 = vmatprep.subr.mxu0 0.0
    %1446 = vmatpush1.msra.mxu0 %v1272
    %1447 = vmatprep.subr.mxu0 0.0
    %1448 = vmatpush1.msra.mxu0 %v1273
    %1449 = vmatprep.subr.mxu0 0.0
    %1450 = vmatpush1.msra.mxu0 %v1274
    %1451 = vmatprep.subr.mxu0 0.0
    %1452 = vmatpush1.msra.mxu0 %v1275
    %1453 = vmatprep.subr.mxu0 0.0
    %1454 = vmatpush1.msra.mxu0 %v1276
    %1455 = vmatprep.subr.mxu0 0.0
    %1456 = vmatpush1.msra.mxu0 %v1277
    %1457 = vmatprep.subr.mxu0 0.0
    %1458 = vmatpush1.msra.mxu0 %v1278
    %1459 = vmatprep.subr.mxu0 0.0
    %1460 = vmatpush1.msra.mxu0 %v1279
    %1461 = vmatprep.subr.mxu0 0.0
    %1462 = vmatpush1.msra.mxu0 %v1280
    %1463 = vmatprep.subr.mxu0 0.0
    %1464 = vmatpush1.msra.mxu0 %v1281
    %1465 = vmatprep.subr.mxu0 0.0
    %1466 = vmatpush1.msra.mxu0 %v1282
    %1467 = vmatprep.subr.mxu0 0.0
    %1468 = vmatpush1.msra.mxu0 %v1283
    %1469 = vmatprep.subr.mxu0 0.0
    %1470 = vmatpush1.msra.mxu0 %v1284
    %1471 = vmatprep.subr.mxu0 0.0
    %1472 = vmatpush1.msra.mxu0 %v1285
    %1473 = vmatprep.mubr.f32.mxu0 %v1401
    %1474 = vmatmul.mubr.f32.gmra.mrb[0].mxu0 %v1400
    %v1475 = vpop.f32.mrb[0].mxu0
    %v1476 = vadd.f32 %v1408, %v1475
    %v1477 = vpop.f32.mrb[0].mxu0
    %1478 = vmatprep.mubr.f32.mxu0 %v1403
    %1479 = vmatmul.mubr.f32.gmra.mrb[0].mxu0 %v1402
    %v1480 = vpop.f32.mrb[0].mxu0
    %v1481 = vadd.f32 %v1408, %v1480
    %v1482 = vpop.f32.mrb[0].mxu0
    %1483 = vmatprep.mubr.f32.mxu0 %v1405
    %1484 = vmatmul.mubr.f32.gmra.mrb[0].mxu0 %v1404
    %v1485 = vpop.f32.mrb[0].mxu0
    %v1486 = vadd.f32 %v1408, %v1485
    %v1487 = vpop.f32.mrb[0].mxu0
    %1488 = vmatprep.mubr.f32.mxu0 %v1407
    %1489 = vmatmul.mubr.f32.gmra.mrb[0].mxu0 %v1406
    %v1490 = vpop.f32.mrb[0].mxu0
    %v1491 = vadd.f32 %v1408, %v1490
    %v1492 = vpop.f32.mrb[0].mxu0
    %1493 = vdwg.mxu0
    %v1494 = vadd.f32 %v1234, %v1476
    %v1495 = vadd.f32 %v1235, %v1481
    %v1496 = vadd.f32 %v1236, %v1486
    %v1497 = vadd.f32 %v1237, %v1491
    %v1498 = vld [vmem:[%s2 + $0x60] ss:$0 sm:$0xff]
    %v1499 = vld [vmem:[%s2 + $0x70] ss:$0 sm:$0xff]
    %v1500 = vsel %vm56, %v1494, 0.0
    %1501 = vadd.xlane.f32.xlu0 %v1500
    %v1502 = vpop.xlane.xlu0 %1501
    %v1503 = vsel %vm56, %v1495, 0.0
    %1504 = vadd.xlane.f32.xlu0 %v1503
    %v1505 = vpop.xlane.xlu0 %1504
    %v1506 = vsel %vm56, %v1496, 0.0
    %1507 = vadd.xlane.f32.xlu0 %v1506
    %v1508 = vpop.xlane.xlu0 %1507
    %v1509 = vsel %vm56, %v1497, 0.0
    %1510 = vadd.xlane.f32.xlu0 %v1509
    %v1511 = vpop.xlane.xlu0 %1510
    %v1512 = vmul.f32 %v1502, %v1189
    %v1513 = vmul.f32 %v1505, %v1189
    %v1514 = vmul.f32 %v1508, %v1189
    %v1515 = vmul.f32 %v1511, %v1189
    %v1516 = vsub.f32 %v1494, %v1512
    %v1517 = vsub.f32 %v1495, %v1513
    %v1518 = vsub.f32 %v1496, %v1514
    %v1519 = vsub.f32 %v1497, %v1515
    %v1520 = vmul.f32 %v1516, %v1516
    %v1521 = vmul.f32 %v1517, %v1517
    %v1522 = vmul.f32 %v1518, %v1518
    %v1523 = vmul.f32 %v1519, %v1519
    %v1524 = vsel %vm56, %v1520, 0.0
    %1525 = vadd.xlane.f32.xlu0 %v1524
    %v1526 = vpop.xlane.xlu0 %1525
    %v1527 = vsel %vm56, %v1521, 0.0
    %1528 = vadd.xlane.f32.xlu0 %v1527
    %v1529 = vpop.xlane.xlu0 %1528
    %v1530 = vsel %vm56, %v1522, 0.0
    %1531 = vadd.xlane.f32.xlu0 %v1530
    %v1532 = vpop.xlane.xlu0 %1531
    %v1533 = vsel %vm56, %v1523, 0.0
    %1534 = vadd.xlane.f32.xlu0 %v1533
    %v1535 = vpop.xlane.xlu0 %1534
    %v1536 = vmul.f32 %v1526, %v1189
    %v1537 = vmul.f32 %v1529, %v1189
    %v1538 = vmul.f32 %v1532, %v1189
    %v1539 = vmul.f32 %v1535, %v1189
    %v1540 = vadd.f32 %v1536, 1e-05
    %v1541 = vadd.f32 %v1537, 1e-05
    %v1542 = vadd.f32 %v1538, 1e-05
    %v1543 = vadd.f32 %v1539, 1e-05
    %v1544 = vrsqrt.pop %v1540
    %v1545 = vrsqrt.pop %v1541
    %v1546 = vrsqrt.pop %v1542
    %v1547 = vrsqrt.pop %v1543
    %v1548 = vmul.f32 %v1516, %v1544
    %v1549 = vmul.f32 %v1517, %v1545
    %v1550 = vmul.f32 %v1518, %v1546
    %v1551 = vmul.f32 %v1519, %v1547
    %v1552 = vmul.f32 %v1548, %v1498
    %v1553 = vmul.f32 %v1549, %v1498
    %v1554 = vmul.f32 %v1550, %v1498
    %v1555 = vmul.f32 %v1551, %v1498
    %v1556 = vadd.f32 %v1552, %v1499
    %v1557 = vadd.f32 %v1553, %v1499
    %v1558 = vadd.f32 %v1554, %v1499
    %v1559 = vadd.f32 %v1555, %v1499
    %v1560 = vld [vmem:[%s1 + $0x380] sm:$0xff]
    %v1561 = vld [vmem:[%s1 + $0x388] sm:$0xff]
    %v1562 = vld [vmem:[%s1 + $0x390] sm:$0xff]
    %v1563 = vld [vmem:[%s1 + $0x398] sm:$0xff]
    %v1564 = vld [vmem:[%s1 + $0x3a0] sm:$0xff]
    %v1565 = vld [vmem:[%s1 + $0x3a8] sm:$0xff]
    %v1566 = vld [vmem:[%s1 + $0x3b0] sm:$0xff]
    %v1567 = vld [vmem:[%s1 + $0x3b8] sm:$0xff]
    %v1568 = vld [vmem:[%s1 + $0x3c0] sm:$0xff]
    %v1569 = vld [vmem:[%s1 + $0x3c8] sm:$0xff]
    %v1570 = vld [vmem:[%s1 + $0x3d0] sm:$0xff]
    %v1571 = vld [vmem:[%s1 + $0x3d8] sm:$0xff]
    %v1572 = vld [vmem:[%s1 + $0x3e0] sm:$0xff]
    %v1573 = vld [vmem:[%s1 + $0x3e8] sm:$0xff]
    %v1574 = vld [vmem:[%s1 + $0x3f0] sm:$0xff]
    %v1575 = vld [vmem:[%s1 + $0x3f8] sm:$0xff]
    %s1576 = scalar_lea.vmem %s2, 128
    %v1577 = vld [vmem:[%s1576] ss:$8 sm:$0x3]
    %v1579 = vlaneseq
    %v1580 = vshrl.u32 %v1579, 7
    %v1581 = vsub.s32 0, %v1580
    %v1582 = vrot.slane %v1577, %v1581
    %v1583 = vlaneseq
    %v1584 = vshrl.u32 %v1583, 7
    %v1585 = vsub.s32 1, %v1584
    %v1586 = vrot.slane %v1577, %v1585
    %v1590 = vsel %vm56, %v1556, 0
    %v1593 = vsel %vm56, %v1557, 0
    %v1596 = vsel %vm56, %v1558, 0
    %v1599 = vsel %vm56, %v1559, 0
    %1601 = vmatprep.subr.mxu0 %v1561
    %1602 = vmatpush1.msra.mxu0 %v1560
    %1603 = vmatprep.subr.mxu0 %v1563
    %1604 = vmatpush1.msra.mxu0 %v1562
    %1605 = vmatprep.subr.mxu0 %v1565
    %1606 = vmatpush1.msra.mxu0 %v1564
    %1607 = vmatprep.subr.mxu0 %v1567
    %1608 = vmatpush1.msra.mxu0 %v1566
    %1609 = vmatprep.subr.mxu0 %v1569
    %1610 = vmatpush1.msra.mxu0 %v1568
    %1611 = vmatprep.subr.mxu0 %v1571
    %1612 = vmatpush1.msra.mxu0 %v1570
    %1613 = vmatprep.subr.mxu0 %v1573
    %1614 = vmatpush1.msra.mxu0 %v1572
    %1615 = vmatprep.subr.mxu0 %v1575
    %1616 = vmatpush1.msra.mxu0 %v1574
    %1617 = vmatprep.subr.mxu0 0.0
    %1618 = vmatpush1.msra.mxu0 0.0
    %1619 = vmatprep.subr.mxu0 0.0
    %1620 = vmatpush1.msra.mxu0 0.0
    %1621 = vmatprep.subr.mxu0 0.0
    %1622 = vmatpush1.msra.mxu0 0.0
    %1623 = vmatprep.subr.mxu0 0.0
    %1624 = vmatpush1.msra.mxu0 0.0
    %1625 = vmatprep.subr.mxu0 0.0
    %1626 = vmatpush1.msra.mxu0 0.0
    %1627 = vmatprep.subr.mxu0 0.0
    %1628 = vmatpush1.msra.mxu0 0.0
    %1629 = vmatprep.subr.mxu0 0.0
    %1630 = vmatpush1.msra.mxu0 0.0
    %1631 = vmatprep.subr.mxu0 0.0
    %1632 = vmatpush1.msra.mxu0 0.0
    %1633 = vmatprep.subr.mxu0 0.0
    %1634 = vmatpush1.msra.mxu0 0.0
    %1635 = vmatprep.subr.mxu0 0.0
    %1636 = vmatpush1.msra.mxu0 0.0
    %1637 = vmatprep.subr.mxu0 0.0
    %1638 = vmatpush1.msra.mxu0 0.0
    %1639 = vmatprep.subr.mxu0 0.0
    %1640 = vmatpush1.msra.mxu0 0.0
    %1641 = vmatprep.subr.mxu0 0.0
    %1642 = vmatpush1.msra.mxu0 0.0
    %1643 = vmatprep.subr.mxu0 0.0
    %1644 = vmatpush1.msra.mxu0 0.0
    %1645 = vmatprep.subr.mxu0 0.0
    %1646 = vmatpush1.msra.mxu0 0.0
    %1647 = vmatprep.subr.mxu0 0.0
    %1648 = vmatpush1.msra.mxu0 0.0
    %1649 = vmatprep.subr.mxu0 0.0
    %1650 = vmatpush1.msra.mxu0 0.0
    %1651 = vmatprep.subr.mxu0 0.0
    %1652 = vmatpush1.msra.mxu0 0.0
    %1653 = vmatprep.subr.mxu0 0.0
    %1654 = vmatpush1.msra.mxu0 0.0
    %1655 = vmatprep.subr.mxu0 0.0
    %1656 = vmatpush1.msra.mxu0 0.0
    %1657 = vmatprep.subr.mxu0 0.0
    %1658 = vmatpush1.msra.mxu0 0.0
    %1659 = vmatprep.subr.mxu0 0.0
    %1660 = vmatpush1.msra.mxu0 0.0
    %1661 = vmatprep.subr.mxu0 0.0
    %1662 = vmatpush1.msra.mxu0 0.0
    %1663 = vmatprep.subr.mxu0 0.0
    %1664 = vmatpush1.msra.mxu0 0.0
    %1665 = vmatprep.mubr.f32.mxu0 0.0
    %1666 = vmatmul.mubr.f32.gmra.mrb[0].mxu0 %v1590
    %v1667 = vpop.f32.mrb[0].mxu0
    %v1668 = vadd.f32 %v1582, %v1667
    %v1669 = vpop.f32.mrb[0].mxu0
    %v1670 = vadd.f32 %v1586, %v1669
    %1671 = vmatprep.mubr.f32.mxu0 0.0
    %1672 = vmatmul.mubr.f32.gmra.mrb[0].mxu0 %v1593
    %v1673 = vpop.f32.mrb[0].mxu0
    %v1674 = vadd.f32 %v1582, %v1673
    %v1675 = vpop.f32.mrb[0].mxu0
    %v1676 = vadd.f32 %v1586, %v1675
    %1677 = vmatprep.mubr.f32.mxu0 0.0
    %1678 = vmatmul.mubr.f32.gmra.mrb[0].mxu0 %v1596
    %v1679 = vpop.f32.mrb[0].mxu0
    %v1680 = vadd.f32 %v1582, %v1679
    %v1681 = vpop.f32.mrb[0].mxu0
    %v1682 = vadd.f32 %v1586, %v1681
    %1683 = vmatprep.mubr.f32.mxu0 0.0
    %1684 = vmatmul.mubr.f32.gmra.mrb[0].mxu0 %v1599
    %v1685 = vpop.f32.mrb[0].mxu0
    %v1686 = vadd.f32 %v1582, %v1685
    %v1687 = vpop.f32.mrb[0].mxu0
    %v1688 = vadd.f32 %v1586, %v1687
    %1689 = vdwg.mxu0
    %1692 = vrot.lane.b32.xlu0 %v1668, 64
    %v1693 = vpop.permute.xlu0 %1692
    %1694 = vrot.lane.b32.xlu0 %v1674, 64
    %v1695 = vpop.permute.xlu0 %1694
    %v1696 = vsel %vm164, %v1668, 0
    %v1698 = vsel %vm164, %v1674, 0
    %v1700 = vsel %vm164, %v1693, 0
    %v1702 = vsel %vm164, %v1695, 0
    %1704 = vmatprep.subr.mxu0 0.0
    %1705 = vmatpush1.xpose.msra.mxu0 %v1700
    %1706 = vmatprep.subr.mxu0 0.0
    %1707 = vmatpush1.xpose.msra.mxu0 %v1702
    %1708 = vmatprep.subr.mxu0 0.0
    %1709 = vmatpush1.xpose.msra.mxu0 0.0
    %1710 = vmatprep.subr.mxu0 0.0
    %1711 = vmatpush1.xpose.msra.mxu0 0.0
    %1712 = vmatprep.subr.mxu0 0.0
    %1713 = vmatpush1.xpose.msra.mxu0 0.0
    %1714 = vmatprep.subr.mxu0 0.0
    %1715 = vmatpush1.xpose.msra.mxu0 0.0
    %1716 = vmatprep.subr.mxu0 0.0
    %1717 = vmatpush1.xpose.msra.mxu0 0.0
    %1718 = vmatprep.subr.mxu0 0.0
    %1719 = vmatpush1.xpose.msra.mxu0 0.0
    %1720 = vmatprep.subr.mxu0 0.0
    %1721 = vmatpush1.xpose.msra.mxu0 0.0
    %1722 = vmatprep.subr.mxu0 0.0
    %1723 = vmatpush1.xpose.msra.mxu0 0.0
    %1724 = vmatprep.subr.mxu0 0.0
    %1725 = vmatpush1.xpose.msra.mxu0 0.0
    %1726 = vmatprep.subr.mxu0 0.0
    %1727 = vmatpush1.xpose.msra.mxu0 0.0
    %1728 = vmatprep.subr.mxu0 0.0
    %1729 = vmatpush1.xpose.msra.mxu0 0.0
    %1730 = vmatprep.subr.mxu0 0.0
    %1731 = vmatpush1.xpose.msra.mxu0 0.0
    %1732 = vmatprep.subr.mxu0 0.0
    %1733 = vmatpush1.xpose.msra.mxu0 0.0
    %1734 = vmatprep.subr.mxu0 0.0
    %1735 = vmatpush1.xpose.msra.mxu0 0.0
    %1736 = vmatprep.subr.mxu0 0.0
    %1737 = vmatpush1.xpose.msra.mxu0 0.0
    %1738 = vmatprep.subr.mxu0 0.0
    %1739 = vmatpush1.xpose.msra.mxu0 0.0
    %1740 = vmatprep.subr.mxu0 0.0
    %1741 = vmatpush1.xpose.msra.mxu0 0.0
    %1742 = vmatprep.subr.mxu0 0.0
    %1743 = vmatpush1.xpose.msra.mxu0 0.0
    %1744 = vmatprep.subr.mxu0 0.0
    %1745 = vmatpush1.xpose.msra.mxu0 0.0
    %1746 = vmatprep.subr.mxu0 0.0
    %1747 = vmatpush1.xpose.msra.mxu0 0.0
    %1748 = vmatprep.subr.mxu0 0.0
    %1749 = vmatpush1.xpose.msra.mxu0 0.0
    %1750 = vmatprep.subr.mxu0 0.0
    %1751 = vmatpush1.xpose.msra.mxu0 0.0
    %1752 = vmatprep.subr.mxu0 0.0
    %1753 = vmatpush1.xpose.msra.mxu0 0.0
    %1754 = vmatprep.subr.mxu0 0.0
    %1755 = vmatpush1.xpose.msra.mxu0 0.0
    %1756 = vmatprep.subr.mxu0 0.0
    %1757 = vmatpush1.xpose.msra.mxu0 0.0
    %1758 = vmatprep.subr.mxu0 0.0
    %1759 = vmatpush1.xpose.msra.mxu0 0.0
    %1760 = vmatprep.subr.mxu0 0.0
    %1761 = vmatpush1.xpose.msra.mxu0 0.0
    %1762 = vmatprep.subr.mxu0 0.0
    %1763 = vmatpush1.xpose.msra.mxu0 0.0
    %1764 = vmatprep.subr.mxu0 0.0
    %1765 = vmatpush1.xpose.msra.mxu0 0.0
    %1766 = vmatprep.subr.mxu0 0.0
    %1767 = vmatpush1.xpose.msra.mxu0 0.0
    %1768 = vmatprep.mubr.f32.mxu0 0.0
    %1769 = vmatmul.mubr.f32.gmra.mrb[0].mxu0 %v1696
    %v1770 = vpop.f32.mrb[0].mxu0
    %v1771 = vadd.f32 0.0, %v1770
    %v1772 = vpop.f32.mrb[0].mxu0
    %1773 = vmatprep.mubr.f32.mxu0 0.0
    %1774 = vmatmul.mubr.f32.gmra.mrb[0].mxu0 %v1698
    %v1775 = vpop.f32.mrb[0].mxu0
    %v1776 = vadd.f32 0.0, %v1775
    %v1777 = vpop.f32.mrb[0].mxu0
    %1778 = vdwg.mxu0
    %1781 = vrot.lane.b32.xlu0 %v1680, 64
    %v1782 = vpop.permute.xlu0 %1781
    %1783 = vrot.lane.b32.xlu0 %v1686, 64
    %v1784 = vpop.permute.xlu0 %1783
    %v1785 = vsel %vm164, %v1680, 0
    %v1787 = vsel %vm164, %v1686, 0
    %v1789 = vsel %vm164, %v1782, 0
    %v1791 = vsel %vm164, %v1784, 0
    %1793 = vmatprep.subr.mxu0 0.0
    %1794 = vmatpush1.xpose.msra.mxu0 %v1789
    %1795 = vmatprep.subr.mxu0 0.0
    %1796 = vmatpush1.xpose.msra.mxu0 %v1791
    %1797 = vmatprep.subr.mxu0 0.0
    %1798 = vmatpush1.xpose.msra.mxu0 0.0
    %1799 = vmatprep.subr.mxu0 0.0
    %1800 = vmatpush1.xpose.msra.mxu0 0.0
    %1801 = vmatprep.subr.mxu0 0.0
    %1802 = vmatpush1.xpose.msra.mxu0 0.0
    %1803 = vmatprep.subr.mxu0 0.0
    %1804 = vmatpush1.xpose.msra.mxu0 0.0
    %1805 = vmatprep.subr.mxu0 0.0
    %1806 = vmatpush1.xpose.msra.mxu0 0.0
    %1807 = vmatprep.subr.mxu0 0.0
    %1808 = vmatpush1.xpose.msra.mxu0 0.0
    %1809 = vmatprep.subr.mxu0 0.0
    %1810 = vmatpush1.xpose.msra.mxu0 0.0
    %1811 = vmatprep.subr.mxu0 0.0
    %1812 = vmatpush1.xpose.msra.mxu0 0.0
    %1813 = vmatprep.subr.mxu0 0.0
    %1814 = vmatpush1.xpose.msra.mxu0 0.0
    %1815 = vmatprep.subr.mxu0 0.0
    %1816 = vmatpush1.xpose.msra.mxu0 0.0
    %1817 = vmatprep.subr.mxu0 0.0
    %1818 = vmatpush1.xpose.msra.mxu0 0.0
    %1819 = vmatprep.subr.mxu0 0.0
    %1820 = vmatpush1.xpose.msra.mxu0 0.0
    %1821 = vmatprep.subr.mxu0 0.0
    %1822 = vmatpush1.xpose.msra.mxu0 0.0
    %1823 = vmatprep.subr.mxu0 0.0
    %1824 = vmatpush1.xpose.msra.mxu0 0.0
    %1825 = vmatprep.subr.mxu0 0.0
    %1826 = vmatpush1.xpose.msra.mxu0 0.0
    %1827 = vmatprep.subr.mxu0 0.0
    %1828 = vmatpush1.xpose.msra.mxu0 0.0
    %1829 = vmatprep.subr.mxu0 0.0
    %1830 = vmatpush1.xpose.msra.mxu0 0.0
    %1831 = vmatprep.subr.mxu0 0.0
    %1832 = vmatpush1.xpose.msra.mxu0 0.0
    %1833 = vmatprep.subr.mxu0 0.0
    %1834 = vmatpush1.xpose.msra.mxu0 0.0
    %1835 = vmatprep.subr.mxu0 0.0
    %1836 = vmatpush1.xpose.msra.mxu0 0.0
    %1837 = vmatprep.subr.mxu0 0.0
    %1838 = vmatpush1.xpose.msra.mxu0 0.0
    %1839 = vmatprep.subr.mxu0 0.0
    %1840 = vmatpush1.xpose.msra.mxu0 0.0
    %1841 = vmatprep.subr.mxu0 0.0
    %1842 = vmatpush1.xpose.msra.mxu0 0.0
    %1843 = vmatprep.subr.mxu0 0.0
    %1844 = vmatpush1.xpose.msra.mxu0 0.0
    %1845 = vmatprep.subr.mxu0 0.0
    %1846 = vmatpush1.xpose.msra.mxu0 0.0
    %1847 = vmatprep.subr.mxu0 0.0
    %1848 = vmatpush1.xpose.msra.mxu0 0.0
    %1849 = vmatprep.subr.mxu0 0.0
    %1850 = vmatpush1.xpose.msra.mxu0 0.0
    %1851 = vmatprep.subr.mxu0 0.0
    %1852 = vmatpush1.xpose.msra.mxu0 0.0
    %1853 = vmatprep.subr.mxu0 0.0
    %1854 = vmatpush1.xpose.msra.mxu0 0.0
    %1855 = vmatprep.subr.mxu0 0.0
    %1856 = vmatpush1.xpose.msra.mxu0 0.0
    %1857 = vmatprep.mubr.f32.mxu0 0.0
    %1858 = vmatmul.mubr.f32.gmra.mrb[0].mxu0 %v1785
    %v1859 = vpop.f32.mrb[0].mxu0
    %v1860 = vadd.f32 0.0, %v1859
    %v1861 = vpop.f32.mrb[0].mxu0
    %1862 = vmatprep.mubr.f32.mxu0 0.0
    %1863 = vmatmul.mubr.f32.gmra.mrb[0].mxu0 %v1787
    %v1864 = vpop.f32.mrb[0].mxu0
    %v1865 = vadd.f32 0.0, %v1864
    %v1866 = vpop.f32.mrb[0].mxu0
    %1867 = vdwg.mxu0
    %v1868 = vmul.f32 %v1771, 0.17677669
    %v1869 = vmul.f32 %v1776, 0.17677669
    %v1870 = vmul.f32 %v1860, 0.17677669
    %v1871 = vmul.f32 %v1865, 0.17677669
    %v1872 = vadd.f32 %v1868, %v26
    %v1873 = vadd.f32 %v1869, %v27
    %v1874 = vadd.f32 %v1870, %v26
    %v1875 = vadd.f32 %v1871, %v27
    %v1876 = vsel %vm345, %v1872, -inf
    %1877 = vmax.xlane.f32.xlu0 %v1876
    %v1878 = vpop.xlane.xlu0 %1877
    %v1879 = vsel %vm345, %v1873, -inf
    %1880 = vmax.xlane.f32.xlu0 %v1879
    %v1881 = vpop.xlane.xlu0 %1880
    %v1882 = vsel %vm345, %v1874, -inf
    %1883 = vmax.xlane.f32.xlu0 %v1882
    %v1884 = vpop.xlane.xlu0 %1883
    %v1885 = vsel %vm345, %v1875, -inf
    %1886 = vmax.xlane.f32.xlu0 %v1885
    %v1887 = vpop.xlane.xlu0 %1886
    %v1888 = vsub.f32 %v1872, %v1878
    %v1889 = vsub.f32 %v1873, %v1881
    %v1890 = vsub.f32 %v1874, %v1884
    %v1891 = vsub.f32 %v1875, %v1887
    %v1892 = vmul.f32 %v1888, 1.442695
    %v1893 = vpow.pop %v1892
    %v1894 = vmul.f32 %v1889, 1.442695
    %v1895 = vpow.pop %v1894
    %v1896 = vmul.f32 %v1890, 1.442695
    %v1897 = vpow.pop %v1896
    %v1898 = vmul.f32 %v1891, 1.442695
    %v1899 = vpow.pop %v1898
    %v1900 = vsel %vm345, %v1893, 0.0
    %1901 = vadd.xlane.f32.xlu0 %v1900
    %v1902 = vpop.xlane.xlu0 %1901
    %v1903 = vsel %vm345, %v1895, 0.0
    %1904 = vadd.xlane.f32.xlu0 %v1903
    %v1905 = vpop.xlane.xlu0 %1904
    %v1906 = vsel %vm345, %v1897, 0.0
    %1907 = vadd.xlane.f32.xlu0 %v1906
    %v1908 = vpop.xlane.xlu0 %1907
    %v1909 = vsel %vm345, %v1899, 0.0
    %1910 = vadd.xlane.f32.xlu0 %v1909
    %v1911 = vpop.xlane.xlu0 %1910
    %v1912 = vrcp.pop %v1902
    %v1913 = vrcp.pop %v1905
    %v1914 = vrcp.pop %v1908
    %v1915 = vrcp.pop %v1911
    %v1916 = vmul.f32 %v1893, %v1912
    %v1917 = vmul.f32 %v1895, %v1913
    %v1918 = vmul.f32 %v1897, %v1914
    %v1919 = vmul.f32 %v1899, %v1915
    %v1921 = vsel %vm345, %v1916, 0
    %v1924 = vsel %vm345, %v1917, 0
    %1926 = vmatprep.subr.mxu0 0.0
    %1927 = vmatpush1.msra.mxu0 %v1670
    %1928 = vmatprep.subr.mxu0 0.0
    %1929 = vmatpush1.msra.mxu0 %v1676
    %1930 = vmatprep.subr.mxu0 0.0
    %1931 = vmatpush1.msra.mxu0 0.0
    %1932 = vmatprep.subr.mxu0 0.0
    %1933 = vmatpush1.msra.mxu0 0.0
    %1934 = vmatprep.subr.mxu0 0.0
    %1935 = vmatpush1.msra.mxu0 0.0
    %1936 = vmatprep.subr.mxu0 0.0
    %1937 = vmatpush1.msra.mxu0 0.0
    %1938 = vmatprep.subr.mxu0 0.0
    %1939 = vmatpush1.msra.mxu0 0.0
    %1940 = vmatprep.subr.mxu0 0.0
    %1941 = vmatpush1.msra.mxu0 0.0
    %1942 = vmatprep.subr.mxu0 0.0
    %1943 = vmatpush1.msra.mxu0 0.0
    %1944 = vmatprep.subr.mxu0 0.0
    %1945 = vmatpush1.msra.mxu0 0.0
    %1946 = vmatprep.subr.mxu0 0.0
    %1947 = vmatpush1.msra.mxu0 0.0
    %1948 = vmatprep.subr.mxu0 0.0
    %1949 = vmatpush1.msra.mxu0 0.0
    %1950 = vmatprep.subr.mxu0 0.0
    %1951 = vmatpush1.msra.mxu0 0.0
    %1952 = vmatprep.subr.mxu0 0.0
    %1953 = vmatpush1.msra.mxu0 0.0
    %1954 = vmatprep.subr.mxu0 0.0
    %1955 = vmatpush1.msra.mxu0 0.0
    %1956 = vmatprep.subr.mxu0 0.0
    %1957 = vmatpush1.msra.mxu0 0.0
    %1958 = vmatprep.subr.mxu0 0.0
    %1959 = vmatpush1.msra.mxu0 0.0
    %1960 = vmatprep.subr.mxu0 0.0
    %1961 = vmatpush1.msra.mxu0 0.0
    %1962 = vmatprep.subr.mxu0 0.0
    %1963 = vmatpush1.msra.mxu0 0.0
    %1964 = vmatprep.subr.mxu0 0.0
    %1965 = vmatpush1.msra.mxu0 0.0
    %1966 = vmatprep.subr.mxu0 0.0
    %1967 = vmatpush1.msra.mxu0 0.0
    %1968 = vmatprep.subr.mxu0 0.0
    %1969 = vmatpush1.msra.mxu0 0.0
    %1970 = vmatprep.subr.mxu0 0.0
    %1971 = vmatpush1.msra.mxu0 0.0
    %1972 = vmatprep.subr.mxu0 0.0
    %1973 = vmatpush1.msra.mxu0 0.0
    %1974 = vmatprep.subr.mxu0 0.0
    %1975 = vmatpush1.msra.mxu0 0.0
    %1976 = vmatprep.subr.mxu0 0.0
    %1977 = vmatpush1.msra.mxu0 0.0
    %1978 = vmatprep.subr.mxu0 0.0
    %1979 = vmatpush1.msra.mxu0 0.0
    %1980 = vmatprep.subr.mxu0 0.0
    %1981 = vmatpush1.msra.mxu0 0.0
    %1982 = vmatprep.subr.mxu0 0.0
    %1983 = vmatpush1.msra.mxu0 0.0
    %1984 = vmatprep.subr.mxu0 0.0
    %1985 = vmatpush1.msra.mxu0 0.0
    %1986 = vmatprep.subr.mxu0 0.0
    %1987 = vmatpush1.msra.mxu0 0.0
    %1988 = vmatprep.subr.mxu0 0.0
    %1989 = vmatpush1.msra.mxu0 0.0
    %1990 = vmatprep.mubr.f32.mxu0 0.0
    %1991 = vmatmul.mubr.f32.gmra.mrb[0].mxu0 %v1921
    %v1992 = vpop.f32.mrb[0].mxu0
    %v1993 = vadd.f32 0.0, %v1992
    %v1994 = vpop.f32.mrb[0].mxu0
    %1995 = vmatprep.mubr.f32.mxu0 0.0
    %1996 = vmatmul.mubr.f32.gmra.mrb[0].mxu0 %v1924
    %v1997 = vpop.f32.mrb[0].mxu0
    %v1998 = vadd.f32 0.0, %v1997
    %v1999 = vpop.f32.mrb[0].mxu0
    %2000 = vdwg.mxu0
    %v2002 = vsel %vm345, %v1918, 0
    %v2005 = vsel %vm345, %v1919, 0
    %2007 = vmatprep.subr.mxu0 0.0
    %2008 = vmatpush1.msra.mxu0 %v1682
    %2009 = vmatprep.subr.mxu0 0.0
    %2010 = vmatpush1.msra.mxu0 %v1688
    %2011 = vmatprep.subr.mxu0 0.0
    %2012 = vmatpush1.msra.mxu0 0.0
    %2013 = vmatprep.subr.mxu0 0.0
    %2014 = vmatpush1.msra.mxu0 0.0
    %2015 = vmatprep.subr.mxu0 0.0
    %2016 = vmatpush1.msra.mxu0 0.0
    %2017 = vmatprep.subr.mxu0 0.0
    %2018 = vmatpush1.msra.mxu0 0.0
    %2019 = vmatprep.subr.mxu0 0.0
    %2020 = vmatpush1.msra.mxu0 0.0
    %2021 = vmatprep.subr.mxu0 0.0
    %2022 = vmatpush1.msra.mxu0 0.0
    %2023 = vmatprep.subr.mxu0 0.0
    %2024 = vmatpush1.msra.mxu0 0.0
    %2025 = vmatprep.subr.mxu0 0.0
    %2026 = vmatpush1.msra.mxu0 0.0
    %2027 = vmatprep.subr.mxu0 0.0
    %2028 = vmatpush1.msra.mxu0 0.0
    %2029 = vmatprep.subr.mxu0 0.0
    %2030 = vmatpush1.msra.mxu0 0.0
    %2031 = vmatprep.subr.mxu0 0.0
    %2032 = vmatpush1.msra.mxu0 0.0
    %2033 = vmatprep.subr.mxu0 0.0
    %2034 = vmatpush1.msra.mxu0 0.0
    %2035 = vmatprep.subr.mxu0 0.0
    %2036 = vmatpush1.msra.mxu0 0.0
    %2037 = vmatprep.subr.mxu0 0.0
    %2038 = vmatpush1.msra.mxu0 0.0
    %2039 = vmatprep.subr.mxu0 0.0
    %2040 = vmatpush1.msra.mxu0 0.0
    %2041 = vmatprep.subr.mxu0 0.0
    %2042 = vmatpush1.msra.mxu0 0.0
    %2043 = vmatprep.subr.mxu0 0.0
    %2044 = vmatpush1.msra.mxu0 0.0
    %2045 = vmatprep.subr.mxu0 0.0
    %2046 = vmatpush1.msra.mxu0 0.0
    %2047 = vmatprep.subr.mxu0 0.0
    %2048 = vmatpush1.msra.mxu0 0.0
    %2049 = vmatprep.subr.mxu0 0.0
    %2050 = vmatpush1.msra.mxu0 0.0
    %2051 = vmatprep.subr.mxu0 0.0
    %2052 = vmatpush1.msra.mxu0 0.0
    %2053 = vmatprep.subr.mxu0 0.0
    %2054 = vmatpush1.msra.mxu0 0.0
    %2055 = vmatprep.subr.mxu0 0.0
    %2056 = vmatpush1.msra.mxu0 0.0
    %2057 = vmatprep.subr.mxu0 0.0
    %2058 = vmatpush1.msra.mxu0 0.0
    %2059 = vmatprep.subr.mxu0 0.0
    %2060 = vmatpush1.msra.mxu0 0.0
    %2061 = vmatprep.subr.mxu0 0.0
    %2062 = vmatpush1.msra.mxu0 0.0
    %2063 = vmatprep.subr.mxu0 0.0
    %2064 = vmatpush1.msra.mxu0 0.0
    %2065 = vmatprep.subr.mxu0 0.0
    %2066 = vmatpush1.msra.mxu0 0.0
    %2067 = vmatprep.subr.mxu0 0.0
    %2068 = vmatpush1.msra.mxu0 0.0
    %2069 = vmatprep.subr.mxu0 0.0
    %2070 = vmatpush1.msra.mxu0 0.0
    %2071 = vmatprep.mubr.f32.mxu0 0.0
    %2072 = vmatmul.mubr.f32.gmra.mrb[0].mxu0 %v2002
    %v2073 = vpop.f32.mrb[0].mxu0
    %v2074 = vadd.f32 0.0, %v2073
    %v2075 = vpop.f32.mrb[0].mxu0
    %2076 = vmatprep.mubr.f32.mxu0 0.0
    %2077 = vmatmul.mubr.f32.gmra.mrb[0].mxu0 %v2005
    %v2078 = vpop.f32.mrb[0].mxu0
    %v2079 = vadd.f32 0.0, %v2078
    %v2080 = vpop.f32.mrb[0].mxu0
    %2081 = vdwg.mxu0
    %v2082 = vld [vmem:[%s1 + $0x400] sm:$0xff]
    %v2083 = vld [vmem:[%s1 + $0x410] sm:$0xff]
    %v2084 = vld [vmem:[%s1 + $0x420] sm:$0xff]
    %v2085 = vld [vmem:[%s1 + $0x430] sm:$0xff]
    %2086 = vrot.lane.b32.xlu0 %v1668, 96
    %v2087 = vpop.permute.xlu0 %2086
    %2088 = vrot.lane.b32.xlu0 %v1674, 96
    %v2089 = vpop.permute.xlu0 %2088
    %2090 = vrot.lane.b32.xlu0 %v1668, 32
    %v2091 = vpop.permute.xlu0 %2090
    %2092 = vrot.lane.b32.xlu0 %v1674, 32
    %v2093 = vpop.permute.xlu0 %2092
    %v2094 = vsel %vm164, %v2087, 0
    %v2096 = vsel %vm164, %v2089, 0
    %v2098 = vsel %vm164, %v2091, 0
    %v2100 = vsel %vm164, %v2093, 0
    %2102 = vmatprep.subr.mxu0 0.0
    %2103 = vmatpush1.xpose.msra.mxu0 %v2098
    %2104 = vmatprep.subr.mxu0 0.0
    %2105 = vmatpush1.xpose.msra.mxu0 %v2100
    %2106 = vmatprep.subr.mxu0 0.0
    %2107 = vmatpush1.xpose.msra.mxu0 0.0
    %2108 = vmatprep.subr.mxu0 0.0
    %2109 = vmatpush1.xpose.msra.mxu0 0.0
    %2110 = vmatprep.subr.mxu0 0.0
    %2111 = vmatpush1.xpose.msra.mxu0 0.0
    %2112 = vmatprep.subr.mxu0 0.0
    %2113 = vmatpush1.xpose.msra.mxu0 0.0
    %2114 = vmatprep.subr.mxu0 0.0
    %2115 = vmatpush1.xpose.msra.mxu0 0.0
    %2116 = vmatprep.subr.mxu0 0.0
    %2117 = vmatpush1.xpose.msra.mxu0 0.0
    %2118 = vmatprep.subr.mxu0 0.0
    %2119 = vmatpush1.xpose.msra.mxu0 0.0
    %2120 = vmatprep.subr.mxu0 0.0
    %2121 = vmatpush1.xpose.msra.mxu0 0.0
    %2122 = vmatprep.subr.mxu0 0.0
    %2123 = vmatpush1.xpose.msra.mxu0 0.0
    %2124 = vmatprep.subr.mxu0 0.0
    %2125 = vmatpush1.xpose.msra.mxu0 0.0
    %2126 = vmatprep.subr.mxu0 0.0
    %2127 = vmatpush1.xpose.msra.mxu0 0.0
    %2128 = vmatprep.subr.mxu0 0.0
    %2129 = vmatpush1.xpose.msra.mxu0 0.0
    %2130 = vmatprep.subr.mxu0 0.0
    %2131 = vmatpush1.xpose.msra.mxu0 0.0
    %2132 = vmatprep.subr.mxu0 0.0
    %2133 = vmatpush1.xpose.msra.mxu0 0.0
    %2134 = vmatprep.subr.mxu0 0.0
    %2135 = vmatpush1.xpose.msra.mxu0 0.0
    %2136 = vmatprep.subr.mxu0 0.0
    %2137 = vmatpush1.xpose.msra.mxu0 0.0
    %2138 = vmatprep.subr.mxu0 0.0
    %2139 = vmatpush1.xpose.msra.mxu0 0.0
    %2140 = vmatprep.subr.mxu0 0.0
    %2141 = vmatpush1.xpose.msra.mxu0 0.0
    %2142 = vmatprep.subr.mxu0 0.0
    %2143 = vmatpush1.xpose.msra.mxu0 0.0
    %2144 = vmatprep.subr.mxu0 0.0
    %2145 = vmatpush1.xpose.msra.mxu0 0.0
    %2146 = vmatprep.subr.mxu0 0.0
    %2147 = vmatpush1.xpose.msra.mxu0 0.0
    %2148 = vmatprep.subr.mxu0 0.0
    %2149 = vmatpush1.xpose.msra.mxu0 0.0
    %2150 = vmatprep.subr.mxu0 0.0
    %2151 = vmatpush1.xpose.msra.mxu0 0.0
    %2152 = vmatprep.subr.mxu0 0.0
    %2153 = vmatpush1.xpose.msra.mxu0 0.0
    %2154 = vmatprep.subr.mxu0 0.0
    %2155 = vmatpush1.xpose.msra.mxu0 0.0
    %2156 = vmatprep.subr.mxu0 0.0
    %2157 = vmatpush1.xpose.msra.mxu0 0.0
    %2158 = vmatprep.subr.mxu0 0.0
    %2159 = vmatpush1.xpose.msra.mxu0 0.0
    %2160 = vmatprep.subr.mxu0 0.0
    %2161 = vmatpush1.xpose.msra.mxu0 0.0
    %2162 = vmatprep.subr.mxu0 0.0
    %2163 = vmatpush1.xpose.msra.mxu0 0.0
    %2164 = vmatprep.subr.mxu0 0.0
    %2165 = vmatpush1.xpose.msra.mxu0 0.0
    %2166 = vmatprep.mubr.f32.mxu0 0.0
    %2167 = vmatmul.mubr.f32.gmra.mrb[0].mxu0 %v2094
    %v2168 = vpop.f32.mrb[0].mxu0
    %v2169 = vadd.f32 0.0, %v2168
    %v2170 = vpop.f32.mrb[0].mxu0
    %2171 = vmatprep.mubr.f32.mxu0 0.0
    %2172 = vmatmul.mubr.f32.gmra.mrb[0].mxu0 %v2096
    %v2173 = vpop.f32.mrb[0].mxu0
    %v2174 = vadd.f32 0.0, %v2173
    %v2175 = vpop.f32.mrb[0].mxu0
    %2176 = vdwg.mxu0
    %2177 = vrot.lane.b32.xlu0 %v1680, 96
    %v2178 = vpop.permute.xlu0 %2177
    %2179 = vrot.lane.b32.xlu0 %v1686, 96
    %v2180 = vpop.permute.xlu0 %2179
    %2181 = vrot.lane.b32.xlu0 %v1680, 32
    %v2182 = vpop.permute.xlu0 %2181
    %2183 = vrot.lane.b32.xlu0 %v1686, 32
    %v2184 = vpop.permute.xlu0 %2183
    %v2185 = vsel %vm164, %v2178, 0
    %v2187 = vsel %vm164, %v2180, 0
    %v2189 = vsel %vm164, %v2182, 0
    %v2191 = vsel %vm164, %v2184, 0
    %2193 = vmatprep.subr.mxu0 0.0
    %2194 = vmatpush1.xpose.msra.mxu0 %v2189
    %2195 = vmatprep.subr.mxu0 0.0
    %2196 = vmatpush1.xpose.msra.mxu0 %v2191
    %2197 = vmatprep.subr.mxu0 0.0
    %2198 = vmatpush1.xpose.msra.mxu0 0.0
    %2199 = vmatprep.subr.mxu0 0.0
    %2200 = vmatpush1.xpose.msra.mxu0 0.0
    %2201 = vmatprep.subr.mxu0 0.0
    %2202 = vmatpush1.xpose.msra.mxu0 0.0
    %2203 = vmatprep.subr.mxu0 0.0
    %2204 = vmatpush1.xpose.msra.mxu0 0.0
    %2205 = vmatprep.subr.mxu0 0.0
    %2206 = vmatpush1.xpose.msra.mxu0 0.0
    %2207 = vmatprep.subr.mxu0 0.0
    %2208 = vmatpush1.xpose.msra.mxu0 0.0
    %2209 = vmatprep.subr.mxu0 0.0
    %2210 = vmatpush1.xpose.msra.mxu0 0.0
    %2211 = vmatprep.subr.mxu0 0.0
    %2212 = vmatpush1.xpose.msra.mxu0 0.0
    %2213 = vmatprep.subr.mxu0 0.0
    %2214 = vmatpush1.xpose.msra.mxu0 0.0
    %2215 = vmatprep.subr.mxu0 0.0
    %2216 = vmatpush1.xpose.msra.mxu0 0.0
    %2217 = vmatprep.subr.mxu0 0.0
    %2218 = vmatpush1.xpose.msra.mxu0 0.0
    %2219 = vmatprep.subr.mxu0 0.0
    %2220 = vmatpush1.xpose.msra.mxu0 0.0
    %2221 = vmatprep.subr.mxu0 0.0
    %2222 = vmatpush1.xpose.msra.mxu0 0.0
    %2223 = vmatprep.subr.mxu0 0.0
    %2224 = vmatpush1.xpose.msra.mxu0 0.0
    %2225 = vmatprep.subr.mxu0 0.0
    %2226 = vmatpush1.xpose.msra.mxu0 0.0
    %2227 = vmatprep.subr.mxu0 0.0
    %2228 = vmatpush1.xpose.msra.mxu0 0.0
    %2229 = vmatprep.subr.mxu0 0.0
    %2230 = vmatpush1.xpose.msra.mxu0 0.0
    %2231 = vmatprep.subr.mxu0 0.0
    %2232 = vmatpush1.xpose.msra.mxu0 0.0
    %2233 = vmatprep.subr.mxu0 0.0
    %2234 = vmatpush1.xpose.msra.mxu0 0.0
    %2235 = vmatprep.subr.mxu0 0.0
    %2236 = vmatpush1.xpose.msra.mxu0 0.0
    %2237 = vmatprep.subr.mxu0 0.0
    %2238 = vmatpush1.xpose.msra.mxu0 0.0
    %2239 = vmatprep.subr.mxu0 0.0
    %2240 = vmatpush1.xpose.msra.mxu0 0.0
    %2241 = vmatprep.subr.mxu0 0.0
    %2242 = vmatpush1.xpose.msra.mxu0 0.0
    %2243 = vmatprep.subr.mxu0 0.0
    %2244 = vmatpush1.xpose.msra.mxu0 0.0
    %2245 = vmatprep.subr.mxu0 0.0
    %2246 = vmatpush1.xpose.msra.mxu0 0.0
    %2247 = vmatprep.subr.mxu0 0.0
    %2248 = vmatpush1.xpose.msra.mxu0 0.0
    %2249 = vmatprep.subr.mxu0 0.0
    %2250 = vmatpush1.xpose.msra.mxu0 0.0
    %2251 = vmatprep.subr.mxu0 0.0
    %2252 = vmatpush1.xpose.msra.mxu0 0.0
    %2253 = vmatprep.subr.mxu0 0.0
    %2254 = vmatpush1.xpose.msra.mxu0 0.0
    %2255 = vmatprep.subr.mxu0 0.0
    %2256 = vmatpush1.xpose.msra.mxu0 0.0
    %2257 = vmatprep.mubr.f32.mxu0 0.0
    %2258 = vmatmul.mubr.f32.gmra.mrb[0].mxu0 %v2185
    %v2259 = vpop.f32.mrb[0].mxu0
    %v2260 = vadd.f32 0.0, %v2259
    %v2261 = vpop.f32.mrb[0].mxu0
    %2262 = vmatprep.mubr.f32.mxu0 0.0
    %2263 = vmatmul.mubr.f32.gmra.mrb[0].mxu0 %v2187
    %v2264 = vpop.f32.mrb[0].mxu0
    %v2265 = vadd.f32 0.0, %v2264
    %v2266 = vpop.f32.mrb[0].mxu0
    %2267 = vdwg.mxu0
    %v2268 = vmul.f32 %v2169, 0.17677669
    %v2269 = vmul.f32 %v2174, 0.17677669
    %v2270 = vmul.f32 %v2260, 0.17677669
    %v2271 = vmul.f32 %v2265, 0.17677669
    %v2272 = vadd.f32 %v2268, %v26
    %v2273 = vadd.f32 %v2269, %v27
    %v2274 = vadd.f32 %v2270, %v26
    %v2275 = vadd.f32 %v2271, %v27
    %v2276 = vsel %vm345, %v2272, -inf
    %2277 = vmax.xlane.f32.xlu0 %v2276
    %v2278 = vpop.xlane.xlu0 %2277
    %v2279 = vsel %vm345, %v2273, -inf
    %2280 = vmax.xlane.f32.xlu0 %v2279
    %v2281 = vpop.xlane.xlu0 %2280
    %v2282 = vsel %vm345, %v2274, -inf
    %2283 = vmax.xlane.f32.xlu0 %v2282
    %v2284 = vpop.xlane.xlu0 %2283
    %v2285 = vsel %vm345, %v2275, -inf
    %2286 = vmax.xlane.f32.xlu0 %v2285
    %v2287 = vpop.xlane.xlu0 %2286
    %v2288 = vsub.f32 %v2272, %v2278
    %v2289 = vsub.f32 %v2273, %v2281
    %v2290 = vsub.f32 %v2274, %v2284
    %v2291 = vsub.f32 %v2275, %v2287
    %v2292 = vmul.f32 %v2288, 1.442695
    %v2293 = vpow.pop %v2292
    %v2294 = vmul.f32 %v2289, 1.442695
    %v2295 = vpow.pop %v2294
    %v2296 = vmul.f32 %v2290, 1.442695
    %v2297 = vpow.pop %v2296
    %v2298 = vmul.f32 %v2291, 1.442695
    %v2299 = vpow.pop %v2298
    %v2300 = vsel %vm345, %v2293, 0.0
    %2301 = vadd.xlane.f32.xlu0 %v2300
    %v2302 = vpop.xlane.xlu0 %2301
    %v2303 = vsel %vm345, %v2295, 0.0
    %2304 = vadd.xlane.f32.xlu0 %v2303
    %v2305 = vpop.xlane.xlu0 %2304
    %v2306 = vsel %vm345, %v2297, 0.0
    %2307 = vadd.xlane.f32.xlu0 %v2306
    %v2308 = vpop.xlane.xlu0 %2307
    %v2309 = vsel %vm345, %v2299, 0.0
    %2310 = vadd.xlane.f32.xlu0 %v2309
    %v2311 = vpop.xlane.xlu0 %2310
    %v2312 = vrcp.pop %v2302
    %v2313 = vrcp.pop %v2305
    %v2314 = vrcp.pop %v2308
    %v2315 = vrcp.pop %v2311
    %v2316 = vmul.f32 %v2293, %v2312
    %v2317 = vmul.f32 %v2295, %v2313
    %v2318 = vmul.f32 %v2297, %v2314
    %v2319 = vmul.f32 %v2299, %v2315
    %2322 = vrot.lane.b32.xlu0 %v1670, 96
    %v2323 = vpop.permute.xlu0 %2322
    %2324 = vrot.lane.b32.xlu0 %v1676, 96
    %v2325 = vpop.permute.xlu0 %2324
    %v2329 = vsel %vm345, %v2316, 0
    %v2332 = vsel %vm345, %v2317, 0
    %2334 = vmatprep.subr.mxu0 0.0
    %2335 = vmatpush1.msra.mxu0 %v2323
    %2336 = vmatprep.subr.mxu0 0.0
    %2337 = vmatpush1.msra.mxu0 %v2325
    %2338 = vmatprep.subr.mxu0 0.0
    %2339 = vmatpush1.msra.mxu0 0.0
    %2340 = vmatprep.subr.mxu0 0.0
    %2341 = vmatpush1.msra.mxu0 0.0
    %2342 = vmatprep.subr.mxu0 0.0
    %2343 = vmatpush1.msra.mxu0 0.0
    %2344 = vmatprep.subr.mxu0 0.0
    %2345 = vmatpush1.msra.mxu0 0.0
    %2346 = vmatprep.subr.mxu0 0.0
    %2347 = vmatpush1.msra.mxu0 0.0
    %2348 = vmatprep.subr.mxu0 0.0
    %2349 = vmatpush1.msra.mxu0 0.0
    %2350 = vmatprep.subr.mxu0 0.0
    %2351 = vmatpush1.msra.mxu0 0.0
    %2352 = vmatprep.subr.mxu0 0.0
    %2353 = vmatpush1.msra.mxu0 0.0
    %2354 = vmatprep.subr.mxu0 0.0
    %2355 = vmatpush1.msra.mxu0 0.0
    %2356 = vmatprep.subr.mxu0 0.0
    %2357 = vmatpush1.msra.mxu0 0.0
    %2358 = vmatprep.subr.mxu0 0.0
    %2359 = vmatpush1.msra.mxu0 0.0
    %2360 = vmatprep.subr.mxu0 0.0
    %2361 = vmatpush1.msra.mxu0 0.0
    %2362 = vmatprep.subr.mxu0 0.0
    %2363 = vmatpush1.msra.mxu0 0.0
    %2364 = vmatprep.subr.mxu0 0.0
    %2365 = vmatpush1.msra.mxu0 0.0
    %2366 = vmatprep.subr.mxu0 0.0
    %2367 = vmatpush1.msra.mxu0 0.0
    %2368 = vmatprep.subr.mxu0 0.0
    %2369 = vmatpush1.msra.mxu0 0.0
    %2370 = vmatprep.subr.mxu0 0.0
    %2371 = vmatpush1.msra.mxu0 0.0
    %2372 = vmatprep.subr.mxu0 0.0
    %2373 = vmatpush1.msra.mxu0 0.0
    %2374 = vmatprep.subr.mxu0 0.0
    %2375 = vmatpush1.msra.mxu0 0.0
    %2376 = vmatprep.subr.mxu0 0.0
    %2377 = vmatpush1.msra.mxu0 0.0
    %2378 = vmatprep.subr.mxu0 0.0
    %2379 = vmatpush1.msra.mxu0 0.0
    %2380 = vmatprep.subr.mxu0 0.0
    %2381 = vmatpush1.msra.mxu0 0.0
    %2382 = vmatprep.subr.mxu0 0.0
    %2383 = vmatpush1.msra.mxu0 0.0
    %2384 = vmatprep.subr.mxu0 0.0
    %2385 = vmatpush1.msra.mxu0 0.0
    %2386 = vmatprep.subr.mxu0 0.0
    %2387 = vmatpush1.msra.mxu0 0.0
    %2388 = vmatprep.subr.mxu0 0.0
    %2389 = vmatpush1.msra.mxu0 0.0
    %2390 = vmatprep.subr.mxu0 0.0
    %2391 = vmatpush1.msra.mxu0 0.0
    %2392 = vmatprep.subr.mxu0 0.0
    %2393 = vmatpush1.msra.mxu0 0.0
    %2394 = vmatprep.subr.mxu0 0.0
    %2395 = vmatpush1.msra.mxu0 0.0
    %2396 = vmatprep.subr.mxu0 0.0
    %2397 = vmatpush1.msra.mxu0 0.0
    %2398 = vmatprep.mubr.f32.mxu0 0.0
    %2399 = vmatmul.mubr.f32.gmra.mrb[0].mxu0 %v2329
    %v2400 = vpop.f32.mrb[0].mxu0
    %v2401 = vadd.f32 0.0, %v2400
    %v2402 = vpop.f32.mrb[0].mxu0
    %2403 = vmatprep.mubr.f32.mxu0 0.0
    %2404 = vmatmul.mubr.f32.gmra.mrb[0].mxu0 %v2332
    %v2405 = vpop.f32.mrb[0].mxu0
    %v2406 = vadd.f32 0.0, %v2405
    %v2407 = vpop.f32.mrb[0].mxu0
    %2408 = vdwg.mxu0
    %2411 = vrot.lane.b32.xlu0 %v1682, 96
    %v2412 = vpop.permute.xlu0 %2411
    %2413 = vrot.lane.b32.xlu0 %v1688, 96
    %v2414 = vpop.permute.xlu0 %2413
    %v2418 = vsel %vm345, %v2318, 0
    %v2421 = vsel %vm345, %v2319, 0
    %2423 = vmatprep.subr.mxu0 0.0
    %2424 = vmatpush1.msra.mxu0 %v2412
    %2425 = vmatprep.subr.mxu0 0.0
    %2426 = vmatpush1.msra.mxu0 %v2414
    %2427 = vmatprep.subr.mxu0 0.0
    %2428 = vmatpush1.msra.mxu0 0.0
    %2429 = vmatprep.subr.mxu0 0.0
    %2430 = vmatpush1.msra.mxu0 0.0
    %2431 = vmatprep.subr.mxu0 0.0
    %2432 = vmatpush1.msra.mxu0 0.0
    %2433 = vmatprep.subr.mxu0 0.0
    %2434 = vmatpush1.msra.mxu0 0.0
    %2435 = vmatprep.subr.mxu0 0.0
    %2436 = vmatpush1.msra.mxu0 0.0
    %2437 = vmatprep.subr.mxu0 0.0
    %2438 = vmatpush1.msra.mxu0 0.0
    %2439 = vmatprep.subr.mxu0 0.0
    %2440 = vmatpush1.msra.mxu0 0.0
    %2441 = vmatprep.subr.mxu0 0.0
    %2442 = vmatpush1.msra.mxu0 0.0
    %2443 = vmatprep.subr.mxu0 0.0
    %2444 = vmatpush1.msra.mxu0 0.0
    %2445 = vmatprep.subr.mxu0 0.0
    %2446 = vmatpush1.msra.mxu0 0.0
    %2447 = vmatprep.subr.mxu0 0.0
    %2448 = vmatpush1.msra.mxu0 0.0
    %2449 = vmatprep.subr.mxu0 0.0
    %2450 = vmatpush1.msra.mxu0 0.0
    %2451 = vmatprep.subr.mxu0 0.0
    %2452 = vmatpush1.msra.mxu0 0.0
    %2453 = vmatprep.subr.mxu0 0.0
    %2454 = vmatpush1.msra.mxu0 0.0
    %2455 = vmatprep.subr.mxu0 0.0
    %2456 = vmatpush1.msra.mxu0 0.0
    %2457 = vmatprep.subr.mxu0 0.0
    %2458 = vmatpush1.msra.mxu0 0.0
    %2459 = vmatprep.subr.mxu0 0.0
    %2460 = vmatpush1.msra.mxu0 0.0
    %2461 = vmatprep.subr.mxu0 0.0
    %2462 = vmatpush1.msra.mxu0 0.0
    %2463 = vmatprep.subr.mxu0 0.0
    %2464 = vmatpush1.msra.mxu0 0.0
    %2465 = vmatprep.subr.mxu0 0.0
    %2466 = vmatpush1.msra.mxu0 0.0
    %2467 = vmatprep.subr.mxu0 0.0
    %2468 = vmatpush1.msra.mxu0 0.0
    %2469 = vmatprep.subr.mxu0 0.0
    %2470 = vmatpush1.msra.mxu0 0.0
    %2471 = vmatprep.subr.mxu0 0.0
    %2472 = vmatpush1.msra.mxu0 0.0
    %2473 = vmatprep.subr.mxu0 0.0
    %2474 = vmatpush1.msra.mxu0 0.0
    %2475 = vmatprep.subr.mxu0 0.0
    %2476 = vmatpush1.msra.mxu0 0.0
    %2477 = vmatprep.subr.mxu0 0.0
    %2478 = vmatpush1.msra.mxu0 0.0
    %2479 = vmatprep.subr.mxu0 0.0
    %2480 = vmatpush1.msra.mxu0 0.0
    %2481 = vmatprep.subr.mxu0 0.0
    %2482 = vmatpush1.msra.mxu0 0.0
    %2483 = vmatprep.subr.mxu0 0.0
    %2484 = vmatpush1.msra.mxu0 0.0
    %2485 = vmatprep.subr.mxu0 0.0
    %2486 = vmatpush1.msra.mxu0 0.0
    %2487 = vmatprep.mubr.f32.mxu0 0.0
    %2488 = vmatmul.mubr.f32.gmra.mrb[0].mxu0 %v2418
    %v2489 = vpop.f32.mrb[0].mxu0
    %v2490 = vadd.f32 0.0, %v2489
    %v2491 = vpop.f32.mrb[0].mxu0
    %2492 = vmatprep.mubr.f32.mxu0 0.0
    %2493 = vmatmul.mubr.f32.gmra.mrb[0].mxu0 %v2421
    %v2494 = vpop.f32.mrb[0].mxu0
    %v2495 = vadd.f32 0.0, %v2494
    %v2496 = vpop.f32.mrb[0].mxu0
    %2497 = vdwg.mxu0
    %v2498 = vld [vmem:[%s1 + $0x440] sm:$0xff]
    %v2499 = vld [vmem:[%s1 + $0x450] sm:$0xff]
    %v2500 = vld [vmem:[%s1 + $0x460] sm:$0xff]
    %v2501 = vld [vmem:[%s1 + $0x470] sm:$0xff]
    %v2503 = vsel %vm164, %v2401, 0
    %v2506 = vsel %vm164, %v2406, 0
    %v2509 = vsel %vm164, %v2490, 0
    %v2512 = vsel %vm164, %v2495, 0
    %2514 = vmatprep.subr.mxu0 0.0
    %2515 = vmatpush1.msra.mxu0 %v2498
    %2516 = vmatprep.subr.mxu0 0.0
    %2517 = vmatpush1.msra.mxu0 %v2499
    %2518 = vmatprep.subr.mxu0 0.0
    %2519 = vmatpush1.msra.mxu0 %v2500
    %2520 = vmatprep.subr.mxu0 0.0
    %2521 = vmatpush1.msra.mxu0 %v2501
    %2522 = vmatprep.subr.mxu0 0.0
    %2523 = vmatpush1.msra.mxu0 0.0
    %2524 = vmatprep.subr.mxu0 0.0
    %2525 = vmatpush1.msra.mxu0 0.0
    %2526 = vmatprep.subr.mxu0 0.0
    %2527 = vmatpush1.msra.mxu0 0.0
    %2528 = vmatprep.subr.mxu0 0.0
    %2529 = vmatpush1.msra.mxu0 0.0
    %2530 = vmatprep.subr.mxu0 0.0
    %2531 = vmatpush1.msra.mxu0 0.0
    %2532 = vmatprep.subr.mxu0 0.0
    %2533 = vmatpush1.msra.mxu0 0.0
    %2534 = vmatprep.subr.mxu0 0.0
    %2535 = vmatpush1.msra.mxu0 0.0
    %2536 = vmatprep.subr.mxu0 0.0
    %2537 = vmatpush1.msra.mxu0 0.0
    %2538 = vmatprep.subr.mxu0 0.0
    %2539 = vmatpush1.msra.mxu0 0.0
    %2540 = vmatprep.subr.mxu0 0.0
    %2541 = vmatpush1.msra.mxu0 0.0
    %2542 = vmatprep.subr.mxu0 0.0
    %2543 = vmatpush1.msra.mxu0 0.0
    %2544 = vmatprep.subr.mxu0 0.0
    %2545 = vmatpush1.msra.mxu0 0.0
    %2546 = vmatprep.subr.mxu0 0.0
    %2547 = vmatpush1.msra.mxu0 0.0
    %2548 = vmatprep.subr.mxu0 0.0
    %2549 = vmatpush1.msra.mxu0 0.0
    %2550 = vmatprep.subr.mxu0 0.0
    %2551 = vmatpush1.msra.mxu0 0.0
    %2552 = vmatprep.subr.mxu0 0.0
    %2553 = vmatpush1.msra.mxu0 0.0
    %2554 = vmatprep.subr.mxu0 0.0
    %2555 = vmatpush1.msra.mxu0 0.0
    %2556 = vmatprep.subr.mxu0 0.0
    %2557 = vmatpush1.msra.mxu0 0.0
    %2558 = vmatprep.subr.mxu0 0.0
    %2559 = vmatpush1.msra.mxu0 0.0
    %2560 = vmatprep.subr.mxu0 0.0
    %2561 = vmatpush1.msra.mxu0 0.0
    %2562 = vmatprep.subr.mxu0 0.0
    %2563 = vmatpush1.msra.mxu0 0.0
    %2564 = vmatprep.subr.mxu0 0.0
    %2565 = vmatpush1.msra.mxu0 0.0
    %2566 = vmatprep.subr.mxu0 0.0
    %2567 = vmatpush1.msra.mxu0 0.0
    %2568 = vmatprep.subr.mxu0 0.0
    %2569 = vmatpush1.msra.mxu0 0.0
    %2570 = vmatprep.subr.mxu0 0.0
    %2571 = vmatpush1.msra.mxu0 0.0
    %2572 = vmatprep.subr.mxu0 0.0
    %2573 = vmatpush1.msra.mxu0 0.0
    %2574 = vmatprep.subr.mxu0 0.0
    %2575 = vmatpush1.msra.mxu0 0.0
    %2576 = vmatprep.subr.mxu0 0.0
    %2577 = vmatpush1.msra.mxu0 0.0
    %2578 = vmatprep.mubr.f32.mxu0 0.0
    %2579 = vmatmul.mubr.f32.gmra.mrb[0].mxu0 %v2503
    %v2580 = vpop.f32.mrb[0].mxu0
    %v2581 = vadd.f32 0.0, %v2580
    %v2582 = vpop.f32.mrb[0].mxu0
    %2583 = vmatprep.mubr.f32.mxu0 0.0
    %2584 = vmatmul.mubr.f32.gmra.mrb[0].mxu0 %v2506
    %v2585 = vpop.f32.mrb[0].mxu0
    %v2586 = vadd.f32 0.0, %v2585
    %v2587 = vpop.f32.mrb[0].mxu0
    %2588 = vmatprep.mubr.f32.mxu0 0.0
    %2589 = vmatmul.mubr.f32.gmra.mrb[0].mxu0 %v2509
    %v2590 = vpop.f32.mrb[0].mxu0
    %v2591 = vadd.f32 0.0, %v2590
    %v2592 = vpop.f32.mrb[0].mxu0
    %2593 = vmatprep.mubr.f32.mxu0 0.0
    %2594 = vmatmul.mubr.f32.gmra.mrb[0].mxu0 %v2512
    %v2595 = vpop.f32.mrb[0].mxu0
    %v2596 = vadd.f32 0.0, %v2595
    %v2597 = vpop.f32.mrb[0].mxu0
    %2598 = vdwg.mxu0
    %v2600 = vsel %vm164, %v1993, 0
    %v2603 = vsel %vm164, %v1998, 0
    %v2606 = vsel %vm164, %v2074, 0
    %v2609 = vsel %vm164, %v2079, 0
    %2611 = vmatprep.subr.mxu0 0.0
    %2612 = vmatpush1.msra.mxu0 %v2082
    %2613 = vmatprep.subr.mxu0 0.0
    %2614 = vmatpush1.msra.mxu0 %v2083
    %2615 = vmatprep.subr.mxu0 0.0
    %2616 = vmatpush1.msra.mxu0 %v2084
    %2617 = vmatprep.subr.mxu0 0.0
    %2618 = vmatpush1.msra.mxu0 %v2085
    %2619 = vmatprep.subr.mxu0 0.0
    %2620 = vmatpush1.msra.mxu0 0.0
    %2621 = vmatprep.subr.mxu0 0.0
    %2622 = vmatpush1.msra.mxu0 0.0
    %2623 = vmatprep.subr.mxu0 0.0
    %2624 = vmatpush1.msra.mxu0 0.0
    %2625 = vmatprep.subr.mxu0 0.0
    %2626 = vmatpush1.msra.mxu0 0.0
    %2627 = vmatprep.subr.mxu0 0.0
    %2628 = vmatpush1.msra.mxu0 0.0
    %2629 = vmatprep.subr.mxu0 0.0
    %2630 = vmatpush1.msra.mxu0 0.0
    %2631 = vmatprep.subr.mxu0 0.0
    %2632 = vmatpush1.msra.mxu0 0.0
    %2633 = vmatprep.subr.mxu0 0.0
    %2634 = vmatpush1.msra.mxu0 0.0
    %2635 = vmatprep.subr.mxu0 0.0
    %2636 = vmatpush1.msra.mxu0 0.0
    %2637 = vmatprep.subr.mxu0 0.0
    %2638 = vmatpush1.msra.mxu0 0.0
    %2639 = vmatprep.subr.mxu0 0.0
    %2640 = vmatpush1.msra.mxu0 0.0
    %2641 = vmatprep.subr.mxu0 0.0
    %2642 = vmatpush1.msra.mxu0 0.0
    %2643 = vmatprep.subr.mxu0 0.0
    %2644 = vmatpush1.msra.mxu0 0.0
    %2645 = vmatprep.subr.mxu0 0.0
    %2646 = vmatpush1.msra.mxu0 0.0
    %2647 = vmatprep.subr.mxu0 0.0
    %2648 = vmatpush1.msra.mxu0 0.0
    %2649 = vmatprep.subr.mxu0 0.0
    %2650 = vmatpush1.msra.mxu0 0.0
    %2651 = vmatprep.subr.mxu0 0.0
    %2652 = vmatpush1.msra.mxu0 0.0
    %2653 = vmatprep.subr.mxu0 0.0
    %2654 = vmatpush1.msra.mxu0 0.0
    %2655 = vmatprep.subr.mxu0 0.0
    %2656 = vmatpush1.msra.mxu0 0.0
    %2657 = vmatprep.subr.mxu0 0.0
    %2658 = vmatpush1.msra.mxu0 0.0
    %2659 = vmatprep.subr.mxu0 0.0
    %2660 = vmatpush1.msra.mxu0 0.0
    %2661 = vmatprep.subr.mxu0 0.0
    %2662 = vmatpush1.msra.mxu0 0.0
    %2663 = vmatprep.subr.mxu0 0.0
    %2664 = vmatpush1.msra.mxu0 0.0
    %2665 = vmatprep.subr.mxu0 0.0
    %2666 = vmatpush1.msra.mxu0 0.0
    %2667 = vmatprep.subr.mxu0 0.0
    %2668 = vmatpush1.msra.mxu0 0.0
    %2669 = vmatprep.subr.mxu0 0.0
    %2670 = vmatpush1.msra.mxu0 0.0
    %2671 = vmatprep.subr.mxu0 0.0
    %2672 = vmatpush1.msra.mxu0 0.0
    %2673 = vmatprep.subr.mxu0 0.0
    %2674 = vmatpush1.msra.mxu0 0.0
    %2675 = vmatprep.mubr.f32.mxu0 0.0
    %2676 = vmatmul.mubr.f32.gmra.mrb[0].mxu0 %v2600
    %v2677 = vpop.f32.mrb[0].mxu0
    %v2678 = vadd.f32 %v2581, %v2677
    %v2679 = vpop.f32.mrb[0].mxu0
    %2680 = vmatprep.mubr.f32.mxu0 0.0
    %2681 = vmatmul.mubr.f32.gmra.mrb[0].mxu0 %v2603
    %v2682 = vpop.f32.mrb[0].mxu0
    %v2683 = vadd.f32 %v2586, %v2682
    %v2684 = vpop.f32.mrb[0].mxu0
    %2685 = vmatprep.mubr.f32.mxu0 0.0
    %2686 = vmatmul.mubr.f32.gmra.mrb[0].mxu0 %v2606
    %v2687 = vpop.f32.mrb[0].mxu0
    %v2688 = vadd.f32 %v2591, %v2687
    %v2689 = vpop.f32.mrb[0].mxu0
    %2690 = vmatprep.mubr.f32.mxu0 0.0
    %2691 = vmatmul.mubr.f32.gmra.mrb[0].mxu0 %v2609
    %v2692 = vpop.f32.mrb[0].mxu0
    %v2693 = vadd.f32 %v2596, %v2692
    %v2694 = vpop.f32.mrb[0].mxu0
    %2695 = vdwg.mxu0
    %v2696 = vld [vmem:[%s2 + $0x90] ss:$0 sm:$0xff]
    %v2697 = vadd.f32 %v2678, %v2696
    %v2698 = vadd.f32 %v2683, %v2696
    %v2699 = vadd.f32 %v2688, %v2696
    %v2700 = vadd.f32 %v2693, %v2696
    %v2701 = vadd.f32 %v1556, %v2697
    %v2702 = vadd.f32 %v1557, %v2698
    %v2703 = vadd.f32 %v1558, %v2699
    %v2704 = vadd.f32 %v1559, %v2700
    %v2705 = vld [vmem:[%s2 + $0xa0] ss:$0 sm:$0xff]
    %v2706 = vld [vmem:[%s2 + $0xb0] ss:$0 sm:$0xff]
    %v2707 = vsel %vm56, %v2701, 0.0
    %2708 = vadd.xlane.f32.xlu0 %v2707
    %v2709 = vpop.xlane.xlu0 %2708
    %v2710 = vsel %vm56, %v2702, 0.0
    %2711 = vadd.xlane.f32.xlu0 %v2710
    %v2712 = vpop.xlane.xlu0 %2711
    %v2713 = vsel %vm56, %v2703, 0.0
    %2714 = vadd.xlane.f32.xlu0 %v2713
    %v2715 = vpop.xlane.xlu0 %2714
    %v2716 = vsel %vm56, %v2704, 0.0
    %2717 = vadd.xlane.f32.xlu0 %v2716
    %v2718 = vpop.xlane.xlu0 %2717
    %v2719 = vmul.f32 %v2709, %v1189
    %v2720 = vmul.f32 %v2712, %v1189
    %v2721 = vmul.f32 %v2715, %v1189
    %v2722 = vmul.f32 %v2718, %v1189
    %v2723 = vsub.f32 %v2701, %v2719
    %v2724 = vsub.f32 %v2702, %v2720
    %v2725 = vsub.f32 %v2703, %v2721
    %v2726 = vsub.f32 %v2704, %v2722
    %v2727 = vmul.f32 %v2723, %v2723
    %v2728 = vmul.f32 %v2724, %v2724
    %v2729 = vmul.f32 %v2725, %v2725
    %v2730 = vmul.f32 %v2726, %v2726
    %v2731 = vsel %vm56, %v2727, 0.0
    %2732 = vadd.xlane.f32.xlu0 %v2731
    %v2733 = vpop.xlane.xlu0 %2732
    %v2734 = vsel %vm56, %v2728, 0.0
    %2735 = vadd.xlane.f32.xlu0 %v2734
    %v2736 = vpop.xlane.xlu0 %2735
    %v2737 = vsel %vm56, %v2729, 0.0
    %2738 = vadd.xlane.f32.xlu0 %v2737
    %v2739 = vpop.xlane.xlu0 %2738
    %v2740 = vsel %vm56, %v2730, 0.0
    %2741 = vadd.xlane.f32.xlu0 %v2740
    %v2742 = vpop.xlane.xlu0 %2741
    %v2743 = vmul.f32 %v2733, %v1189
    %v2744 = vmul.f32 %v2736, %v1189
    %v2745 = vmul.f32 %v2739, %v1189
    %v2746 = vmul.f32 %v2742, %v1189
    %v2747 = vadd.f32 %v2743, 1e-05
    %v2748 = vadd.f32 %v2744, 1e-05
    %v2749 = vadd.f32 %v2745, 1e-05
    %v2750 = vadd.f32 %v2746, 1e-05
    %v2751 = vrsqrt.pop %v2747
    %v2752 = vrsqrt.pop %v2748
    %v2753 = vrsqrt.pop %v2749
    %v2754 = vrsqrt.pop %v2750
    %v2755 = vmul.f32 %v2723, %v2751
    %v2756 = vmul.f32 %v2724, %v2752
    %v2757 = vmul.f32 %v2725, %v2753
    %v2758 = vmul.f32 %v2726, %v2754
    %v2759 = vmul.f32 %v2755, %v2705
    %v2760 = vmul.f32 %v2756, %v2705
    %v2761 = vmul.f32 %v2757, %v2705
    %v2762 = vmul.f32 %v2758, %v2705
    %v2763 = vadd.f32 %v2759, %v2706
    %v2764 = vadd.f32 %v2760, %v2706
    %v2765 = vadd.f32 %v2761, %v2706
    %v2766 = vadd.f32 %v2762, %v2706
    %v2767 = vld [vmem:[%s1 + $0x480] sm:$0xff]
    %v2768 = vld [vmem:[%s1 + $0x488] sm:$0xff]
    %v2769 = vld [vmem:[%s1 + $0x490] sm:$0xff]
    %v2770 = vld [vmem:[%s1 + $0x498] sm:$0xff]
    %v2771 = vld [vmem:[%s1 + $0x4a0] sm:$0xff]
    %v2772 = vld [vmem:[%s1 + $0x4a8] sm:$0xff]
    %v2773 = vld [vmem:[%s1 + $0x4b0] sm:$0xff]
    %v2774 = vld [vmem:[%s1 + $0x4b8] sm:$0xff]
    %v2775 = vld [vmem:[%s1 + $0x4c0] sm:$0xff]
    %v2776 = vld [vmem:[%s1 + $0x4c8] sm:$0xff]
    %v2777 = vld [vmem:[%s1 + $0x4d0] sm:$0xff]
    %v2778 = vld [vmem:[%s1 + $0x4d8] sm:$0xff]
    %v2779 = vld [vmem:[%s1 + $0x4e0] sm:$0xff]
    %v2780 = vld [vmem:[%s1 + $0x4e8] sm:$0xff]
    %v2781 = vld [vmem:[%s1 + $0x4f0] sm:$0xff]
    %v2782 = vld [vmem:[%s1 + $0x4f8] sm:$0xff]
    %v2783 = vld [vmem:[%s1 + $0x500] sm:$0xff]
    %v2784 = vld [vmem:[%s1 + $0x510] sm:$0xff]
    %v2785 = vld [vmem:[%s1 + $0x520] sm:$0xff]
    %v2786 = vld [vmem:[%s1 + $0x530] sm:$0xff]
    %v2787 = vld [vmem:[%s1 + $0x540] sm:$0xff]
    %v2788 = vld [vmem:[%s1 + $0x550] sm:$0xff]
    %v2789 = vld [vmem:[%s1 + $0x560] sm:$0xff]
    %v2790 = vld [vmem:[%s1 + $0x570] sm:$0xff]
    %v2791 = vld [vmem:[%s1 + $0x580] sm:$0xff]
    %v2792 = vld [vmem:[%s1 + $0x590] sm:$0xff]
    %v2793 = vld [vmem:[%s1 + $0x5a0] sm:$0xff]
    %v2794 = vld [vmem:[%s1 + $0x5b0] sm:$0xff]
    %v2795 = vld [vmem:[%s1 + $0x5c0] sm:$0xff]
    %v2796 = vld [vmem:[%s1 + $0x5d0] sm:$0xff]
    %v2797 = vld [vmem:[%s1 + $0x5e0] sm:$0xff]
    %v2798 = vld [vmem:[%s1 + $0x5f0] sm:$0xff]
    %v2799 = vld [vmem:[%s1 + $0x600] sm:$0xff]
    %v2800 = vld [vmem:[%s1 + $0x610] sm:$0xff]
    %v2801 = vld [vmem:[%s1 + $0x620] sm:$0xff]
    %v2802 = vld [vmem:[%s1 + $0x630] sm:$0xff]
    %v2803 = vld [vmem:[%s1 + $0x640] sm:$0xff]
    %v2804 = vld [vmem:[%s1 + $0x650] sm:$0xff]
    %v2805 = vld [vmem:[%s1 + $0x660] sm:$0xff]
    %v2806 = vld [vmem:[%s1 + $0x670] sm:$0xff]
    %v2807 = vld [vmem:[%s1 + $0x680] sm:$0xff]
    %v2808 = vld [vmem:[%s1 + $0x690] sm:$0xff]
    %v2809 = vld [vmem:[%s1 + $0x6a0] sm:$0xff]
    %v2810 = vld [vmem:[%s1 + $0x6b0] sm:$0xff]
    %v2811 = vld [vmem:[%s1 + $0x6c0] sm:$0xff]
    %v2812 = vld [vmem:[%s1 + $0x6d0] sm:$0xff]
    %v2813 = vld [vmem:[%s1 + $0x6e0] sm:$0xff]
    %v2814 = vld [vmem:[%s1 + $0x6f0] sm:$0xff]
    %s2815 = scalar_lea.vmem %s2, 192
    %v2816 = vld [vmem:[%s2815] ss:$8 sm:$0x3]
    %v2818 = vlaneseq
    %v2819 = vshrl.u32 %v2818, 7
    %v2820 = vsub.s32 0, %v2819
    %v2821 = vrot.slane %v2816, %v2820
    %v2822 = vlaneseq
    %v2823 = vshrl.u32 %v2822, 7
    %v2824 = vsub.s32 1, %v2823
    %v2825 = vrot.slane %v2816, %v2824
    %v2829 = vsel %vm56, %v2763, 0
    %v2832 = vsel %vm56, %v2764, 0
    %v2835 = vsel %vm56, %v2765, 0
    %v2838 = vsel %vm56, %v2766, 0
    %2840 = vmatprep.subr.mxu0 %v2768
    %2841 = vmatpush1.msra.mxu0 %v2767
    %2842 = vmatprep.subr.mxu0 %v2770
    %2843 = vmatpush1.msra.mxu0 %v2769
    %2844 = vmatprep.subr.mxu0 %v2772
    %2845 = vmatpush1.msra.mxu0 %v2771
    %2846 = vmatprep.subr.mxu0 %v2774
    %2847 = vmatpush1.msra.mxu0 %v2773
    %2848 = vmatprep.subr.mxu0 %v2776
    %2849 = vmatpush1.msra.mxu0 %v2775
    %2850 = vmatprep.subr.mxu0 %v2778
    %2851 = vmatpush1.msra.mxu0 %v2777
    %2852 = vmatprep.subr.mxu0 %v2780
    %2853 = vmatpush1.msra.mxu0 %v2779
    %2854 = vmatprep.subr.mxu0 %v2782
    %2855 = vmatpush1.msra.mxu0 %v2781
    %2856 = vmatprep.subr.mxu0 0.0
    %2857 = vmatpush1.msra.mxu0 0.0
    %2858 = vmatprep.subr.mxu0 0.0
    %2859 = vmatpush1.msra.mxu0 0.0
    %2860 = vmatprep.subr.mxu0 0.0
    %2861 = vmatpush1.msra.mxu0 0.0
    %2862 = vmatprep.subr.mxu0 0.0
    %2863 = vmatpush1.msra.mxu0 0.0
    %2864 = vmatprep.subr.mxu0 0.0
    %2865 = vmatpush1.msra.mxu0 0.0
    %2866 = vmatprep.subr.mxu0 0.0
    %2867 = vmatpush1.msra.mxu0 0.0
    %2868 = vmatprep.subr.mxu0 0.0
    %2869 = vmatpush1.msra.mxu0 0.0
    %2870 = vmatprep.subr.mxu0 0.0
    %2871 = vmatpush1.msra.mxu0 0.0
    %2872 = vmatprep.subr.mxu0 0.0
    %2873 = vmatpush1.msra.mxu0 0.0
    %2874 = vmatprep.subr.mxu0 0.0
    %2875 = vmatpush1.msra.mxu0 0.0
    %2876 = vmatprep.subr.mxu0 0.0
    %2877 = vmatpush1.msra.mxu0 0.0
    %2878 = vmatprep.subr.mxu0 0.0
    %2879 = vmatpush1.msra.mxu0 0.0
    %2880 = vmatprep.subr.mxu0 0.0
    %2881 = vmatpush1.msra.mxu0 0.0
    %2882 = vmatprep.subr.mxu0 0.0
    %2883 = vmatpush1.msra.mxu0 0.0
    %2884 = vmatprep.subr.mxu0 0.0
    %2885 = vmatpush1.msra.mxu0 0.0
    %2886 = vmatprep.subr.mxu0 0.0
    %2887 = vmatpush1.msra.mxu0 0.0
    %2888 = vmatprep.subr.mxu0 0.0
    %2889 = vmatpush1.msra.mxu0 0.0
    %2890 = vmatprep.subr.mxu0 0.0
    %2891 = vmatpush1.msra.mxu0 0.0
    %2892 = vmatprep.subr.mxu0 0.0
    %2893 = vmatpush1.msra.mxu0 0.0
    %2894 = vmatprep.subr.mxu0 0.0
    %2895 = vmatpush1.msra.mxu0 0.0
    %2896 = vmatprep.subr.mxu0 0.0
    %2897 = vmatpush1.msra.mxu0 0.0
    %2898 = vmatprep.subr.mxu0 0.0
    %2899 = vmatpush1.msra.mxu0 0.0
    %2900 = vmatprep.subr.mxu0 0.0
    %2901 = vmatpush1.msra.mxu0 0.0
    %2902 = vmatprep.subr.mxu0 0.0
    %2903 = vmatpush1.msra.mxu0 0.0
    %2904 = vmatprep.mubr.f32.mxu0 0.0
    %2905 = vmatmul.mubr.f32.gmra.mrb[0].mxu0 %v2829
    %v2906 = vpop.f32.mrb[0].mxu0
    %v2907 = vadd.f32 %v2821, %v2906
    %v2908 = vpop.f32.mrb[0].mxu0
    %v2909 = vadd.f32 %v2825, %v2908
    %2910 = vmatprep.mubr.f32.mxu0 0.0
    %2911 = vmatmul.mubr.f32.gmra.mrb[0].mxu0 %v2832
    %v2912 = vpop.f32.mrb[0].mxu0
    %v2913 = vadd.f32 %v2821, %v2912
    %v2914 = vpop.f32.mrb[0].mxu0
    %v2915 = vadd.f32 %v2825, %v2914
    %2916 = vmatprep.mubr.f32.mxu0 0.0
    %2917 = vmatmul.mubr.f32.gmra.mrb[0].mxu0 %v2835
    %v2918 = vpop.f32.mrb[0].mxu0
    %v2919 = vadd.f32 %v2821, %v2918
    %v2920 = vpop.f32.mrb[0].mxu0
    %v2921 = vadd.f32 %v2825, %v2920
    %2922 = vmatprep.mubr.f32.mxu0 0.0
    %2923 = vmatmul.mubr.f32.gmra.mrb[0].mxu0 %v2838
    %v2924 = vpop.f32.mrb[0].mxu0
    %v2925 = vadd.f32 %v2821, %v2924
    %v2926 = vpop.f32.mrb[0].mxu0
    %v2927 = vadd.f32 %v2825, %v2926
    %2928 = vdwg.mxu0
    %v2929 = vmax.f32 %v2907, 0.0
    %v2930 = vmax.f32 %v2909, 0.0
    %v2931 = vmax.f32 %v2913, 0.0
    %v2932 = vmax.f32 %v2915, 0.0
    %v2933 = vmax.f32 %v2919, 0.0
    %v2934 = vmax.f32 %v2921, 0.0
    %v2935 = vmax.f32 %v2925, 0.0
    %v2936 = vmax.f32 %v2927, 0.0
    %v2937 = vld [vmem:[%s2 + $0xd0] ss:$0 sm:$0xff]
    %2938 = vmatprep.subr.mxu0 0.0
    %2939 = vmatpush1.msra.mxu0 %v2783
    %2940 = vmatprep.subr.mxu0 0.0
    %2941 = vmatpush1.msra.mxu0 %v2784
    %2942 = vmatprep.subr.mxu0 0.0
    %2943 = vmatpush1.msra.mxu0 %v2785
    %2944 = vmatprep.subr.mxu0 0.0
    %2945 = vmatpush1.msra.mxu0 %v2786
    %2946 = vmatprep.subr.mxu0 0.0
    %2947 = vmatpush1.msra.mxu0 %v2787
    %2948 = vmatprep.subr.mxu0 0.0
    %2949 = vmatpush1.msra.mxu0 %v2788
    %2950 = vmatprep.subr.mxu0 0.0
    %2951 = vmatpush1.msra.mxu0 %v2789
    %2952 = vmatprep.subr.mxu0 0.0
    %2953 = vmatpush1.msra.mxu0 %v2790
    %2954 = vmatprep.subr.mxu0 0.0
    %2955 = vmatpush1.msra.mxu0 %v2791
    %2956 = vmatprep.subr.mxu0 0.0
    %2957 = vmatpush1.msra.mxu0 %v2792
    %2958 = vmatprep.subr.mxu0 0.0
    %2959 = vmatpush1.msra.mxu0 %v2793
    %2960 = vmatprep.subr.mxu0 0.0
    %2961 = vmatpush1.msra.mxu0 %v2794
    %2962 = vmatprep.subr.mxu0 0.0
    %2963 = vmatpush1.msra.mxu0 %v2795
    %2964 = vmatprep.subr.mxu0 0.0
    %2965 = vmatpush1.msra.mxu0 %v2796
    %2966 = vmatprep.subr.mxu0 0.0
    %2967 = vmatpush1.msra.mxu0 %v2797
    %2968 = vmatprep.subr.mxu0 0.0
    %2969 = vmatpush1.msra.mxu0 %v2798
    %2970 = vmatprep.subr.mxu0 0.0
    %2971 = vmatpush1.msra.mxu0 %v2799
    %2972 = vmatprep.subr.mxu0 0.0
    %2973 = vmatpush1.msra.mxu0 %v2800
    %2974 = vmatprep.subr.mxu0 0.0
    %2975 = vmatpush1.msra.mxu0 %v2801
    %2976 = vmatprep.subr.mxu0 0.0
    %2977 = vmatpush1.msra.mxu0 %v2802
    %2978 = vmatprep.subr.mxu0 0.0
    %2979 = vmatpush1.msra.mxu0 %v2803
    %2980 = vmatprep.subr.mxu0 0.0
    %2981 = vmatpush1.msra.mxu0 %v2804
    %2982 = vmatprep.subr.mxu0 0.0
    %2983 = vmatpush1.msra.mxu0 %v2805
    %2984 = vmatprep.subr.mxu0 0.0
    %2985 = vmatpush1.msra.mxu0 %v2806
    %2986 = vmatprep.subr.mxu0 0.0
    %2987 = vmatpush1.msra.mxu0 %v2807
    %2988 = vmatprep.subr.mxu0 0.0
    %2989 = vmatpush1.msra.mxu0 %v2808
    %2990 = vmatprep.subr.mxu0 0.0
    %2991 = vmatpush1.msra.mxu0 %v2809
    %2992 = vmatprep.subr.mxu0 0.0
    %2993 = vmatpush1.msra.mxu0 %v2810
    %2994 = vmatprep.subr.mxu0 0.0
    %2995 = vmatpush1.msra.mxu0 %v2811
    %2996 = vmatprep.subr.mxu0 0.0
    %2997 = vmatpush1.msra.mxu0 %v2812
    %2998 = vmatprep.subr.mxu0 0.0
    %2999 = vmatpush1.msra.mxu0 %v2813
    %3000 = vmatprep.subr.mxu0 0.0
    %3001 = vmatpush1.msra.mxu0 %v2814
    %3002 = vmatprep.mubr.f32.mxu0 %v2930
    %3003 = vmatmul.mubr.f32.gmra.mrb[0].mxu0 %v2929
    %v3004 = vpop.f32.mrb[0].mxu0
    %v3005 = vadd.f32 %v2937, %v3004
    %v3006 = vpop.f32.mrb[0].mxu0
    %3007 = vmatprep.mubr.f32.mxu0 %v2932
    %3008 = vmatmul.mubr.f32.gmra.mrb[0].mxu0 %v2931
    %v3009 = vpop.f32.mrb[0].mxu0
    %v3010 = vadd.f32 %v2937, %v3009
    %v3011 = vpop.f32.mrb[0].mxu0
    %3012 = vmatprep.mubr.f32.mxu0 %v2934
    %3013 = vmatmul.mubr.f32.gmra.mrb[0].mxu0 %v2933
    %v3014 = vpop.f32.mrb[0].mxu0
    %v3015 = vadd.f32 %v2937, %v3014
    %v3016 = vpop.f32.mrb[0].mxu0
    %3017 = vmatprep.mubr.f32.mxu0 %v2936
    %3018 = vmatmul.mubr.f32.gmra.mrb[0].mxu0 %v2935
    %v3019 = vpop.f32.mrb[0].mxu0
    %v3020 = vadd.f32 %v2937, %v3019
    %v3021 = vpop.f32.mrb[0].mxu0
    %3022 = vdwg.mxu0
    %v3023 = vadd.f32 %v2763, %v3005
    %v3024 = vadd.f32 %v2764, %v3010
    %v3025 = vadd.f32 %v2765, %v3015
    %v3026 = vadd.f32 %v2766, %v3020
    %v3027 = vld [vmem:[%s2 + $0xe0] ss:$0 sm:$0xff]
    %v3028 = vld [vmem:[%s2 + $0xf0] ss:$0 sm:$0xff]
    %v3029 = vsel %vm56, %v3023, 0.0
    %3030 = vadd.xlane.f32.xlu0 %v3029
    %v3031 = vpop.xlane.xlu0 %3030
    %v3032 = vsel %vm56, %v3024, 0.0
    %3033 = vadd.xlane.f32.xlu0 %v3032
    %v3034 = vpop.xlane.xlu0 %3033
    %v3035 = vsel %vm56, %v3025, 0.0
    %3036 = vadd.xlane.f32.xlu0 %v3035
    %v3037 = vpop.xlane.xlu0 %3036
    %v3038 = vsel %vm56, %v3026, 0.0
    %3039 = vadd.xlane.f32.xlu0 %v3038
    %v3040 = vpop.xlane.xlu0 %3039
    %v3041 = vmul.f32 %v3031, %v1189
    %v3042 = vmul.f32 %v3034, %v1189
    %v3043 = vmul.f32 %v3037, %v1189
    %v3044 = vmul.f32 %v3040, %v1189
    %v3045 = vsub.f32 %v3023, %v3041
    %v3046 = vsub.f32 %v3024, %v3042
    %v3047 = vsub.f32 %v3025, %v3043
    %v3048 = vsub.f32 %v3026, %v3044
    %v3049 = vmul.f32 %v3045, %v3045
    %v3050 = vmul.f32 %v3046, %v3046
    %v3051 = vmul.f32 %v3047, %v3047
    %v3052 = vmul.f32 %v3048, %v3048
    %v3053 = vsel %vm56, %v3049, 0.0
    %3054 = vadd.xlane.f32.xlu0 %v3053
    %v3055 = vpop.xlane.xlu0 %3054
    %v3056 = vsel %vm56, %v3050, 0.0
    %3057 = vadd.xlane.f32.xlu0 %v3056
    %v3058 = vpop.xlane.xlu0 %3057
    %v3059 = vsel %vm56, %v3051, 0.0
    %3060 = vadd.xlane.f32.xlu0 %v3059
    %v3061 = vpop.xlane.xlu0 %3060
    %v3062 = vsel %vm56, %v3052, 0.0
    %3063 = vadd.xlane.f32.xlu0 %v3062
    %v3064 = vpop.xlane.xlu0 %3063
    %v3065 = vmul.f32 %v3055, %v1189
    %v3066 = vmul.f32 %v3058, %v1189
    %v3067 = vmul.f32 %v3061, %v1189
    %v3068 = vmul.f32 %v3064, %v1189
    %v3069 = vadd.f32 %v3065, 1e-05
    %v3070 = vadd.f32 %v3066, 1e-05
    %v3071 = vadd.f32 %v3067, 1e-05
    %v3072 = vadd.f32 %v3068, 1e-05
    %v3073 = vrsqrt.pop %v3069
    %v3074 = vrsqrt.pop %v3070
    %v3075 = vrsqrt.pop %v3071
    %v3076 = vrsqrt.pop %v3072
    %v3077 = vmul.f32 %v3045, %v3073
    %v3078 = vmul.f32 %v3046, %v3074
    %v3079 = vmul.f32 %v3047, %v3075
    %v3080 = vmul.f32 %v3048, %v3076
    %v3081 = vmul.f32 %v3077, %v3027
    %v3082 = vmul.f32 %v3078, %v3027
    %v3083 = vmul.f32 %v3079, %v3027
    %v3084 = vmul.f32 %v3080, %v3027
    %v3085 = vadd.f32 %v3081, %v3028
    %v3086 = vadd.f32 %v3082, %v3028
    %v3087 = vadd.f32 %v3083, %v3028
    %v3088 = vadd.f32 %v3084, %v3028
    %v3089 = vld [vmem:[%s2 + $0x100] ss:$0 sm:$0xff]
    %v3090 = vld [vmem:[%s2 + $0x110] ss:$0 sm:$0xff]
    %v3091 = vsel %vm56, %v3085, 0.0
    %3092 = vadd.xlane.f32.xlu0 %v3091
    %v3093 = vpop.xlane.xlu0 %3092
    %v3094 = vsel %vm56, %v3086, 0.0
    %3095 = vadd.xlane.f32.xlu0 %v3094
    %v3096 = vpop.xlane.xlu0 %3095
    %v3097 = vsel %vm56, %v3087, 0.0
    %3098 = vadd.xlane.f32.xlu0 %v3097
    %v3099 = vpop.xlane.xlu0 %3098
    %v3100 = vsel %vm56, %v3088, 0.0
    %3101 = vadd.xlane.f32.xlu0 %v3100
    %v3102 = vpop.xlane.xlu0 %3101
    %v3103 = vmul.f32 %v3093, %v1189
    %v3104 = vmul.f32 %v3096, %v1189
    %v3105 = vmul.f32 %v3099, %v1189
    %v3106 = vmul.f32 %v3102, %v1189
    %v3107 = vsub.f32 %v3085, %v3103
    %v3108 = vsub.f32 %v3086, %v3104
    %v3109 = vsub.f32 %v3087, %v3105
    %v3110 = vsub.f32 %v3088, %v3106
    %v3111 = vmul.f32 %v3107, %v3107
    %v3112 = vmul.f32 %v3108, %v3108
    %v3113 = vmul.f32 %v3109, %v3109
    %v3114 = vmul.f32 %v3110, %v3110
    %v3115 = vsel %vm56, %v3111, 0.0
    %3116 = vadd.xlane.f32.xlu0 %v3115
    %v3117 = vpop.xlane.xlu0 %3116
    %v3118 = vsel %vm56, %v3112, 0.0
    %3119 = vadd.xlane.f32.xlu0 %v3118
    %v3120 = vpop.xlane.xlu0 %3119
    %v3121 = vsel %vm56, %v3113, 0.0
    %3122 = vadd.xlane.f32.xlu0 %v3121
    %v3123 = vpop.xlane.xlu0 %3122
    %v3124 = vsel %vm56, %v3114, 0.0
    %3125 = vadd.xlane.f32.xlu0 %v3124
    %v3126 = vpop.xlane.xlu0 %3125
    %v3127 = vmul.f32 %v3117, %v1189
    %v3128 = vmul.f32 %v3120, %v1189
    %v3129 = vmul.f32 %v3123, %v1189
    %v3130 = vmul.f32 %v3126, %v1189
    %v3131 = vadd.f32 %v3127, 1e-05
    %v3132 = vadd.f32 %v3128, 1e-05
    %v3133 = vadd.f32 %v3129, 1e-05
    %v3134 = vadd.f32 %v3130, 1e-05
    %v3135 = vrsqrt.pop %v3131
    %v3136 = vrsqrt.pop %v3132
    %v3137 = vrsqrt.pop %v3133
    %v3138 = vrsqrt.pop %v3134
    %v3139 = vmul.f32 %v3107, %v3135
    %v3140 = vmul.f32 %v3108, %v3136
    %v3141 = vmul.f32 %v3109, %v3137
    %v3142 = vmul.f32 %v3110, %v3138
    %v3143 = vmul.f32 %v3139, %v3089
    %v3144 = vmul.f32 %v3140, %v3089
    %v3145 = vmul.f32 %v3141, %v3089
    %v3146 = vmul.f32 %v3142, %v3089
    %v3147 = vadd.f32 %v3143, %v3090
    %v3148 = vadd.f32 %v3144, %v3090
    %v3149 = vadd.f32 %v3145, %v3090
    %v3150 = vadd.f32 %v3146, %v3090
    %v3151 = vld [vmem:[%s1 + $0x700] sm:$0xff]
    %v3152 = vld [vmem:[%s1 + $0x710] sm:$0xff]
    %v3153 = vld [vmem:[%s1 + $0x720] sm:$0xff]
    %v3154 = vld [vmem:[%s1 + $0x730] sm:$0xff]
    %v3155 = vld [vmem:[%s1 + $0x740] sm:$0xff]
    %v3156 = vld [vmem:[%s1 + $0x750] sm:$0xff]
    %v3157 = vld [vmem:[%s1 + $0x760] sm:$0xff]
    %v3158 = vld [vmem:[%s1 + $0x770] sm:$0xff]
    %v3159 = vld [vmem:[%s2 + $0x120] ss:$0 sm:$0xff]
    %v3161 = vsel %vm56, %v3147, 0
    %v3164 = vsel %vm56, %v3148, 0
    %v3167 = vsel %vm56, %v3149, 0
    %v3170 = vsel %vm56, %v3150, 0
    %3172 = vmatprep.subr.mxu0 0.0
    %3173 = vmatpush1.msra.mxu0 %v3151
    %3174 = vmatprep.subr.mxu0 0.0
    %3175 = vmatpush1.msra.mxu0 %v3152
    %3176 = vmatprep.subr.mxu0 0.0
    %3177 = vmatpush1.msra.mxu0 %v3153
    %3178 = vmatprep.subr.mxu0 0.0
    %3179 = vmatpush1.msra.mxu0 %v3154
    %3180 = vmatprep.subr.mxu0 0.0
    %3181 = vmatpush1.msra.mxu0 %v3155
    %3182 = vmatprep.subr.mxu0 0.0
    %3183 = vmatpush1.msra.mxu0 %v3156
    %3184 = vmatprep.subr.mxu0 0.0
    %3185 = vmatpush1.msra.mxu0 %v3157
    %3186 = vmatprep.subr.mxu0 0.0
    %3187 = vmatpush1.msra.mxu0 %v3158
    %3188 = vmatprep.subr.mxu0 0.0
    %3189 = vmatpush1.msra.mxu0 0.0
    %3190 = vmatprep.subr.mxu0 0.0
    %3191 = vmatpush1.msra.mxu0 0.0
    %3192 = vmatprep.subr.mxu0 0.0
    %3193 = vmatpush1.msra.mxu0 0.0
    %3194 = vmatprep.subr.mxu0 0.0
    %3195 = vmatpush1.msra.mxu0 0.0
    %3196 = vmatprep.subr.mxu0 0.0
    %3197 = vmatpush1.msra.mxu0 0.0
    %3198 = vmatprep.subr.mxu0 0.0
    %3199 = vmatpush1.msra.mxu0 0.0
    %3200 = vmatprep.subr.mxu0 0.0
    %3201 = vmatpush1.msra.mxu0 0.0
    %3202 = vmatprep.subr.mxu0 0.0
    %3203 = vmatpush1.msra.mxu0 0.0
    %3204 = vmatprep.subr.mxu0 0.0
    %3205 = vmatpush1.msra.mxu0 0.0
    %3206 = vmatprep.subr.mxu0 0.0
    %3207 = vmatpush1.msra.mxu0 0.0
    %3208 = vmatprep.subr.mxu0 0.0
    %3209 = vmatpush1.msra.mxu0 0.0
    %3210 = vmatprep.subr.mxu0 0.0
    %3211 = vmatpush1.msra.mxu0 0.0
    %3212 = vmatprep.subr.mxu0 0.0
    %3213 = vmatpush1.msra.mxu0 0.0
    %3214 = vmatprep.subr.mxu0 0.0
    %3215 = vmatpush1.msra.mxu0 0.0
    %3216 = vmatprep.subr.mxu0 0.0
    %3217 = vmatpush1.msra.mxu0 0.0
    %3218 = vmatprep.subr.mxu0 0.0
    %3219 = vmatpush1.msra.mxu0 0.0
    %3220 = vmatprep.subr.mxu0 0.0
    %3221 = vmatpush1.msra.mxu0 0.0
    %3222 = vmatprep.subr.mxu0 0.0
    %3223 = vmatpush1.msra.mxu0 0.0
    %3224 = vmatprep.subr.mxu0 0.0
    %3225 = vmatpush1.msra.mxu0 0.0
    %3226 = vmatprep.subr.mxu0 0.0
    %3227 = vmatpush1.msra.mxu0 0.0
    %3228 = vmatprep.subr.mxu0 0.0
    %3229 = vmatpush1.msra.mxu0 0.0
    %3230 = vmatprep.subr.mxu0 0.0
    %3231 = vmatpush1.msra.mxu0 0.0
    %3232 = vmatprep.subr.mxu0 0.0
    %3233 = vmatpush1.msra.mxu0 0.0
    %3234 = vmatprep.subr.mxu0 0.0
    %3235 = vmatpush1.msra.mxu0 0.0
    %3236 = vmatprep.mubr.f32.mxu0 0.0
    %3237 = vmatmul.mubr.f32.gmra.mrb[0].mxu0 %v3161
    %v3238 = vpop.f32.mrb[0].mxu0
    %v3239 = vadd.f32 %v3159, %v3238
    %v3240 = vpop.f32.mrb[0].mxu0
    %3241 = vmatprep.mubr.f32.mxu0 0.0
    %3242 = vmatmul.mubr.f32.gmra.mrb[0].mxu0 %v3164
    %v3243 = vpop.f32.mrb[0].mxu0
    %v3244 = vadd.f32 %v3159, %v3243
    %v3245 = vpop.f32.mrb[0].mxu0
    %3246 = vmatprep.mubr.f32.mxu0 0.0
    %3247 = vmatmul.mubr.f32.gmra.mrb[0].mxu0 %v3167
    %v3248 = vpop.f32.mrb[0].mxu0
    %v3249 = vadd.f32 %v3159, %v3248
    %v3250 = vpop.f32.mrb[0].mxu0
    %3251 = vmatprep.mubr.f32.mxu0 0.0
    %3252 = vmatmul.mubr.f32.gmra.mrb[0].mxu0 %v3170
    %v3253 = vpop.f32.mrb[0].mxu0
    %v3254 = vadd.f32 %v3159, %v3253
    %v3255 = vpop.f32.mrb[0].mxu0
    %3256 = vdwg.mxu0
    %3257 = vst [vmem:[#allocation2] sm:$0xff] %v3239
    %3258 = vst [vmem:[#allocation2 + $0x8] sm:$0xff] %v3244
    %3259 = vst [vmem:[#allocation2 + $0x10] sm:$0xff] %v3249
    %3260 = vst [vmem:[#allocation2 + $0x18] sm:$0xff] %v3254
    // Predicated region
    $region14: #{minigpt_pallas.1} parent=1 // pred_check
      _
    $region15: #{minigpt_pallas.1} parent=1 // pred_check_branch
      %3262 = sbr.rel (0) target = $region17
    $region16: #{minigpt_pallas.1} parent=1 // pred_region
      %s3264 = ssub.s32 512, 512
      %3265 = vsyncadd [#allocation3], %s3264
      %s3266 = sshll.u32 [#allocation2], 4
      %s3267 = int_to_ptr.vmem [resolvable:$true] %s3266
      %3272 = dma.vmem_to_hbm [thread:$0]  %s3267, 512, %s3, [#allocation3], 128, 128, 8
    $region17: #{minigpt_pallas.1} parent=1 // pred_fallthru
      _
    // Predicated region
    $region18: #{minigpt_pallas.1} parent=1 // pred_check
      _
    $region19: #{minigpt_pallas.1} parent=1 // pred_check_branch
      %3274 = sbr.rel (0) target = $region21
    $region20: #{minigpt_pallas.1} parent=1 // pred_region
      %3275 = dma.done [#allocation3], 512
    $region21: #{minigpt_pallas.1} parent=1 // pred_fallthru
      _
    %3276 = vsyncpa [#allocation3], 1

</llo_original>
